<compile_context>
chip_gen: v5e
topology: v5e:2x2
jax: 0.10.0
libtpu: 0.0.40
codegen_flags: <defaults>
</compile_context>

<pallas_src>
import math
import functools

import jax
import jax.numpy as jnp
from jax.experimental import pallas as pl
from jax.experimental.pallas import tpu as pltpu


COMPUTE_DTYPE = jnp.bfloat16  # MXU operand dtype; accumulation + elementwise math stay f32


# ----------------------------- configs (small) ------------------------------
VISION_CFG = dict(hidden_size=32, intermediate_size=64, num_hidden_layers=2,
                  num_attention_heads=4, num_channels=3, image_size=16,
                  patch_size=8, layer_norm_eps=1e-6)
TEXT_CFG = dict(vocab_size=128, hidden_size=32, intermediate_size=64,
                num_hidden_layers=2, num_attention_heads=4, num_key_value_heads=2,
                head_dim=16, rms_norm_eps=1e-6, rope_theta=10000.0)
PALI_CFG = dict(image_token_index=120, pad_token_id=0, projection_dim=32,
                hidden_size=32, vision=VISION_CFG, text=TEXT_CFG)


# ------------------------------ Pallas kernels -------------------------------
def _gemma_stack_kernel(embeds_ref, cos_ref, sin_ref,
                        inln_ref, wqkv_ref, ow_ref, postln_ref, wgu_ref, wdown_ref,
                        fnorm_ref, lmhead_ref,
                        logits_ref,
                        h_ref, attn_ref, *, cfg):
    """One grid step = one (batch element, decoder layer).  Residual stream carried in
    VMEM scratch across the layer axis; final RMSNorm + lm_head fused into the last step."""
    H = cfg['hidden_size']
    nh = cfg['num_attention_heads']
    nkv = cfg['num_key_value_heads']
    hd = cfg['head_dim']
    inter = cfg['intermediate_size']
    eps = cfg['rms_norm_eps']
    n_rep = nh // nkv
    qd, kvd = nh * hd, nkv * hd
    scale = 1.0 / math.sqrt(hd)
    half = hd // 2

    layer = pl.program_id(1)
    n_layers = pl.num_programs(1)

    def rmsnorm(x, w):
        var = jnp.mean(x * x, axis=-1, keepdims=True)
        return x * jax.lax.rsqrt(var + eps) * (1.0 + w)

    @pl.when(layer == 0)
    def _():
        h_ref[...] = embeds_ref[0].astype(jnp.float32) * (H ** 0.5)

    h = h_ref[...]                                   # (S, H) f32 residual stream

    # ---- fused RMSNorm + concatenated [q|k|v] projection (bf16 x bf16 -> f32) ----
    xn = rmsnorm(h, inln_ref[0])
    qkv = jnp.dot(xn.astype(COMPUTE_DTYPE), wqkv_ref[0],
                  preferred_element_type=jnp.float32)   # (S, qd + 2*kvd), lane-dense

    cos = cos_ref[0]                                  # (S, hd) f32
    sin = sin_ref[0]

    def rope(x):                                      # rotate_half via static slices
        xr = jnp.concatenate([-x[:, half:], x[:, :half]], axis=1)
        return x * cos + xr * sin

    # GQA: RoPE + bf16 cast once per kv head; no repeat_kv copies.
    k_rot, v_heads = [], []
    for g in range(nkv):
        kg = rope(qkv[:, qd + g * hd: qd + (g + 1) * hd])
        k_rot.append(kg.astype(COMPUTE_DTYPE))
        v_heads.append(qkv[:, qd + kvd + g * hd: qd + kvd + (g + 1) * hd]
                       .astype(COMPUTE_DTYPE))

    # ---- attention over all heads; PV results stored into static slices of scratch ----
    for hh in range(nh):
        qh = rope(qkv[:, hh * hd:(hh + 1) * hd]) * scale   # scale folded into q (f32)
        qh = qh.astype(COMPUTE_DTYPE)
        kg = k_rot[hh // n_rep]
        s = jax.lax.dot_general(qh, kg, (((1,), (1,)), ((), ())),
                                preferred_element_type=jnp.float32)   # (S, S), no .T
        s = s - jnp.max(s, axis=-1, keepdims=True)
        p = jnp.exp(s)
        p = p * pl.reciprocal(jnp.sum(p, axis=-1, keepdims=True), approx=True)
        attn_ref[:, hh * hd:(hh + 1) * hd] = jnp.dot(
            p.astype(COMPUTE_DTYPE), v_heads[hh // n_rep],
            preferred_element_type=jnp.float32)

    # ---- o-proj + residual ----
    proj = jnp.dot(attn_ref[...].astype(COMPUTE_DTYPE), ow_ref[0],
                   preferred_element_type=jnp.float32)
    h = h + proj

    # ---- fused RMSNorm + [gate|up] matmul + gelu(tanh)*up + down + residual ----
    xn2 = rmsnorm(h, postln_ref[0])
    gu = jnp.dot(xn2.astype(COMPUTE_DTYPE), wgu_ref[0],
                 preferred_element_type=jnp.float32)
    act = jax.nn.gelu(gu[:, :inter], approximate=True) * gu[:, inter:]
    down = jnp.dot(act.astype(COMPUTE_DTYPE), wdown_ref[0],
                   preferred_element_type=jnp.float32)
    h = h + down

    h_ref[...] = h

    # ---- final RMSNorm fused into lm_head, emitted once on the last layer ----
    @pl.when(layer == n_layers - 1)
    def _():
        xf = rmsnorm(h, fnorm_ref[...])
        logits_ref[0] = jnp.dot(xf.astype(COMPUTE_DTYPE), lmhead_ref[...],
                                preferred_element_type=jnp.float32
                                ).astype(logits_ref.dtype)


def _siglip_stack_kernel(patches_ref, pw_ref, padd_ref,
                         ln1w_ref, ln1b_ref, wqkv_ref, bqkv_ref, ow_ref, ob_ref,
                         ln2w_ref, ln2b_ref, fc1w_ref, fc1b_ref, fc2w_ref, fc2b_ref,
                         postw_ref, postb_ref, projw_ref, projb_ref,
                         feat_ref,
                         x_ref, attn_ref, *, cfg):
    """One grid step = one (batch element, SigLIP encoder layer).  Patch-embedding is done
    at layer 0; post-LN + multimodal projector are fused into the last layer."""
    vh = cfg['hidden_size']
    heads = cfg['num_attention_heads']
    hd = vh // heads
    eps = cfg['layer_norm_eps']
    scale = hd ** -0.5

    layer = pl.program_id(1)
    n_layers = pl.num_programs(1)

    def layernorm(x, w, b):
        mu = jnp.mean(x, axis=-1, keepdims=True)
        xc = x - mu
        var = jnp.mean(xc * xc, axis=-1, keepdims=True)
        return xc * jax.lax.rsqrt(var + eps) * w + b

    @pl.when(layer == 0)
    def _():
        # patch-embedding conv (kernel==stride, valid) as matmul; conv bias + pos-embed
        # fused into one (P, vh) addend reused for every batch element (no tiling in XLA).
        x0 = jnp.dot(patches_ref[0].astype(COMPUTE_DTYPE), pw_ref[...],
                     preferred_element_type=jnp.float32)
        x_ref[...] = x0 + padd_ref[...]

    x = x_ref[...]                                    # (P, vh) f32 residual stream

    # ---- LayerNorm + concatenated [q|k|v] matmul + bias ----
    xn = layernorm(x, ln1w_ref[0], ln1b_ref[0])
    qkv = jnp.dot(xn.astype(COMPUTE_DTYPE), wqkv_ref[0],
                  preferred_element_type=jnp.float32) + bqkv_ref[0]     # (P, 3*vh)

    # ---- MHA; per-head PV results stored into static slices of scratch ----
    for hh in range(heads):
        qh = (qkv[:, hh * hd:(hh + 1) * hd] * scale).astype(COMPUTE_DTYPE)
        kh = qkv[:, vh + hh * hd: vh + (hh + 1) * hd].astype(COMPUTE_DTYPE)
        vv = qkv[:, 2 * vh + hh * hd: 2 * vh + (hh + 1) * hd].astype(COMPUTE_DTYPE)
        s = jax.lax.dot_general(qh, kh, (((1,), (1,)), ((), ())),
                                preferred_element_type=jnp.float32)
        s = s - jnp.max(s, axis=-1, keepdims=True)
        p = jnp.exp(s)
        p = p * pl.reciprocal(jnp.sum(p, axis=-1, keepdims=True), approx=True)
        attn_ref[:, hh * hd:(hh + 1) * hd] = jnp.dot(
            p.astype(COMPUTE_DTYPE), vv, preferred_element_type=jnp.float32)

    proj = jnp.dot(attn_ref[...].astype(COMPUTE_DTYPE), ow_ref[0],
                   preferred_element_type=jnp.float32) + ob_ref[0]
    x = x + proj

    # ---- LayerNorm + fc1 + gelu(tanh) + fc2 + residual ----
    xn2 = layernorm(x, ln2w_ref[0], ln2b_ref[0])
    h1 = jnp.dot(xn2.astype(COMPUTE_DTYPE), fc1w_ref[0],
                 preferred_element_type=jnp.float32) + fc1b_ref[0]
    h1 = jax.nn.gelu(h1, approximate=True)
    h2 = jnp.dot(h1.astype(COMPUTE_DTYPE), fc2w_ref[0],
                 preferred_element_type=jnp.float32) + fc2b_ref[0]
    x = x + h2

    x_ref[...] = x

    # ---- post-LN fused with the multimodal projector, emitted once on last layer ----
    @pl.when(layer == n_layers - 1)
    def _():
        xp = layernorm(x, postw_ref[...], postb_ref[...])
        feat_ref[0] = (jnp.dot(xp.astype(COMPUTE_DTYPE), projw_ref[...],
                               preferred_element_type=jnp.float32)
                       + projb_ref[...]).astype(feat_ref.dtype)


# ------------------------------ Pallas wrappers -------------------------------
def siglip_vision_and_project(vp, proj, pixel_values, vcfg, proj_dim):
    B, C, Hi, Wi = pixel_values.shape
    p = vcfg['patch_size']
    gh, gw = Hi // p, Wi // p
    P = gh * gw
    vh = vcfg['hidden_size']
    vi = vcfg['intermediate_size']
    L = vcfg['num_hidden_layers']
    Cpp = C * p * p

    patches = pixel_values.reshape(B, C, gh, p, gw, p)
    patches = patches.transpose(0, 2, 4, 1, 3, 5).reshape(B, P, Cpp).astype(jnp.float32)

    def act_spec(rows, last):
        return pl.BlockSpec((1, rows, last), lambda b, l: (b, 0, 0))

    def layer_spec(shape):
        return pl.BlockSpec((1,) + shape, lambda b, l: (l,) + (0,) * len(shape))

    def const_spec(shape):
        return pl.BlockSpec(shape, lambda b, l: (0,) * len(shape))

    return pl.pallas_call(
        functools.partial(_siglip_stack_kernel, cfg=vcfg),
        out_shape=jax.ShapeDtypeStruct((B, P, proj_dim), jnp.float32),
        grid=(B, L),
        in_specs=[act_spec(P, Cpp), const_spec((Cpp, vh)), const_spec((P, vh)),
                  layer_spec((1, vh)), layer_spec((1, vh)),
                  layer_spec((vh, 3 * vh)), layer_spec((1, 3 * vh)),
                  layer_spec((vh, vh)), layer_spec((1, vh)),
                  layer_spec((1, vh)), layer_spec((1, vh)),
                  layer_spec((vh, vi)), layer_spec((1, vi)),
                  layer_spec((vi, vh)), layer_spec((1, vh)),
                  const_spec((1, vh)), const_spec((1, vh)),
                  const_spec((vh, proj_dim)), const_spec((1, proj_dim))],
        out_specs=act_spec(P, proj_dim),
        scratch_shapes=[pltpu.VMEM((P, vh), jnp.float32),
                        pltpu.VMEM((P, vh), jnp.float32)],
        compiler_params=pltpu.CompilerParams(
            dimension_semantics=("parallel", "arbitrary")),
    )(patches, vp['patch_w'], vp['embed_add'],
      vp['ln1_w'], vp['ln1_b'], vp['wqkv'], vp['bqkv'], vp['o_w'], vp['o_b'],
      vp['ln2_w'], vp['ln2_b'], vp['fc1_w'], vp['fc1_b'], vp['fc2_w'], vp['fc2_b'],
      vp['post_ln_w'], vp['post_ln_b'], proj['w'], proj['b'])


def gemma_language_model(tp, input_embeds, position_ids, cfg):
    B, S, H = input_embeds.shape
    hd = cfg['head_dim']
    V = cfg['vocab_size']
    L = cfg['num_hidden_layers']
    nh, nkv = cfg['num_attention_heads'], cfg['num_key_value_heads']
    qd, kvd = nh * hd, nkv * hd
    I = cfg['intermediate_size']

    cos, sin = _compute_rope(position_ids, hd, cfg['rope_theta'])    # (B, S, hd) f32

    def act_spec(last):
        return pl.BlockSpec((1, S, last), lambda b, l: (b, 0, 0))

    def layer_spec(shape):
        return pl.BlockSpec((1,) + shape, lambda b, l: (l,) + (0,) * len(shape))

    def const_spec(shape):
        return pl.BlockSpec(shape, lambda b, l: (0,) * len(shape))

    return pl.pallas_call(
        functools.partial(_gemma_stack_kernel, cfg=cfg),
        out_shape=jax.ShapeDtypeStruct((B, S, V), jnp.float32),
        grid=(B, L),
        in_specs=[act_spec(H), act_spec(hd), act_spec(hd),
                  layer_spec((1, H)), layer_spec((H, qd + 2 * kvd)),
                  layer_spec((qd, H)), layer_spec((1, H)),
                  layer_spec((H, 2 * I)), layer_spec((I, H)),
                  const_spec((1, H)), const_spec((H, V))],
        out_specs=act_spec(V),
        scratch_shapes=[pltpu.VMEM((S, H), jnp.float32),
                        pltpu.VMEM((S, qd), jnp.float32)],
        compiler_params=pltpu.CompilerParams(
            dimension_semantics=("parallel", "arbitrary")),
    )(input_embeds, cos, sin,
      tp['in_ln'], tp['wqkv'], tp['o_w'], tp['post_ln'], tp['wgu'], tp['down_w'],
      tp['final_norm'], tp['lm_head'])


# ------------------------------ model glue (JAX) ------------------------------
def _compute_rope(position_ids, head_dim, theta):
    inv_freq = 1.0 / (theta ** (jnp.arange(0, head_dim, 2, dtype=jnp.float32) / head_dim))
    freqs = position_ids.astype(jnp.float32)[..., None] * inv_freq[None, None, :]
    emb = jnp.concatenate([freqs, freqs], axis=-1)
    return jnp.cos(emb), jnp.sin(emb)


def merge_image_features(image_features, input_embeds, input_ids, attention_mask, cfg):
    B, S = input_ids.shape
    E = input_embeds.shape[-1]
    scaled = image_features / (cfg['hidden_size'] ** 0.5)
    text_mask = (input_ids != cfg['image_token_index']) & (input_ids != cfg['pad_token_id'])
    image_mask = input_ids == cfg['image_token_index']
    pad_mask = input_ids == cfg['pad_token_id']

    final = jnp.where(text_mask[..., None], input_embeds, 0.0)
    # masked_scatter: fill image positions (row-major) with scaled image features in order
    flat_mask = image_mask.reshape(-1)
    src = scaled.reshape(-1, E)
    idx = jnp.clip(jnp.cumsum(flat_mask) - 1, 0, src.shape[0] - 1)
    gathered = src[idx]
    final = jnp.where(flat_mask[:, None], gathered, final.reshape(-1, E)).reshape(B, S, E)
    final = jnp.where(pad_mask[..., None], 0.0, final)

    # prefill (kv_cache is None): reference builds an all-zero additive causal mask,
    # so no mask tensor is materialized or passed to the attention kernels.
    pos = jnp.cumsum(attention_mask, axis=-1)
    position_ids = jnp.where(attention_mask == 0, 1, pos)
    return final, position_ids


def paligemma_forward(params, input_ids, pixel_values, attention_mask):
    tcfg, vcfg = PALI_CFG['text'], PALI_CFG['vision']
    input_embeds = params['text']['embed_tokens'][input_ids]
    image_features = siglip_vision_and_project(
        params['vision'], params['proj'],
        pixel_values.astype(input_embeds.dtype), vcfg, PALI_CFG['projection_dim'])
    embeds, position_ids = merge_image_features(
        image_features, input_embeds, input_ids, attention_mask, PALI_CFG)
    logits = gemma_language_model(params['text'], embeds, position_ids, tcfg)
    return {'logits': logits}


# ------------------------------- param init -----------------------------------
def init_params(key):
    """Per-layer weights are stacked on a leading layer axis, stored pre-transposed (K, N)
    and pre-cast to COMPUTE_DTYPE once, so the forward never re-transposes / re-casts."""
    vcfg, tcfg = VISION_CFG, TEXT_CFG
    keys = iter(jax.random.split(key, 64))
    f32 = jnp.float32

    def w(shape, scale=0.02, dtype=COMPUTE_DTYPE):
        return (jax.random.normal(next(keys), shape, jnp.float32) * scale).astype(dtype)

    vh, vi = vcfg['hidden_size'], vcfg['intermediate_size']
    Lv = vcfg['num_hidden_layers']
    C, p = vcfg['num_channels'], vcfg['patch_size']
    P = (vcfg['image_size'] // p) ** 2
    Cpp = C * p * p
    vision = dict(
        patch_w=w((Cpp, vh)),                         # conv weight flattened (C,ph,pw) -> vh
        embed_add=w((P, vh), dtype=f32),              # conv bias (0 at init) + pos-embedding
        ln1_w=jnp.ones((Lv, 1, vh), f32), ln1_b=jnp.zeros((Lv, 1, vh), f32),
        wqkv=w((Lv, vh, 3 * vh)), bqkv=jnp.zeros((Lv, 1, 3 * vh), f32),
        o_w=w((Lv, vh, vh)), o_b=jnp.zeros((Lv, 1, vh), f32),
        ln2_w=jnp.ones((Lv, 1, vh), f32), ln2_b=jnp.zeros((Lv, 1, vh), f32),
        fc1_w=w((Lv, vh, vi)), fc1_b=jnp.zeros((Lv, 1, vi), f32),
        fc2_w=w((Lv, vi, vh)), fc2_b=jnp.zeros((Lv, 1, vh), f32),
        post_ln_w=jnp.ones((1, vh), f32), post_ln_b=jnp.zeros((1, vh), f32))

    H, I, V = tcfg['hidden_size'], tcfg['intermediate_size'], tcfg['vocab_size']
    Lt = tcfg['num_hidden_layers']
    nh, nkv, hd = tcfg['num_attention_heads'], tcfg['num_key_value_heads'], tcfg['head_dim']
    text = dict(
        embed_tokens=w((V, H), dtype=f32),
        in_ln=jnp.zeros((Lt, 1, H), f32),             # Gemma RMSNorm weight init = zeros
        wqkv=w((Lt, H, (nh + 2 * nkv) * hd)),         # [q | k | v] concatenated -> one MXU call
        o_w=w((Lt, nh * hd, H)),
        post_ln=jnp.zeros((Lt, 1, H), f32),
        wgu=w((Lt, H, 2 * I)),                        # [gate | up] concatenated -> one MXU call
        down_w=w((Lt, I, H)),
        final_norm=jnp.zeros((1, H), f32),
        lm_head=w((H, V)))                            # TODO(synk): Gemma ties lm_head to embed

    proj = dict(w=w((vh, PALI_CFG['projection_dim'])),
                b=jnp.zeros((1, PALI_CFG['projection_dim']), f32))
    return dict(vision=vision, text=text, proj=proj)


# ---------------------------------- main ---------------------------------------
if __name__ == "__main__":
    key = jax.random.PRNGKey(0)
    pkey, ikey, tkey = jax.random.split(key, 3)
    params = init_params(pkey)

    B, S = 2, 8
    num_img_tokens = (VISION_CFG['image_size'] // VISION_CFG['patch_size']) ** 2  # 4
    img_tokens = jnp.full((B, num_img_tokens), PALI_CFG['image_token_index'], jnp.int32)
    text_tokens = jax.random.randint(tkey, (B, S - num_img_tokens), 1,
                                     PALI_CFG['image_token_index']).astype(jnp.int32)
    input_ids = jnp.concatenate([img_tokens, text_tokens], axis=1)                # (2, 8)
    pixel_values = jax.random.normal(
        ikey, (B, VISION_CFG['num_channels'],
               VISION_CFG['image_size'], VISION_CFG['image_size']), jnp.float32)  # (2,3,16,16)
    attention_mask = jnp.ones((B, S), jnp.int32)

    out = jax.jit(paligemma_forward)(params, input_ids, pixel_values, attention_mask)
    logits = jax.block_until_ready(out['logits'])
    assert logits.shape == (B, S, TEXT_CFG['vocab_size'])
    assert bool(jnp.all(jnp.isfinite(logits)))
    print("KERNEL_OK")
</pallas_src>

<mosaic_0001>
module attributes {stable_mosaic.version = 11 : i64} {
  func.func @_siglip_stack_kernel(%arg0: i32, %arg1: i32, %arg2: memref<1x4x192xf32, #tpu.memory_space<vmem>>, %arg3: memref<192x32xbf16, #tpu.memory_space<vmem>>, %arg4: memref<4x32xf32, #tpu.memory_space<vmem>>, %arg5: memref<1x1x32xf32, #tpu.memory_space<vmem>>, %arg6: memref<1x1x32xf32, #tpu.memory_space<vmem>>, %arg7: memref<1x32x96xbf16, #tpu.memory_space<vmem>>, %arg8: memref<1x1x96xf32, #tpu.memory_space<vmem>>, %arg9: memref<1x32x32xbf16, #tpu.memory_space<vmem>>, %arg10: memref<1x1x32xf32, #tpu.memory_space<vmem>>, %arg11: memref<1x1x32xf32, #tpu.memory_space<vmem>>, %arg12: memref<1x1x32xf32, #tpu.memory_space<vmem>>, %arg13: memref<1x32x64xbf16, #tpu.memory_space<vmem>>, %arg14: memref<1x1x64xf32, #tpu.memory_space<vmem>>, %arg15: memref<1x64x32xbf16, #tpu.memory_space<vmem>>, %arg16: memref<1x1x32xf32, #tpu.memory_space<vmem>>, %arg17: memref<1x32xf32, #tpu.memory_space<vmem>>, %arg18: memref<1x32xf32, #tpu.memory_space<vmem>>, %arg19: memref<32x32xbf16, #tpu.memory_space<vmem>>, %arg20: memref<1x32xf32, #tpu.memory_space<vmem>>, %arg21: memref<1x4x32xf32, #tpu.memory_space<vmem>>, %arg22: memref<4x32xf32, #tpu.memory_space<vmem>>, %arg23: memref<4x32xf32, #tpu.memory_space<vmem>>) attributes {dimension_semantics = [#tpu.dimension_semantics<parallel>, #tpu.dimension_semantics<arbitrary>], iteration_bounds = array<i64: 2, 2>, scalar_prefetch = 0 : i64, scratch_operands = 2 : i64, tpu.core_type = #tpu.core_type<tc>, window_params = [{transform_indices = @transform_0, window_bounds = array<i64: 1, 4, 192>}, {pipeline_mode = #tpu.pipeline_mode<synchronous>, transform_indices = @transform_1, window_bounds = array<i64: 192, 32>}, {pipeline_mode = #tpu.pipeline_mode<synchronous>, transform_indices = @transform_2, window_bounds = array<i64: 4, 32>}, {transform_indices = @transform_3, window_bounds = array<i64: 1, 1, 32>}, {transform_indices = @transform_4, window_bounds = array<i64: 1, 1, 32>}, {transform_indices = @transform_5, window_bounds = array<i64: 1, 32, 96>}, {transform_indices = @transform_6, window_bounds = array<i64: 1, 1, 96>}, {transform_indices = @transform_7, window_bounds = array<i64: 1, 32, 32>}, {transform_indices = @transform_8, window_bounds = array<i64: 1, 1, 32>}, {transform_indices = @transform_9, window_bounds = array<i64: 1, 1, 32>}, {transform_indices = @transform_10, window_bounds = array<i64: 1, 1, 32>}, {transform_indices = @transform_11, window_bounds = array<i64: 1, 32, 64>}, {transform_indices = @transform_12, window_bounds = array<i64: 1, 1, 64>}, {transform_indices = @transform_13, window_bounds = array<i64: 1, 64, 32>}, {transform_indices = @transform_14, window_bounds = array<i64: 1, 1, 32>}, {pipeline_mode = #tpu.pipeline_mode<synchronous>, transform_indices = @transform_15, window_bounds = array<i64: 1, 32>}, {pipeline_mode = #tpu.pipeline_mode<synchronous>, transform_indices = @transform_16, window_bounds = array<i64: 1, 32>}, {pipeline_mode = #tpu.pipeline_mode<synchronous>, transform_indices = @transform_17, window_bounds = array<i64: 32, 32>}, {pipeline_mode = #tpu.pipeline_mode<synchronous>, transform_indices = @transform_18, window_bounds = array<i64: 1, 32>}, {transform_indices = @transform_19, window_bounds = array<i64: 1, 4, 32>}]} {
    %c0_i32 = arith.constant 0 : i32
    %0 = arith.cmpi eq, %arg1, %c0_i32 : i32
    %1 = arith.extui %0 : i1 to i32
    %c0_i32_0 = arith.constant 0 : i32
    %2 = arith.cmpi ne, %1, %c0_i32_0 : i32
    scf.if %2 {
      %c0_85 = arith.constant 0 : index
      %c0_86 = arith.constant 0 : index
      %c0_87 = arith.constant 0 : index
      %192 = vector.load %arg2[%c0_85, %c0_86, %c0_87] : memref<1x4x192xf32, #tpu.memory_space<vmem>>, vector<1x4x192xf32>
      %193 = vector.shape_cast %192 : vector<1x4x192xf32> to vector<4x192xf32>
      %194 = arith.truncf %193 : vector<4x192xf32> to vector<4x192xbf16>
      %c0_88 = arith.constant 0 : index
      %c0_89 = arith.constant 0 : index
      %195 = vector.load %arg3[%c0_88, %c0_89] : memref<192x32xbf16, #tpu.memory_space<vmem>>, vector<192x32xbf16>
      %cst_90 = arith.constant dense<0.000000e+00> : vector<4x32xf32>
      %196 = tpu.matmul %194, %195, %cst_90 {dimension_numbers = #tpu.dot_dimension_numbers<[1], [0], [0], [1], [0, 0, 1, 1], [], []>} : vector<4x192xbf16>, vector<192x32xbf16>, vector<4x32xf32> -> vector<4x32xf32>
      %c0_91 = arith.constant 0 : index
      %c0_92 = arith.constant 0 : index
      %197 = vector.load %arg4[%c0_91, %c0_92] : memref<4x32xf32, #tpu.memory_space<vmem>>, vector<4x32xf32>
      %198 = arith.addf %196, %197 : vector<4x32xf32>
      %c0_93 = arith.constant 0 : index
      %c0_94 = arith.constant 0 : index
      %199 = vector.load %arg22[%c0_93, %c0_94] : memref<4x32xf32, #tpu.memory_space<vmem>>, vector<4x32xf32>
      tpu.vector_store %arg22[%c0_93, %c0_94], %198 {strides = array<i32>} : memref<4x32xf32, #tpu.memory_space<vmem>>, vector<4x32xf32>,
    } else {
    }
    %c0 = arith.constant 0 : index
    %c0_1 = arith.constant 0 : index
    %3 = vector.load %arg22[%c0, %c0_1] : memref<4x32xf32, #tpu.memory_space<vmem>>, vector<4x32xf32>
    %c0_2 = arith.constant 0 : index
    %c0_3 = arith.constant 0 : index
    %c0_4 = arith.constant 0 : index
    %4 = vector.load %arg5[%c0_2, %c0_3, %c0_4] : memref<1x1x32xf32, #tpu.memory_space<vmem>>, vector<1x1x32xf32>
    %5 = vector.shape_cast %4 : vector<1x1x32xf32> to vector<1x32xf32>
    %c0_5 = arith.constant 0 : index
    %c0_6 = arith.constant 0 : index
    %c0_7 = arith.constant 0 : index
    %6 = vector.load %arg6[%c0_5, %c0_6, %c0_7] : memref<1x1x32xf32, #tpu.memory_space<vmem>>, vector<1x1x32xf32>
    %7 = vector.shape_cast %6 : vector<1x1x32xf32> to vector<1x32xf32>
    %cst = arith.constant dense<0.000000e+00> : vector<4xf32>
    %8 = vector.multi_reduction <add>, %3, %cst [1] : vector<4x32xf32> to vector<4xf32>
    %9 = vector.shape_cast %8 : vector<4xf32> to vector<4x1xf32>
    %cst_8 = arith.constant 3.200000e+01 : f32
    %10 = vector.broadcast %cst_8 : f32 to vector<4x1xf32>
    %11 = arith.divf %9, %10 : vector<4x1xf32>
    %12 = vector.broadcast %11 : vector<4x1xf32> to vector<4x32xf32>
    %13 = arith.subf %3, %12 : vector<4x32xf32>
    %14 = arith.mulf %13, %13 : vector<4x32xf32>
    %cst_9 = arith.constant dense<0.000000e+00> : vector<4xf32>
    %15 = vector.multi_reduction <add>, %14, %cst_9 [1] : vector<4x32xf32> to vector<4xf32>
    %16 = vector.shape_cast %15 : vector<4xf32> to vector<4x1xf32>
    %cst_10 = arith.constant 3.200000e+01 : f32
    %17 = vector.broadcast %cst_10 : f32 to vector<4x1xf32>
    %18 = arith.divf %16, %17 : vector<4x1xf32>
    %cst_11 = arith.constant 9.99999997E-7 : f32
    %19 = vector.broadcast %cst_11 : f32 to vector<4x1xf32>
    %20 = arith.addf %18, %19 : vector<4x1xf32>
    %21 = math.rsqrt %20 : vector<4x1xf32>
    %22 = vector.broadcast %21 : vector<4x1xf32> to vector<4x32xf32>
    %23 = arith.mulf %13, %22 : vector<4x32xf32>
    %24 = vector.broadcast %5 : vector<1x32xf32> to vector<4x32xf32>
    %25 = arith.mulf %23, %24 : vector<4x32xf32>
    %26 = vector.broadcast %7 : vector<1x32xf32> to vector<4x32xf32>
    %27 = arith.addf %25, %26 : vector<4x32xf32>
    %28 = arith.truncf %27 : vector<4x32xf32> to vector<4x32xbf16>
    %c0_12 = arith.constant 0 : index
    %c0_13 = arith.constant 0 : index
    %c0_14 = arith.constant 0 : index
    %29 = vector.load %arg7[%c0_12, %c0_13, %c0_14] : memref<1x32x96xbf16, #tpu.memory_space<vmem>>, vector<1x32x96xbf16>
    %30 = vector.shape_cast %29 : vector<1x32x96xbf16> to vector<32x96xbf16>
    %cst_15 = arith.constant dense<0.000000e+00> : vector<4x96xf32>
    %31 = tpu.matmul %28, %30, %cst_15 {dimension_numbers = #tpu.dot_dimension_numbers<[1], [0], [0], [1], [0, 0, 1, 1], [], []>} : vector<4x32xbf16>, vector<32x96xbf16>, vector<4x96xf32> -> vector<4x96xf32>
    %c0_16 = arith.constant 0 : index
    %c0_17 = arith.constant 0 : index
    %c0_18 = arith.constant 0 : index
    %32 = vector.load %arg8[%c0_16, %c0_17, %c0_18] : memref<1x1x96xf32, #tpu.memory_space<vmem>>, vector<1x1x96xf32>
    %33 = vector.shape_cast %32 : vector<1x1x96xf32> to vector<1x96xf32>
    %34 = vector.broadcast %33 : vector<1x96xf32> to vector<4x96xf32>
    %35 = arith.addf %31, %34 : vector<4x96xf32>
    %36 = vector.extract_strided_slice %35 {offsets = [0, 0], sizes = [4, 8], strides = [1, 1]} : vector<4x96xf32> to vector<4x8xf32>
    %cst_19 = arith.constant 0.353553385 : f32
    %37 = vector.broadcast %cst_19 : f32 to vector<4x8xf32>
    %38 = arith.mulf %36, %37 : vector<4x8xf32>
    %39 = arith.truncf %38 : vector<4x8xf32> to vector<4x8xbf16>
    %40 = vector.extract_strided_slice %35 {offsets = [0, 32], sizes = [4, 8], strides = [1, 1]} : vector<4x96xf32> to vector<4x8xf32>
    %41 = arith.truncf %40 : vector<4x8xf32> to vector<4x8xbf16>
    %42 = vector.extract_strided_slice %35 {offsets = [0, 64], sizes = [4, 8], strides = [1, 1]} : vector<4x96xf32> to vector<4x8xf32>
    %43 = arith.truncf %42 : vector<4x8xf32> to vector<4x8xbf16>
    %cst_20 = arith.constant dense<0.000000e+00> : vector<4x4xf32>
    %44 = tpu.matmul %39, %41, %cst_20 {dimension_numbers = #tpu.dot_dimension_numbers<[1], [1], [0], [0], [0, 0, 1, 0], [], []>} : vector<4x8xbf16>, vector<4x8xbf16>, vector<4x4xf32> -> vector<4x4xf32>
    %cst_21 = arith.constant dense<0xFF800000> : vector<4xf32>
    %45 = vector.multi_reduction <maximumf>, %44, %cst_21 [1] : vector<4x4xf32> to vector<4xf32>
    %46 = vector.shape_cast %45 : vector<4xf32> to vector<4x1xf32>
    %47 = vector.broadcast %46 : vector<4x1xf32> to vector<4x4xf32>
    %48 = arith.subf %44, %47 : vector<4x4xf32>
    %49 = math.exp %48 : vector<4x4xf32>
    %cst_22 = arith.constant dense<0.000000e+00> : vector<4xf32>
    %50 = vector.multi_reduction <add>, %49, %cst_22 [1] : vector<4x4xf32> to vector<4xf32>
    %51 = vector.shape_cast %50 : vector<4xf32> to vector<4x1xf32>
    %52 = tpu.reciprocal %51 {approx = true} : vector<4x1xf32> -> vector<4x1xf32>
    %53 = vector.broadcast %52 : vector<4x1xf32> to vector<4x4xf32>
    %54 = arith.mulf %49, %53 : vector<4x4xf32>
    %55 = arith.truncf %54 : vector<4x4xf32> to vector<4x4xbf16>
    %cst_23 = arith.constant dense<0.000000e+00> : vector<4x8xf32>
    %56 = tpu.matmul %55, %43, %cst_23 {dimension_numbers = #tpu.dot_dimension_numbers<[1], [0], [0], [1], [0, 0, 1, 1], [], []>} : vector<4x4xbf16>, vector<4x8xbf16>, vector<4x8xf32> -> vector<4x8xf32>
    %c0_24 = arith.constant 0 : index
    %c0_25 = arith.constant 0 : index
    %57 = vector.load %arg23[%c0_24, %c0_25] : memref<4x32xf32, #tpu.memory_space<vmem>>, vector<4x8xf32>
    tpu.vector_store %arg23[%c0_24, %c0_25], %56 {strides = array<i32>} : memref<4x32xf32, #tpu.memory_space<vmem>>, vector<4x8xf32>,
    %58 = vector.extract_strided_slice %35 {offsets = [0, 8], sizes = [4, 8], strides = [1, 1]} : vector<4x96xf32> to vector<4x8xf32>
    %cst_26 = arith.constant 0.353553385 : f32
    %59 = vector.broadcast %cst_26 : f32 to vector<4x8xf32>
    %60 = arith.mulf %58, %59 : vector<4x8xf32>
    %61 = arith.truncf %60 : vector<4x8xf32> to vector<4x8xbf16>
    %62 = vector.extract_strided_slice %35 {offsets = [0, 40], sizes = [4, 8], strides = [1, 1]} : vector<4x96xf32> to vector<4x8xf32>
    %63 = arith.truncf %62 : vector<4x8xf32> to vector<4x8xbf16>
    %64 = vector.extract_strided_slice %35 {offsets = [0, 72], sizes = [4, 8], strides = [1, 1]} : vector<4x96xf32> to vector<4x8xf32>
    %65 = arith.truncf %64 : vector<4x8xf32> to vector<4x8xbf16>
    %cst_27 = arith.constant dense<0.000000e+00> : vector<4x4xf32>
    %66 = tpu.matmul %61, %63, %cst_27 {dimension_numbers = #tpu.dot_dimension_numbers<[1], [1], [0], [0], [0, 0, 1, 0], [], []>} : vector<4x8xbf16>, vector<4x8xbf16>, vector<4x4xf32> -> vector<4x4xf32>
    %cst_28 = arith.constant dense<0xFF800000> : vector<4xf32>
    %67 = vector.multi_reduction <maximumf>, %66, %cst_28 [1] : vector<4x4xf32> to vector<4xf32>
    %68 = vector.shape_cast %67 : vector<4xf32> to vector<4x1xf32>
    %69 = vector.broadcast %68 : vector<4x1xf32> to vector<4x4xf32>
    %70 = arith.subf %66, %69 : vector<4x4xf32>
    %71 = math.exp %70 : vector<4x4xf32>
    %cst_29 = arith.constant dense<0.000000e+00> : vector<4xf32>
    %72 = vector.multi_reduction <add>, %71, %cst_29 [1] : vector<4x4xf32> to vector<4xf32>
    %73 = vector.shape_cast %72 : vector<4xf32> to vector<4x1xf32>
    %74 = tpu.reciprocal %73 {approx = true} : vector<4x1xf32> -> vector<4x1xf32>
    %75 = vector.broadcast %74 : vector<4x1xf32> to vector<4x4xf32>
    %76 = arith.mulf %71, %75 : vector<4x4xf32>
    %77 = arith.truncf %76 : vector<4x4xf32> to vector<4x4xbf16>
    %cst_30 = arith.constant dense<0.000000e+00> : vector<4x8xf32>
    %78 = tpu.matmul %77, %65, %cst_30 {dimension_numbers = #tpu.dot_dimension_numbers<[1], [0], [0], [1], [0, 0, 1, 1], [], []>} : vector<4x4xbf16>, vector<4x8xbf16>, vector<4x8xf32> -> vector<4x8xf32>
    %c0_31 = arith.constant 0 : index
    %c8 = arith.constant 8 : index
    %79 = vector.load %arg23[%c0_31, %c8] : memref<4x32xf32, #tpu.memory_space<vmem>>, vector<4x8xf32>
    tpu.vector_store %arg23[%c0_31, %c8], %78 {strides = array<i32>} : memref<4x32xf32, #tpu.memory_space<vmem>>, vector<4x8xf32>,
    %80 = vector.extract_strided_slice %35 {offsets = [0, 16], sizes = [4, 8], strides = [1, 1]} : vector<4x96xf32> to vector<4x8xf32>
    %cst_32 = arith.constant 0.353553385 : f32
    %81 = vector.broadcast %cst_32 : f32 to vector<4x8xf32>
    %82 = arith.mulf %80, %81 : vector<4x8xf32>
    %83 = arith.truncf %82 : vector<4x8xf32> to vector<4x8xbf16>
    %84 = vector.extract_strided_slice %35 {offsets = [0, 48], sizes = [4, 8], strides = [1, 1]} : vector<4x96xf32> to vector<4x8xf32>
    %85 = arith.truncf %84 : vector<4x8xf32> to vector<4x8xbf16>
    %86 = vector.extract_strided_slice %35 {offsets = [0, 80], sizes = [4, 8], strides = [1, 1]} : vector<4x96xf32> to vector<4x8xf32>
    %87 = arith.truncf %86 : vector<4x8xf32> to vector<4x8xbf16>
    %cst_33 = arith.constant dense<0.000000e+00> : vector<4x4xf32>
    %88 = tpu.matmul %83, %85, %cst_33 {dimension_numbers = #tpu.dot_dimension_numbers<[1], [1], [0], [0], [0, 0, 1, 0], [], []>} : vector<4x8xbf16>, vector<4x8xbf16>, vector<4x4xf32> -> vector<4x4xf32>
    %cst_34 = arith.constant dense<0xFF800000> : vector<4xf32>
    %89 = vector.multi_reduction <maximumf>, %88, %cst_34 [1] : vector<4x4xf32> to vector<4xf32>
    %90 = vector.shape_cast %89 : vector<4xf32> to vector<4x1xf32>
    %91 = vector.broadcast %90 : vector<4x1xf32> to vector<4x4xf32>
    %92 = arith.subf %88, %91 : vector<4x4xf32>
    %93 = math.exp %92 : vector<4x4xf32>
    %cst_35 = arith.constant dense<0.000000e+00> : vector<4xf32>
    %94 = vector.multi_reduction <add>, %93, %cst_35 [1] : vector<4x4xf32> to vector<4xf32>
    %95 = vector.shape_cast %94 : vector<4xf32> to vector<4x1xf32>
    %96 = tpu.reciprocal %95 {approx = true} : vector<4x1xf32> -> vector<4x1xf32>
    %97 = vector.broadcast %96 : vector<4x1xf32> to vector<4x4xf32>
    %98 = arith.mulf %93, %97 : vector<4x4xf32>
    %99 = arith.truncf %98 : vector<4x4xf32> to vector<4x4xbf16>
    %cst_36 = arith.constant dense<0.000000e+00> : vector<4x8xf32>
    %100 = tpu.matmul %99, %87, %cst_36 {dimension_numbers = #tpu.dot_dimension_numbers<[1], [0], [0], [1], [0, 0, 1, 1], [], []>} : vector<4x4xbf16>, vector<4x8xbf16>, vector<4x8xf32> -> vector<4x8xf32>
    %c0_37 = arith.constant 0 : index
    %c16 = arith.constant 16 : index
    %101 = vector.load %arg23[%c0_37, %c16] : memref<4x32xf32, #tpu.memory_space<vmem>>, vector<4x8xf32>
    tpu.vector_store %arg23[%c0_37, %c16], %100 {strides = array<i32>} : memref<4x32xf32, #tpu.memory_space<vmem>>, vector<4x8xf32>,
    %102 = vector.extract_strided_slice %35 {offsets = [0, 24], sizes = [4, 8], strides = [1, 1]} : vector<4x96xf32> to vector<4x8xf32>
    %cst_38 = arith.constant 0.353553385 : f32
    %103 = vector.broadcast %cst_38 : f32 to vector<4x8xf32>
    %104 = arith.mulf %102, %103 : vector<4x8xf32>
    %105 = arith.truncf %104 : vector<4x8xf32> to vector<4x8xbf16>
    %106 = vector.extract_strided_slice %35 {offsets = [0, 56], sizes = [4, 8], strides = [1, 1]} : vector<4x96xf32> to vector<4x8xf32>
    %107 = arith.truncf %106 : vector<4x8xf32> to vector<4x8xbf16>
    %108 = vector.extract_strided_slice %35 {offsets = [0, 88], sizes = [4, 8], strides = [1, 1]} : vector<4x96xf32> to vector<4x8xf32>
    %109 = arith.truncf %108 : vector<4x8xf32> to vector<4x8xbf16>
    %cst_39 = arith.constant dense<0.000000e+00> : vector<4x4xf32>
    %110 = tpu.matmul %105, %107, %cst_39 {dimension_numbers = #tpu.dot_dimension_numbers<[1], [1], [0], [0], [0, 0, 1, 0], [], []>} : vector<4x8xbf16>, vector<4x8xbf16>, vector<4x4xf32> -> vector<4x4xf32>
    %cst_40 = arith.constant dense<0xFF800000> : vector<4xf32>
    %111 = vector.multi_reduction <maximumf>, %110, %cst_40 [1] : vector<4x4xf32> to vector<4xf32>
    %112 = vector.shape_cast %111 : vector<4xf32> to vector<4x1xf32>
    %113 = vector.broadcast %112 : vector<4x1xf32> to vector<4x4xf32>
    %114 = arith.subf %110, %113 : vector<4x4xf32>
    %115 = math.exp %114 : vector<4x4xf32>
    %cst_41 = arith.constant dense<0.000000e+00> : vector<4xf32>
    %116 = vector.multi_reduction <add>, %115, %cst_41 [1] : vector<4x4xf32> to vector<4xf32>
    %117 = vector.shape_cast %116 : vector<4xf32> to vector<4x1xf32>
    %118 = tpu.reciprocal %117 {approx = true} : vector<4x1xf32> -> vector<4x1xf32>
    %119 = vector.broadcast %118 : vector<4x1xf32> to vector<4x4xf32>
    %120 = arith.mulf %115, %119 : vector<4x4xf32>
    %121 = arith.truncf %120 : vector<4x4xf32> to vector<4x4xbf16>
    %cst_42 = arith.constant dense<0.000000e+00> : vector<4x8xf32>
    %122 = tpu.matmul %121, %109, %cst_42 {dimension_numbers = #tpu.dot_dimension_numbers<[1], [0], [0], [1], [0, 0, 1, 1], [], []>} : vector<4x4xbf16>, vector<4x8xbf16>, vector<4x8xf32> -> vector<4x8xf32>
    %c0_43 = arith.constant 0 : index
    %c24 = arith.constant 24 : index
    %123 = vector.load %arg23[%c0_43, %c24] : memref<4x32xf32, #tpu.memory_space<vmem>>, vector<4x8xf32>
    tpu.vector_store %arg23[%c0_43, %c24], %122 {strides = array<i32>} : memref<4x32xf32, #tpu.memory_space<vmem>>, vector<4x8xf32>,
    %c0_44 = arith.constant 0 : index
    %c0_45 = arith.constant 0 : index
    %124 = vector.load %arg23[%c0_44, %c0_45] : memref<4x32xf32, #tpu.memory_space<vmem>>, vector<4x32xf32>
    %125 = arith.truncf %124 : vector<4x32xf32> to vector<4x32xbf16>
    %c0_46 = arith.constant 0 : index
    %c0_47 = arith.constant 0 : index
    %c0_48 = arith.constant 0 : index
    %126 = vector.load %arg9[%c0_46, %c0_47, %c0_48] : memref<1x32x32xbf16, #tpu.memory_space<vmem>>, vector<1x32x32xbf16>
    %127 = vector.shape_cast %126 : vector<1x32x32xbf16> to vector<32x32xbf16>
    %cst_49 = arith.constant dense<0.000000e+00> : vector<4x32xf32>
    %128 = tpu.matmul %125, %127, %cst_49 {dimension_numbers = #tpu.dot_dimension_numbers<[1], [0], [0], [1], [0, 0, 1, 1], [], []>} : vector<4x32xbf16>, vector<32x32xbf16>, vector<4x32xf32> -> vector<4x32xf32>
    %c0_50 = arith.constant 0 : index
    %c0_51 = arith.constant 0 : index
    %c0_52 = arith.constant 0 : index
    %129 = vector.load %arg10[%c0_50, %c0_51, %c0_52] : memref<1x1x32xf32, #tpu.memory_space<vmem>>, vector<1x1x32xf32>
    %130 = vector.shape_cast %129 : vector<1x1x32xf32> to vector<1x32xf32>
    %131 = vector.broadcast %130 : vector<1x32xf32> to vector<4x32xf32>
    %132 = arith.addf %128, %131 : vector<4x32xf32>
    %133 = arith.addf %3, %132 : vector<4x32xf32>
    %c0_53 = arith.constant 0 : index
    %c0_54 = arith.constant 0 : index
    %c0_55 = arith.constant 0 : index
    %134 = vector.load %arg11[%c0_53, %c0_54, %c0_55] : memref<1x1x32xf32, #tpu.memory_space<vmem>>, vector<1x1x32xf32>
    %135 = vector.shape_cast %134 : vector<1x1x32xf32> to vector<1x32xf32>
    %c0_56 = arith.constant 0 : index
    %c0_57 = arith.constant 0 : index
    %c0_58 = arith.constant 0 : index
    %136 = vector.load %arg12[%c0_56, %c0_57, %c0_58] : memref<1x1x32xf32, #tpu.memory_space<vmem>>, vector<1x1x32xf32>
    %137 = vector.shape_cast %136 : vector<1x1x32xf32> to vector<1x32xf32>
    %cst_59 = arith.constant dense<0.000000e+00> : vector<4xf32>
    %138 = vector.multi_reduction <add>, %133, %cst_59 [1] : vector<4x32xf32> to vector<4xf32>
    %139 = vector.shape_cast %138 : vector<4xf32> to vector<4x1xf32>
    %cst_60 = arith.constant 3.200000e+01 : f32
    %140 = vector.broadcast %cst_60 : f32 to vector<4x1xf32>
    %141 = arith.divf %139, %140 : vector<4x1xf32>
    %142 = vector.broadcast %141 : vector<4x1xf32> to vector<4x32xf32>
    %143 = arith.subf %133, %142 : vector<4x32xf32>
    %144 = arith.mulf %143, %143 : vector<4x32xf32>
    %cst_61 = arith.constant dense<0.000000e+00> : vector<4xf32>
    %145 = vector.multi_reduction <add>, %144, %cst_61 [1] : vector<4x32xf32> to vector<4xf32>
    %146 = vector.shape_cast %145 : vector<4xf32> to vector<4x1xf32>
    %cst_62 = arith.constant 3.200000e+01 : f32
    %147 = vector.broadcast %cst_62 : f32 to vector<4x1xf32>
    %148 = arith.divf %146, %147 : vector<4x1xf32>
    %cst_63 = arith.constant 9.99999997E-7 : f32
    %149 = vector.broadcast %cst_63 : f32 to vector<4x1xf32>
    %150 = arith.addf %148, %149 : vector<4x1xf32>
    %151 = math.rsqrt %150 : vector<4x1xf32>
    %152 = vector.broadcast %151 : vector<4x1xf32> to vector<4x32xf32>
    %153 = arith.mulf %143, %152 : vector<4x32xf32>
    %154 = vector.broadcast %135 : vector<1x32xf32> to vector<4x32xf32>
    %155 = arith.mulf %153, %154 : vector<4x32xf32>
    %156 = vector.broadcast %137 : vector<1x32xf32> to vector<4x32xf32>
    %157 = arith.addf %155, %156 : vector<4x32xf32>
    %158 = arith.truncf %157 : vector<4x32xf32> to vector<4x32xbf16>
    %c0_64 = arith.constant 0 : index
    %c0_65 = arith.constant 0 : index
    %c0_66 = arith.constant 0 : index
    %159 = vector.load %arg13[%c0_64, %c0_65, %c0_66] : memref<1x32x64xbf16, #tpu.memory_space<vmem>>, vector<1x32x64xbf16>
    %160 = vector.shape_cast %159 : vector<1x32x64xbf16> to vector<32x64xbf16>
    %cst_67 = arith.constant dense<0.000000e+00> : vector<4x64xf32>
    %161 = tpu.matmul %158, %160, %cst_67 {dimension_numbers = #tpu.dot_dimension_numbers<[1], [0], [0], [1], [0, 0, 1, 1], [], []>} : vector<4x32xbf16>, vector<32x64xbf16>, vector<4x64xf32> -> vector<4x64xf32>
    %c0_68 = arith.constant 0 : index
    %c0_69 = arith.constant 0 : index
    %c0_70 = arith.constant 0 : index
    %162 = vector.load %arg14[%c0_68, %c0_69, %c0_70] : memref<1x1x64xf32, #tpu.memory_space<vmem>>, vector<1x1x64xf32>
    %163 = vector.shape_cast %162 : vector<1x1x64xf32> to vector<1x64xf32>
    %164 = vector.broadcast %163 : vector<1x64xf32> to vector<4x64xf32>
    %165 = arith.addf %161, %164 : vector<4x64xf32>
    %166 = arith.mulf %165, %165 : vector<4x64xf32>
    %167 = arith.mulf %165, %166 : vector<4x64xf32>
    %cst_71 = arith.constant 4.471500e-02 : f32
    %168 = vector.broadcast %cst_71 : f32 to vector<4x64xf32>
    %169 = arith.mulf %168, %167 : vector<4x64xf32>
    %170 = arith.addf %165, %169 : vector<4x64xf32>
    %cst_72 = arith.constant 0.797884583 : f32
    %171 = vector.broadcast %cst_72 : f32 to vector<4x64xf32>
    %172 = arith.mulf %171, %170 : vector<4x64xf32>
    %173 = math.tanh %172 : vector<4x64xf32>
    %cst_73 = arith.constant 1.000000e+00 : f32
    %174 = vector.broadcast %cst_73 : f32 to vector<4x64xf32>
    %175 = arith.addf %174, %173 : vector<4x64xf32>
    %cst_74 = arith.constant 5.000000e-01 : f32
    %176 = vector.broadcast %cst_74 : f32 to vector<4x64xf32>
    %177 = arith.mulf %176, %175 : vector<4x64xf32>
    %178 = arith.mulf %165, %177 : vector<4x64xf32>
    %179 = arith.truncf %178 : vector<4x64xf32> to vector<4x64xbf16>
    %c0_75 = arith.constant 0 : index
    %c0_76 = arith.constant 0 : index
    %c0_77 = arith.constant 0 : index
    %180 = vector.load %arg15[%c0_75, %c0_76, %c0_77] : memref<1x64x32xbf16, #tpu.memory_space<vmem>>, vector<1x64x32xbf16>
    %181 = vector.shape_cast %180 : vector<1x64x32xbf16> to vector<64x32xbf16>
    %cst_78 = arith.constant dense<0.000000e+00> : vector<4x32xf32>
    %182 = tpu.matmul %179, %181, %cst_78 {dimension_numbers = #tpu.dot_dimension_numbers<[1], [0], [0], [1], [0, 0, 1, 1], [], []>} : vector<4x64xbf16>, vector<64x32xbf16>, vector<4x32xf32> -> vector<4x32xf32>
    %c0_79 = arith.constant 0 : index
    %c0_80 = arith.constant 0 : index
    %c0_81 = arith.constant 0 : index
    %183 = vector.load %arg16[%c0_79, %c0_80, %c0_81] : memref<1x1x32xf32, #tpu.memory_space<vmem>>, vector<1x1x32xf32>
    %184 = vector.shape_cast %183 : vector<1x1x32xf32> to vector<1x32xf32>
    %185 = vector.broadcast %184 : vector<1x32xf32> to vector<4x32xf32>
    %186 = arith.addf %182, %185 : vector<4x32xf32>
    %187 = arith.addf %133, %186 : vector<4x32xf32>
    %c0_82 = arith.constant 0 : index
    %c0_83 = arith.constant 0 : index
    %188 = vector.load %arg22[%c0_82, %c0_83] : memref<4x32xf32, #tpu.memory_space<vmem>>, vector<4x32xf32>
    tpu.vector_store %arg22[%c0_82, %c0_83], %187 {strides = array<i32>} : memref<4x32xf32, #tpu.memory_space<vmem>>, vector<4x32xf32>,
    %c1_i32 = arith.constant 1 : i32
    %189 = arith.cmpi eq, %arg1, %c1_i32 : i32
    %190 = arith.extui %189 : i1 to i32
    %c0_i32_84 = arith.constant 0 : i32
    %191 = arith.cmpi ne, %190, %c0_i32_84 : i32
    scf.if %191 {
      %c0_85 = arith.constant 0 : index
      %c0_86 = arith.constant 0 : index
      %192 = vector.load %arg17[%c0_85, %c0_86] : memref<1x32xf32, #tpu.memory_space<vmem>>, vector<1x32xf32>
      %c0_87 = arith.constant 0 : index
      %c0_88 = arith.constant 0 : index
      %193 = vector.load %arg18[%c0_87, %c0_88] : memref<1x32xf32, #tpu.memory_space<vmem>>, vector<1x32xf32>
      %cst_89 = arith.constant dense<0.000000e+00> : vector<4xf32>
      %194 = vector.multi_reduction <add>, %187, %cst_89 [1] : vector<4x32xf32> to vector<4xf32>
      %195 = vector.shape_cast %194 : vector<4xf32> to vector<4x1xf32>
      %cst_90 = arith.constant 3.200000e+01 : f32
      %196 = vector.broadcast %cst_90 : f32 to vector<4x1xf32>
      %197 = arith.divf %195, %196 : vector<4x1xf32>
      %198 = vector.broadcast %197 : vector<4x1xf32> to vector<4x32xf32>
      %199 = arith.subf %187, %198 : vector<4x32xf32>
      %200 = arith.mulf %199, %199 : vector<4x32xf32>
      %cst_91 = arith.constant dense<0.000000e+00> : vector<4xf32>
      %201 = vector.multi_reduction <add>, %200, %cst_91 [1] : vector<4x32xf32> to vector<4xf32>
      %202 = vector.shape_cast %201 : vector<4xf32> to vector<4x1xf32>
      %cst_92 = arith.constant 3.200000e+01 : f32
      %203 = vector.broadcast %cst_92 : f32 to vector<4x1xf32>
      %204 = arith.divf %202, %203 : vector<4x1xf32>
      %cst_93 = arith.constant 9.99999997E-7 : f32
      %205 = vector.broadcast %cst_93 : f32 to vector<4x1xf32>
      %206 = arith.addf %204, %205 : vector<4x1xf32>
      %207 = math.rsqrt %206 : vector<4x1xf32>
      %208 = vector.broadcast %207 : vector<4x1xf32> to vector<4x32xf32>
      %209 = arith.mulf %199, %208 : vector<4x32xf32>
      %210 = vector.broadcast %192 : vector<1x32xf32> to vector<4x32xf32>
      %211 = arith.mulf %209, %210 : vector<4x32xf32>
      %212 = vector.broadcast %193 : vector<1x32xf32> to vector<4x32xf32>
      %213 = arith.addf %211, %212 : vector<4x32xf32>
      %214 = arith.truncf %213 : vector<4x32xf32> to vector<4x32xbf16>
      %c0_94 = arith.constant 0 : index
      %c0_95 = arith.constant 0 : index
      %215 = vector.load %arg19[%c0_94, %c0_95] : memref<32x32xbf16, #tpu.memory_space<vmem>>, vector<32x32xbf16>
      %cst_96 = arith.constant dense<0.000000e+00> : vector<4x32xf32>
      %216 = tpu.matmul %214, %215, %cst_96 {dimension_numbers = #tpu.dot_dimension_numbers<[1], [0], [0], [1], [0, 0, 1, 1], [], []>} : vector<4x32xbf16>, vector<32x32xbf16>, vector<4x32xf32> -> vector<4x32xf32>
      %c0_97 = arith.constant 0 : index
      %c0_98 = arith.constant 0 : index
      %217 = vector.load %arg20[%c0_97, %c0_98] : memref<1x32xf32, #tpu.memory_space<vmem>>, vector<1x32xf32>
      %218 = vector.broadcast %217 : vector<1x32xf32> to vector<4x32xf32>
      %219 = arith.addf %216, %218 : vector<4x32xf32>
      %c0_99 = arith.constant 0 : index
      %c0_100 = arith.constant 0 : index
      %c0_101 = arith.constant 0 : index
      %220 = vector.load %arg21[%c0_99, %c0_100, %c0_101] : memref<1x4x32xf32, #tpu.memory_space<vmem>>, vector<1x4x32xf32>
      %221 = vector.shape_cast %220 : vector<1x4x32xf32> to vector<4x32xf32>
      %222 = vector.shape_cast %219 : vector<4x32xf32> to vector<1x4x32xf32>
      tpu.vector_store %arg21[%c0_99, %c0_100, %c0_101], %222 {strides = array<i32>} : memref<1x4x32xf32, #tpu.memory_space<vmem>>, vector<1x4x32xf32>,
    } else {
    }
    return
  }
  func.func @transform_0(%arg0: i32, %arg1: i32) -> (i32, i32, i32) {
    %c0_i32 = arith.constant 0 : i32
    %c0_i32_0 = arith.constant 0 : i32
    %c0_i32_1 = arith.constant 0 : i32
    return %arg0, %c0_i32, %c0_i32_0 : i32, i32, i32
  }
  func.func @transform_1(%arg0: i32, %arg1: i32) -> (i32, i32) {
    %c0_i32 = arith.constant 0 : i32
    %c0_i32_0 = arith.constant 0 : i32
    %c0_i32_1 = arith.constant 0 : i32
    return %c0_i32, %c0_i32_0 : i32, i32
  }
  func.func @transform_2(%arg0: i32, %arg1: i32) -> (i32, i32) {
    %c0_i32 = arith.constant 0 : i32
    %c0_i32_0 = arith.constant 0 : i32
    %c0_i32_1 = arith.constant 0 : i32
    return %c0_i32, %c0_i32_0 : i32, i32
  }
  func.func @transform_3(%arg0: i32, %arg1: i32) -> (i32, i32, i32) {
    %c0_i32 = arith.constant 0 : i32
    %c0_i32_0 = arith.constant 0 : i32
    %c0_i32_1 = arith.constant 0 : i32
    return %arg1, %c0_i32, %c0_i32_0 : i32, i32, i32
  }
  func.func @transform_4(%arg0: i32, %arg1: i32) -> (i32, i32, i32) {
    %c0_i32 = arith.constant 0 : i32
    %c0_i32_0 = arith.constant 0 : i32
    %c0_i32_1 = arith.constant 0 : i32
    return %arg1, %c0_i32, %c0_i32_0 : i32, i32, i32
  }
  func.func @transform_5(%arg0: i32, %arg1: i32) -> (i32, i32, i32) {
    %c0_i32 = arith.constant 0 : i32
    %c0_i32_0 = arith.constant 0 : i32
    %c0_i32_1 = arith.constant 0 : i32
    return %arg1, %c0_i32, %c0_i32_0 : i32, i32, i32
  }
  func.func @transform_6(%arg0: i32, %arg1: i32) -> (i32, i32, i32) {
    %c0_i32 = arith.constant 0 : i32
    %c0_i32_0 = arith.constant 0 : i32
    %c0_i32_1 = arith.constant 0 : i32
    return %arg1, %c0_i32, %c0_i32_0 : i32, i32, i32
  }
  func.func @transform_7(%arg0: i32, %arg1: i32) -> (i32, i32, i32) {
    %c0_i32 = arith.constant 0 : i32
    %c0_i32_0 = arith.constant 0 : i32
    %c0_i32_1 = arith.constant 0 : i32
    return %arg1, %c0_i32, %c0_i32_0 : i32, i32, i32
  }
  func.func @transform_8(%arg0: i32, %arg1: i32) -> (i32, i32, i32) {
    %c0_i32 = arith.constant 0 : i32
    %c0_i32_0 = arith.constant 0 : i32
    %c0_i32_1 = arith.constant 0 : i32
    return %arg1, %c0_i32, %c0_i32_0 : i32, i32, i32
  }
  func.func @transform_9(%arg0: i32, %arg1: i32) -> (i32, i32, i32) {
    %c0_i32 = arith.constant 0 : i32
    %c0_i32_0 = arith.constant 0 : i32
    %c0_i32_1 = arith.constant 0 : i32
    return %arg1, %c0_i32, %c0_i32_0 : i32, i32, i32
  }
  func.func @transform_10(%arg0: i32, %arg1: i32) -> (i32, i32, i32) {
    %c0_i32 = arith.constant 0 : i32
    %c0_i32_0 = arith.constant 0 : i32
    %c0_i32_1 = arith.constant 0 : i32
    return %arg1, %c0_i32, %c0_i32_0 : i32, i32, i32
  }
  func.func @transform_11(%arg0: i32, %arg1: i32) -> (i32, i32, i32) {
    %c0_i32 = arith.constant 0 : i32
    %c0_i32_0 = arith.constant 0 : i32
    %c0_i32_1 = arith.constant 0 : i32
    return %arg1, %c0_i32, %c0_i32_0 : i32, i32, i32
  }
  func.func @transform_12(%arg0: i32, %arg1: i32) -> (i32, i32, i32) {
    %c0_i32 = arith.constant 0 : i32
    %c0_i32_0 = arith.constant 0 : i32
    %c0_i32_1 = arith.constant 0 : i32
    return %arg1, %c0_i32, %c0_i32_0 : i32, i32, i32
  }
  func.func @transform_13(%arg0: i32, %arg1: i32) -> (i32, i32, i32) {
    %c0_i32 = arith.constant 0 : i32
    %c0_i32_0 = arith.constant 0 : i32
    %c0_i32_1 = arith.constant 0 : i32
    return %arg1, %c0_i32, %c0_i32_0 : i32, i32, i32
  }
  func.func @transform_14(%arg0: i32, %arg1: i32) -> (i32, i32, i32) {
    %c0_i32 = arith.constant 0 : i32
    %c0_i32_0 = arith.constant 0 : i32
    %c0_i32_1 = arith.constant 0 : i32
    return %arg1, %c0_i32, %c0_i32_0 : i32, i32, i32
  }
  func.func @transform_15(%arg0: i32, %arg1: i32) -> (i32, i32) {
    %c0_i32 = arith.constant 0 : i32
    %c0_i32_0 = arith.constant 0 : i32
    %c0_i32_1 = arith.constant 0 : i32
    return %c0_i32, %c0_i32_0 : i32, i32
  }
  func.func @transform_16(%arg0: i32, %arg1: i32) -> (i32, i32) {
    %c0_i32 = arith.constant 0 : i32
    %c0_i32_0 = arith.constant 0 : i32
    %c0_i32_1 = arith.constant 0 : i32
    return %c0_i32, %c0_i32_0 : i32, i32
  }
  func.func @transform_17(%arg0: i32, %arg1: i32) -> (i32, i32) {
    %c0_i32 = arith.constant 0 : i32
    %c0_i32_0 = arith.constant 0 : i32
    %c0_i32_1 = arith.constant 0 : i32
    return %c0_i32, %c0_i32_0 : i32, i32
  }
  func.func @transform_18(%arg0: i32, %arg1: i32) -> (i32, i32) {
    %c0_i32 = arith.constant 0 : i32
    %c0_i32_0 = arith.constant 0 : i32
    %c0_i32_1 = arith.constant 0 : i32
    return %c0_i32, %c0_i32_0 : i32, i32
  }
  func.func @transform_19(%arg0: i32, %arg1: i32) -> (i32, i32, i32) {
    %c0_i32 = arith.constant 0 : i32
    %c0_i32_0 = arith.constant 0 : i32
    %c0_i32_1 = arith.constant 0 : i32
    return %arg0, %c0_i32, %c0_i32_0 : i32, i32, i32
  }
}

module attributes {stable_mosaic.version = 11 : i64} {
  func.func @_gemma_stack_kernel(%arg0: i32, %arg1: i32, %arg2: memref<1x8x32xf32, #tpu.memory_space<vmem>>, %arg3: memref<1x8x16xf32, #tpu.memory_space<vmem>>, %arg4: memref<1x8x16xf32, #tpu.memory_space<vmem>>, %arg5: memref<1x1x32xf32, #tpu.memory_space<vmem>>, %arg6: memref<1x32x128xbf16, #tpu.memory_space<vmem>>, %arg7: memref<1x64x32xbf16, #tpu.memory_space<vmem>>, %arg8: memref<1x1x32xf32, #tpu.memory_space<vmem>>, %arg9: memref<1x32x128xbf16, #tpu.memory_space<vmem>>, %arg10: memref<1x64x32xbf16, #tpu.memory_space<vmem>>, %arg11: memref<1x32xf32, #tpu.memory_space<vmem>>, %arg12: memref<32x128xbf16, #tpu.memory_space<vmem>>, %arg13: memref<1x8x128xf32, #tpu.memory_space<vmem>>, %arg14: memref<8x32xf32, #tpu.memory_space<vmem>>, %arg15: memref<8x64xf32, #tpu.memory_space<vmem>>) attributes {dimension_semantics = [#tpu.dimension_semantics<parallel>, #tpu.dimension_semantics<arbitrary>], iteration_bounds = array<i64: 2, 2>, scalar_prefetch = 0 : i64, scratch_operands = 2 : i64, tpu.core_type = #tpu.core_type<tc>, window_params = [{transform_indices = @transform_0, window_bounds = array<i64: 1, 8, 32>}, {transform_indices = @transform_1, window_bounds = array<i64: 1, 8, 16>}, {transform_indices = @transform_2, window_bounds = array<i64: 1, 8, 16>}, {transform_indices = @transform_3, window_bounds = array<i64: 1, 1, 32>}, {transform_indices = @transform_4, window_bounds = array<i64: 1, 32, 128>}, {transform_indices = @transform_5, window_bounds = array<i64: 1, 64, 32>}, {transform_indices = @transform_6, window_bounds = array<i64: 1, 1, 32>}, {transform_indices = @transform_7, window_bounds = array<i64: 1, 32, 128>}, {transform_indices = @transform_8, window_bounds = array<i64: 1, 64, 32>}, {pipeline_mode = #tpu.pipeline_mode<synchronous>, transform_indices = @transform_9, window_bounds = array<i64: 1, 32>}, {pipeline_mode = #tpu.pipeline_mode<synchronous>, transform_indices = @transform_10, window_bounds = array<i64: 32, 128>}, {transform_indices = @transform_11, window_bounds = array<i64: 1, 8, 128>}]} {
    %c0_i32 = arith.constant 0 : i32
    %0 = arith.cmpi eq, %arg1, %c0_i32 : i32
    %1 = arith.extui %0 : i1 to i32
    %c0_i32_0 = arith.constant 0 : i32
    %2 = arith.cmpi ne, %1, %c0_i32_0 : i32
    scf.if %2 {
      %c0_77 = arith.constant 0 : index
      %c0_78 = arith.constant 0 : index
      %c0_79 = arith.constant 0 : index
      %207 = vector.load %arg2[%c0_77, %c0_78, %c0_79] : memref<1x8x32xf32, #tpu.memory_space<vmem>>, vector<1x8x32xf32>
      %208 = vector.shape_cast %207 : vector<1x8x32xf32> to vector<8x32xf32>
      %cst_80 = arith.constant 5.65685415 : f32
      %209 = vector.broadcast %cst_80 : f32 to vector<8x32xf32>
      %210 = arith.mulf %208, %209 : vector<8x32xf32>
      %c0_81 = arith.constant 0 : index
      %c0_82 = arith.constant 0 : index
      %211 = vector.load %arg14[%c0_81, %c0_82] : memref<8x32xf32, #tpu.memory_space<vmem>>, vector<8x32xf32>
      tpu.vector_store %arg14[%c0_81, %c0_82], %210 {strides = array<i32>} : memref<8x32xf32, #tpu.memory_space<vmem>>, vector<8x32xf32>,
    } else {
    }
    %c0 = arith.constant 0 : index
    %c0_1 = arith.constant 0 : index
    %3 = vector.load %arg14[%c0, %c0_1] : memref<8x32xf32, #tpu.memory_space<vmem>>, vector<8x32xf32>
    %c0_2 = arith.constant 0 : index
    %c0_3 = arith.constant 0 : index
    %c0_4 = arith.constant 0 : index
    %4 = vector.load %arg5[%c0_2, %c0_3, %c0_4] : memref<1x1x32xf32, #tpu.memory_space<vmem>>, vector<1x1x32xf32>
    %5 = vector.shape_cast %4 : vector<1x1x32xf32> to vector<1x32xf32>
    %6 = arith.mulf %3, %3 : vector<8x32xf32>
    %cst = arith.constant dense<0.000000e+00> : vector<8xf32>
    %7 = vector.multi_reduction <add>, %6, %cst [1] : vector<8x32xf32> to vector<8xf32>
    %8 = vector.shape_cast %7 : vector<8xf32> to vector<8x1xf32>
    %cst_5 = arith.constant 3.200000e+01 : f32
    %9 = vector.broadcast %cst_5 : f32 to vector<8x1xf32>
    %10 = arith.divf %8, %9 : vector<8x1xf32>
    %cst_6 = arith.constant 9.99999997E-7 : f32
    %11 = vector.broadcast %cst_6 : f32 to vector<8x1xf32>
    %12 = arith.addf %10, %11 : vector<8x1xf32>
    %13 = math.rsqrt %12 : vector<8x1xf32>
    %14 = vector.broadcast %13 : vector<8x1xf32> to vector<8x32xf32>
    %15 = arith.mulf %3, %14 : vector<8x32xf32>
    %cst_7 = arith.constant 1.000000e+00 : f32
    %16 = vector.broadcast %cst_7 : f32 to vector<1x32xf32>
    %17 = arith.addf %16, %5 : vector<1x32xf32>
    %18 = vector.broadcast %17 : vector<1x32xf32> to vector<8x32xf32>
    %19 = arith.mulf %15, %18 : vector<8x32xf32>
    %20 = arith.truncf %19 : vector<8x32xf32> to vector<8x32xbf16>
    %c0_8 = arith.constant 0 : index
    %c0_9 = arith.constant 0 : index
    %c0_10 = arith.constant 0 : index
    %21 = vector.load %arg6[%c0_8, %c0_9, %c0_10] : memref<1x32x128xbf16, #tpu.memory_space<vmem>>, vector<1x32x128xbf16>
    %22 = vector.shape_cast %21 : vector<1x32x128xbf16> to vector<32x128xbf16>
    %cst_11 = arith.constant dense<0.000000e+00> : vector<8x128xf32>
    %23 = tpu.matmul %20, %22, %cst_11 {dimension_numbers = #tpu.dot_dimension_numbers<[1], [0], [0], [1], [0, 0, 1, 1], [], []>} : vector<8x32xbf16>, vector<32x128xbf16>, vector<8x128xf32> -> vector<8x128xf32>
    %c0_12 = arith.constant 0 : index
    %c0_13 = arith.constant 0 : index
    %c0_14 = arith.constant 0 : index
    %24 = vector.load %arg3[%c0_12, %c0_13, %c0_14] : memref<1x8x16xf32, #tpu.memory_space<vmem>>, vector<1x8x16xf32>
    %25 = vector.shape_cast %24 : vector<1x8x16xf32> to vector<8x16xf32>
    %c0_15 = arith.constant 0 : index
    %c0_16 = arith.constant 0 : index
    %c0_17 = arith.constant 0 : index
    %26 = vector.load %arg4[%c0_15, %c0_16, %c0_17] : memref<1x8x16xf32, #tpu.memory_space<vmem>>, vector<1x8x16xf32>
    %27 = vector.shape_cast %26 : vector<1x8x16xf32> to vector<8x16xf32>
    %28 = vector.extract_strided_slice %23 {offsets = [0, 64], sizes = [8, 16], strides = [1, 1]} : vector<8x128xf32> to vector<8x16xf32>
    %29 = vector.extract_strided_slice %28 {offsets = [0, 8], sizes = [8, 8], strides = [1, 1]} : vector<8x16xf32> to vector<8x8xf32>
    %cst_18 = arith.constant 0.000000e+00 : f32
    %30 = vector.broadcast %cst_18 : f32 to vector<8x8xf32>
    %31 = arith.subf %30, %29 : vector<8x8xf32>
    %32 = vector.extract_strided_slice %28 {offsets = [0, 0], sizes = [8, 8], strides = [1, 1]} : vector<8x16xf32> to vector<8x8xf32>
    %33 = tpu.concatenate %31, %32 in 1 : vector<8x8xf32>, vector<8x8xf32> -> vector<8x16xf32>
    %34 = arith.mulf %28, %25 : vector<8x16xf32>
    %35 = arith.mulf %33, %27 : vector<8x16xf32>
    %36 = arith.addf %34, %35 : vector<8x16xf32>
    %37 = arith.truncf %36 : vector<8x16xf32> to vector<8x16xbf16>
    %38 = vector.extract_strided_slice %23 {offsets = [0, 96], sizes = [8, 16], strides = [1, 1]} : vector<8x128xf32> to vector<8x16xf32>
    %39 = arith.truncf %38 : vector<8x16xf32> to vector<8x16xbf16>
    %40 = vector.extract_strided_slice %23 {offsets = [0, 80], sizes = [8, 16], strides = [1, 1]} : vector<8x128xf32> to vector<8x16xf32>
    %41 = vector.extract_strided_slice %40 {offsets = [0, 8], sizes = [8, 8], strides = [1, 1]} : vector<8x16xf32> to vector<8x8xf32>
    %cst_19 = arith.constant 0.000000e+00 : f32
    %42 = vector.broadcast %cst_19 : f32 to vector<8x8xf32>
    %43 = arith.subf %42, %41 : vector<8x8xf32>
    %44 = vector.extract_strided_slice %40 {offsets = [0, 0], sizes = [8, 8], strides = [1, 1]} : vector<8x16xf32> to vector<8x8xf32>
    %45 = tpu.concatenate %43, %44 in 1 : vector<8x8xf32>, vector<8x8xf32> -> vector<8x16xf32>
    %46 = arith.mulf %40, %25 : vector<8x16xf32>
    %47 = arith.mulf %45, %27 : vector<8x16xf32>
    %48 = arith.addf %46, %47 : vector<8x16xf32>
    %49 = arith.truncf %48 : vector<8x16xf32> to vector<8x16xbf16>
    %50 = vector.extract_strided_slice %23 {offsets = [0, 112], sizes = [8, 16], strides = [1, 1]} : vector<8x128xf32> to vector<8x16xf32>
    %51 = arith.truncf %50 : vector<8x16xf32> to vector<8x16xbf16>
    %52 = vector.extract_strided_slice %23 {offsets = [0, 0], sizes = [8, 16], strides = [1, 1]} : vector<8x128xf32> to vector<8x16xf32>
    %53 = vector.extract_strided_slice %52 {offsets = [0, 8], sizes = [8, 8], strides = [1, 1]} : vector<8x16xf32> to vector<8x8xf32>
    %cst_20 = arith.constant 0.000000e+00 : f32
    %54 = vector.broadcast %cst_20 : f32 to vector<8x8xf32>
    %55 = arith.subf %54, %53 : vector<8x8xf32>
    %56 = vector.extract_strided_slice %52 {offsets = [0, 0], sizes = [8, 8], strides = [1, 1]} : vector<8x16xf32> to vector<8x8xf32>
    %57 = tpu.concatenate %55, %56 in 1 : vector<8x8xf32>, vector<8x8xf32> -> vector<8x16xf32>
    %58 = arith.mulf %52, %25 : vector<8x16xf32>
    %59 = arith.mulf %57, %27 : vector<8x16xf32>
    %60 = arith.addf %58, %59 : vector<8x16xf32>
    %cst_21 = arith.constant 2.500000e-01 : f32
    %61 = vector.broadcast %cst_21 : f32 to vector<8x16xf32>
    %62 = arith.mulf %60, %61 : vector<8x16xf32>
    %63 = arith.truncf %62 : vector<8x16xf32> to vector<8x16xbf16>
    %cst_22 = arith.constant dense<0.000000e+00> : vector<8x8xf32>
    %64 = tpu.matmul %63, %37, %cst_22 {dimension_numbers = #tpu.dot_dimension_numbers<[1], [1], [0], [0], [0, 0, 1, 0], [], []>} : vector<8x16xbf16>, vector<8x16xbf16>, vector<8x8xf32> -> vector<8x8xf32>
    %cst_23 = arith.constant dense<0xFF800000> : vector<8xf32>
    %65 = vector.multi_reduction <maximumf>, %64, %cst_23 [1] : vector<8x8xf32> to vector<8xf32>
    %66 = vector.shape_cast %65 : vector<8xf32> to vector<8x1xf32>
    %67 = vector.broadcast %66 : vector<8x1xf32> to vector<8x8xf32>
    %68 = arith.subf %64, %67 : vector<8x8xf32>
    %69 = math.exp %68 : vector<8x8xf32>
    %cst_24 = arith.constant dense<0.000000e+00> : vector<8xf32>
    %70 = vector.multi_reduction <add>, %69, %cst_24 [1] : vector<8x8xf32> to vector<8xf32>
    %71 = vector.shape_cast %70 : vector<8xf32> to vector<8x1xf32>
    %72 = tpu.reciprocal %71 {approx = true} : vector<8x1xf32> -> vector<8x1xf32>
    %73 = vector.broadcast %72 : vector<8x1xf32> to vector<8x8xf32>
    %74 = arith.mulf %69, %73 : vector<8x8xf32>
    %75 = arith.truncf %74 : vector<8x8xf32> to vector<8x8xbf16>
    %cst_25 = arith.constant dense<0.000000e+00> : vector<8x16xf32>
    %76 = tpu.matmul %75, %39, %cst_25 {dimension_numbers = #tpu.dot_dimension_numbers<[1], [0], [0], [1], [0, 0, 1, 1], [], []>} : vector<8x8xbf16>, vector<8x16xbf16>, vector<8x16xf32> -> vector<8x16xf32>
    %c0_26 = arith.constant 0 : index
    %c0_27 = arith.constant 0 : index
    %77 = vector.load %arg15[%c0_26, %c0_27] : memref<8x64xf32, #tpu.memory_space<vmem>>, vector<8x16xf32>
    tpu.vector_store %arg15[%c0_26, %c0_27], %76 {strides = array<i32>} : memref<8x64xf32, #tpu.memory_space<vmem>>, vector<8x16xf32>,
    %78 = vector.extract_strided_slice %23 {offsets = [0, 16], sizes = [8, 16], strides = [1, 1]} : vector<8x128xf32> to vector<8x16xf32>
    %79 = vector.extract_strided_slice %78 {offsets = [0, 8], sizes = [8, 8], strides = [1, 1]} : vector<8x16xf32> to vector<8x8xf32>
    %cst_28 = arith.constant 0.000000e+00 : f32
    %80 = vector.broadcast %cst_28 : f32 to vector<8x8xf32>
    %81 = arith.subf %80, %79 : vector<8x8xf32>
    %82 = vector.extract_strided_slice %78 {offsets = [0, 0], sizes = [8, 8], strides = [1, 1]} : vector<8x16xf32> to vector<8x8xf32>
    %83 = tpu.concatenate %81, %82 in 1 : vector<8x8xf32>, vector<8x8xf32> -> vector<8x16xf32>
    %84 = arith.mulf %78, %25 : vector<8x16xf32>
    %85 = arith.mulf %83, %27 : vector<8x16xf32>
    %86 = arith.addf %84, %85 : vector<8x16xf32>
    %cst_29 = arith.constant 2.500000e-01 : f32
    %87 = vector.broadcast %cst_29 : f32 to vector<8x16xf32>
    %88 = arith.mulf %86, %87 : vector<8x16xf32>
    %89 = arith.truncf %88 : vector<8x16xf32> to vector<8x16xbf16>
    %cst_30 = arith.constant dense<0.000000e+00> : vector<8x8xf32>
    %90 = tpu.matmul %89, %37, %cst_30 {dimension_numbers = #tpu.dot_dimension_numbers<[1], [1], [0], [0], [0, 0, 1, 0], [], []>} : vector<8x16xbf16>, vector<8x16xbf16>, vector<8x8xf32> -> vector<8x8xf32>
    %cst_31 = arith.constant dense<0xFF800000> : vector<8xf32>
    %91 = vector.multi_reduction <maximumf>, %90, %cst_31 [1] : vector<8x8xf32> to vector<8xf32>
    %92 = vector.shape_cast %91 : vector<8xf32> to vector<8x1xf32>
    %93 = vector.broadcast %92 : vector<8x1xf32> to vector<8x8xf32>
    %94 = arith.subf %90, %93 : vector<8x8xf32>
    %95 = math.exp %94 : vector<8x8xf32>
    %cst_32 = arith.constant dense<0.000000e+00> : vector<8xf32>
    %96 = vector.multi_reduction <add>, %95, %cst_32 [1] : vector<8x8xf32> to vector<8xf32>
    %97 = vector.shape_cast %96 : vector<8xf32> to vector<8x1xf32>
    %98 = tpu.reciprocal %97 {approx = true} : vector<8x1xf32> -> vector<8x1xf32>
    %99 = vector.broadcast %98 : vector<8x1xf32> to vector<8x8xf32>
    %100 = arith.mulf %95, %99 : vector<8x8xf32>
    %101 = arith.truncf %100 : vector<8x8xf32> to vector<8x8xbf16>
    %cst_33 = arith.constant dense<0.000000e+00> : vector<8x16xf32>
    %102 = tpu.matmul %101, %39, %cst_33 {dimension_numbers = #tpu.dot_dimension_numbers<[1], [0], [0], [1], [0, 0, 1, 1], [], []>} : vector<8x8xbf16>, vector<8x16xbf16>, vector<8x16xf32> -> vector<8x16xf32>
    %c0_34 = arith.constant 0 : index
    %c16 = arith.constant 16 : index
    %103 = vector.load %arg15[%c0_34, %c16] : memref<8x64xf32, #tpu.memory_space<vmem>>, vector<8x16xf32>
    tpu.vector_store %arg15[%c0_34, %c16], %102 {strides = array<i32>} : memref<8x64xf32, #tpu.memory_space<vmem>>, vector<8x16xf32>,
    %104 = vector.extract_strided_slice %23 {offsets = [0, 32], sizes = [8, 16], strides = [1, 1]} : vector<8x128xf32> to vector<8x16xf32>
    %105 = vector.extract_strided_slice %104 {offsets = [0, 8], sizes = [8, 8], strides = [1, 1]} : vector<8x16xf32> to vector<8x8xf32>
    %cst_35 = arith.constant 0.000000e+00 : f32
    %106 = vector.broadcast %cst_35 : f32 to vector<8x8xf32>
    %107 = arith.subf %106, %105 : vector<8x8xf32>
    %108 = vector.extract_strided_slice %104 {offsets = [0, 0], sizes = [8, 8], strides = [1, 1]} : vector<8x16xf32> to vector<8x8xf32>
    %109 = tpu.concatenate %107, %108 in 1 : vector<8x8xf32>, vector<8x8xf32> -> vector<8x16xf32>
    %110 = arith.mulf %104, %25 : vector<8x16xf32>
    %111 = arith.mulf %109, %27 : vector<8x16xf32>
    %112 = arith.addf %110, %111 : vector<8x16xf32>
    %cst_36 = arith.constant 2.500000e-01 : f32
    %113 = vector.broadcast %cst_36 : f32 to vector<8x16xf32>
    %114 = arith.mulf %112, %113 : vector<8x16xf32>
    %115 = arith.truncf %114 : vector<8x16xf32> to vector<8x16xbf16>
    %cst_37 = arith.constant dense<0.000000e+00> : vector<8x8xf32>
    %116 = tpu.matmul %115, %49, %cst_37 {dimension_numbers = #tpu.dot_dimension_numbers<[1], [1], [0], [0], [0, 0, 1, 0], [], []>} : vector<8x16xbf16>, vector<8x16xbf16>, vector<8x8xf32> -> vector<8x8xf32>
    %cst_38 = arith.constant dense<0xFF800000> : vector<8xf32>
    %117 = vector.multi_reduction <maximumf>, %116, %cst_38 [1] : vector<8x8xf32> to vector<8xf32>
    %118 = vector.shape_cast %117 : vector<8xf32> to vector<8x1xf32>
    %119 = vector.broadcast %118 : vector<8x1xf32> to vector<8x8xf32>
    %120 = arith.subf %116, %119 : vector<8x8xf32>
    %121 = math.exp %120 : vector<8x8xf32>
    %cst_39 = arith.constant dense<0.000000e+00> : vector<8xf32>
    %122 = vector.multi_reduction <add>, %121, %cst_39 [1] : vector<8x8xf32> to vector<8xf32>
    %123 = vector.shape_cast %122 : vector<8xf32> to vector<8x1xf32>
    %124 = tpu.reciprocal %123 {approx = true} : vector<8x1xf32> -> vector<8x1xf32>
    %125 = vector.broadcast %124 : vector<8x1xf32> to vector<8x8xf32>
    %126 = arith.mulf %121, %125 : vector<8x8xf32>
    %127 = arith.truncf %126 : vector<8x8xf32> to vector<8x8xbf16>
    %cst_40 = arith.constant dense<0.000000e+00> : vector<8x16xf32>
    %128 = tpu.matmul %127, %51, %cst_40 {dimension_numbers = #tpu.dot_dimension_numbers<[1], [0], [0], [1], [0, 0, 1, 1], [], []>} : vector<8x8xbf16>, vector<8x16xbf16>, vector<8x16xf32> -> vector<8x16xf32>
    %c0_41 = arith.constant 0 : index
    %c32 = arith.constant 32 : index
    %129 = vector.load %arg15[%c0_41, %c32] : memref<8x64xf32, #tpu.memory_space<vmem>>, vector<8x16xf32>
    tpu.vector_store %arg15[%c0_41, %c32], %128 {strides = array<i32>} : memref<8x64xf32, #tpu.memory_space<vmem>>, vector<8x16xf32>,
    %130 = vector.extract_strided_slice %23 {offsets = [0, 48], sizes = [8, 16], strides = [1, 1]} : vector<8x128xf32> to vector<8x16xf32>
    %131 = vector.extract_strided_slice %130 {offsets = [0, 8], sizes = [8, 8], strides = [1, 1]} : vector<8x16xf32> to vector<8x8xf32>
    %cst_42 = arith.constant 0.000000e+00 : f32
    %132 = vector.broadcast %cst_42 : f32 to vector<8x8xf32>
    %133 = arith.subf %132, %131 : vector<8x8xf32>
    %134 = vector.extract_strided_slice %130 {offsets = [0, 0], sizes = [8, 8], strides = [1, 1]} : vector<8x16xf32> to vector<8x8xf32>
    %135 = tpu.concatenate %133, %134 in 1 : vector<8x8xf32>, vector<8x8xf32> -> vector<8x16xf32>
    %136 = arith.mulf %130, %25 : vector<8x16xf32>
    %137 = arith.mulf %135, %27 : vector<8x16xf32>
    %138 = arith.addf %136, %137 : vector<8x16xf32>
    %cst_43 = arith.constant 2.500000e-01 : f32
    %139 = vector.broadcast %cst_43 : f32 to vector<8x16xf32>
    %140 = arith.mulf %138, %139 : vector<8x16xf32>
    %141 = arith.truncf %140 : vector<8x16xf32> to vector<8x16xbf16>
    %cst_44 = arith.constant dense<0.000000e+00> : vector<8x8xf32>
    %142 = tpu.matmul %141, %49, %cst_44 {dimension_numbers = #tpu.dot_dimension_numbers<[1], [1], [0], [0], [0, 0, 1, 0], [], []>} : vector<8x16xbf16>, vector<8x16xbf16>, vector<8x8xf32> -> vector<8x8xf32>
    %cst_45 = arith.constant dense<0xFF800000> : vector<8xf32>
    %143 = vector.multi_reduction <maximumf>, %142, %cst_45 [1] : vector<8x8xf32> to vector<8xf32>
    %144 = vector.shape_cast %143 : vector<8xf32> to vector<8x1xf32>
    %145 = vector.broadcast %144 : vector<8x1xf32> to vector<8x8xf32>
    %146 = arith.subf %142, %145 : vector<8x8xf32>
    %147 = math.exp %146 : vector<8x8xf32>
    %cst_46 = arith.constant dense<0.000000e+00> : vector<8xf32>
    %148 = vector.multi_reduction <add>, %147, %cst_46 [1] : vector<8x8xf32> to vector<8xf32>
    %149 = vector.shape_cast %148 : vector<8xf32> to vector<8x1xf32>
    %150 = tpu.reciprocal %149 {approx = true} : vector<8x1xf32> -> vector<8x1xf32>
    %151 = vector.broadcast %150 : vector<8x1xf32> to vector<8x8xf32>
    %152 = arith.mulf %147, %151 : vector<8x8xf32>
    %153 = arith.truncf %152 : vector<8x8xf32> to vector<8x8xbf16>
    %cst_47 = arith.constant dense<0.000000e+00> : vector<8x16xf32>
    %154 = tpu.matmul %153, %51, %cst_47 {dimension_numbers = #tpu.dot_dimension_numbers<[1], [0], [0], [1], [0, 0, 1, 1], [], []>} : vector<8x8xbf16>, vector<8x16xbf16>, vector<8x16xf32> -> vector<8x16xf32>
    %c0_48 = arith.constant 0 : index
    %c48 = arith.constant 48 : index
    %155 = vector.load %arg15[%c0_48, %c48] : memref<8x64xf32, #tpu.memory_space<vmem>>, vector<8x16xf32>
    tpu.vector_store %arg15[%c0_48, %c48], %154 {strides = array<i32>} : memref<8x64xf32, #tpu.memory_space<vmem>>, vector<8x16xf32>,
    %c0_49 = arith.constant 0 : index
    %c0_50 = arith.constant 0 : index
    %156 = vector.load %arg15[%c0_49, %c0_50] : memref<8x64xf32, #tpu.memory_space<vmem>>, vector<8x64xf32>
    %157 = arith.truncf %156 : vector<8x64xf32> to vector<8x64xbf16>
    %c0_51 = arith.constant 0 : index
    %c0_52 = arith.constant 0 : index
    %c0_53 = arith.constant 0 : index
    %158 = vector.load %arg7[%c0_51, %c0_52, %c0_53] : memref<1x64x32xbf16, #tpu.memory_space<vmem>>, vector<1x64x32xbf16>
    %159 = vector.shape_cast %158 : vector<1x64x32xbf16> to vector<64x32xbf16>
    %cst_54 = arith.constant dense<0.000000e+00> : vector<8x32xf32>
    %160 = tpu.matmul %157, %159, %cst_54 {dimension_numbers = #tpu.dot_dimension_numbers<[1], [0], [0], [1], [0, 0, 1, 1], [], []>} : vector<8x64xbf16>, vector<64x32xbf16>, vector<8x32xf32> -> vector<8x32xf32>
    %161 = arith.addf %3, %160 : vector<8x32xf32>
    %c0_55 = arith.constant 0 : index
    %c0_56 = arith.constant 0 : index
    %c0_57 = arith.constant 0 : index
    %162 = vector.load %arg8[%c0_55, %c0_56, %c0_57] : memref<1x1x32xf32, #tpu.memory_space<vmem>>, vector<1x1x32xf32>
    %163 = vector.shape_cast %162 : vector<1x1x32xf32> to vector<1x32xf32>
    %164 = arith.mulf %161, %161 : vector<8x32xf32>
    %cst_58 = arith.constant dense<0.000000e+00> : vector<8xf32>
    %165 = vector.multi_reduction <add>, %164, %cst_58 [1] : vector<8x32xf32> to vector<8xf32>
    %166 = vector.shape_cast %165 : vector<8xf32> to vector<8x1xf32>
    %cst_59 = arith.constant 3.200000e+01 : f32
    %167 = vector.broadcast %cst_59 : f32 to vector<8x1xf32>
    %168 = arith.divf %166, %167 : vector<8x1xf32>
    %cst_60 = arith.constant 9.99999997E-7 : f32
    %169 = vector.broadcast %cst_60 : f32 to vector<8x1xf32>
    %170 = arith.addf %168, %169 : vector<8x1xf32>
    %171 = math.rsqrt %170 : vector<8x1xf32>
    %172 = vector.broadcast %171 : vector<8x1xf32> to vector<8x32xf32>
    %173 = arith.mulf %161, %172 : vector<8x32xf32>
    %cst_61 = arith.constant 1.000000e+00 : f32
    %174 = vector.broadcast %cst_61 : f32 to vector<1x32xf32>
    %175 = arith.addf %174, %163 : vector<1x32xf32>
    %176 = vector.broadcast %175 : vector<1x32xf32> to vector<8x32xf32>
    %177 = arith.mulf %173, %176 : vector<8x32xf32>
    %178 = arith.truncf %177 : vector<8x32xf32> to vector<8x32xbf16>
    %c0_62 = arith.constant 0 : index
    %c0_63 = arith.constant 0 : index
    %c0_64 = arith.constant 0 : index
    %179 = vector.load %arg9[%c0_62, %c0_63, %c0_64] : memref<1x32x128xbf16, #tpu.memory_space<vmem>>, vector<1x32x128xbf16>
    %180 = vector.shape_cast %179 : vector<1x32x128xbf16> to vector<32x128xbf16>
    %cst_65 = arith.constant dense<0.000000e+00> : vector<8x128xf32>
    %181 = tpu.matmul %178, %180, %cst_65 {dimension_numbers = #tpu.dot_dimension_numbers<[1], [0], [0], [1], [0, 0, 1, 1], [], []>} : vector<8x32xbf16>, vector<32x128xbf16>, vector<8x128xf32> -> vector<8x128xf32>
    %182 = vector.extract_strided_slice %181 {offsets = [0, 0], sizes = [8, 64], strides = [1, 1]} : vector<8x128xf32> to vector<8x64xf32>
    %183 = arith.mulf %182, %182 : vector<8x64xf32>
    %184 = arith.mulf %182, %183 : vector<8x64xf32>
    %cst_66 = arith.constant 4.471500e-02 : f32
    %185 = vector.broadcast %cst_66 : f32 to vector<8x64xf32>
    %186 = arith.mulf %185, %184 : vector<8x64xf32>
    %187 = arith.addf %182, %186 : vector<8x64xf32>
    %cst_67 = arith.constant 0.797884583 : f32
    %188 = vector.broadcast %cst_67 : f32 to vector<8x64xf32>
    %189 = arith.mulf %188, %187 : vector<8x64xf32>
    %190 = math.tanh %189 : vector<8x64xf32>
    %cst_68 = arith.constant 1.000000e+00 : f32
    %191 = vector.broadcast %cst_68 : f32 to vector<8x64xf32>
    %192 = arith.addf %191, %190 : vector<8x64xf32>
    %cst_69 = arith.constant 5.000000e-01 : f32
    %193 = vector.broadcast %cst_69 : f32 to vector<8x64xf32>
    %194 = arith.mulf %193, %192 : vector<8x64xf32>
    %195 = arith.mulf %182, %194 : vector<8x64xf32>
    %196 = vector.extract_strided_slice %181 {offsets = [0, 64], sizes = [8, 64], strides = [1, 1]} : vector<8x128xf32> to vector<8x64xf32>
    %197 = arith.mulf %195, %196 : vector<8x64xf32>
    %198 = arith.truncf %197 : vector<8x64xf32> to vector<8x64xbf16>
    %c0_70 = arith.constant 0 : index
    %c0_71 = arith.constant 0 : index
    %c0_72 = arith.constant 0 : index
    %199 = vector.load %arg10[%c0_70, %c0_71, %c0_72] : memref<1x64x32xbf16, #tpu.memory_space<vmem>>, vector<1x64x32xbf16>
    %200 = vector.shape_cast %199 : vector<1x64x32xbf16> to vector<64x32xbf16>
    %cst_73 = arith.constant dense<0.000000e+00> : vector<8x32xf32>
    %201 = tpu.matmul %198, %200, %cst_73 {dimension_numbers = #tpu.dot_dimension_numbers<[1], [0], [0], [1], [0, 0, 1, 1], [], []>} : vector<8x64xbf16>, vector<64x32xbf16>, vector<8x32xf32> -> vector<8x32xf32>
    %202 = arith.addf %161, %201 : vector<8x32xf32>
    %c0_74 = arith.constant 0 : index
    %c0_75 = arith.constant 0 : index
    %203 = vector.load %arg14[%c0_74, %c0_75] : memref<8x32xf32, #tpu.memory_space<vmem>>, vector<8x32xf32>
    tpu.vector_store %arg14[%c0_74, %c0_75], %202 {strides = array<i32>} : memref<8x32xf32, #tpu.memory_space<vmem>>, vector<8x32xf32>,
    %c1_i32 = arith.constant 1 : i32
    %204 = arith.cmpi eq, %arg1, %c1_i32 : i32
    %205 = arith.extui %204 : i1 to i32
    %c0_i32_76 = arith.constant 0 : i32
    %206 = arith.cmpi ne, %205, %c0_i32_76 : i32
    scf.if %206 {
      %c0_77 = arith.constant 0 : index
      %c0_78 = arith.constant 0 : index
      %207 = vector.load %arg11[%c0_77, %c0_78] : memref<1x32xf32, #tpu.memory_space<vmem>>, vector<1x32xf32>
      %208 = arith.mulf %202, %202 : vector<8x32xf32>
      %cst_79 = arith.constant dense<0.000000e+00> : vector<8xf32>
      %209 = vector.multi_reduction <add>, %208, %cst_79 [1] : vector<8x32xf32> to vector<8xf32>
      %210 = vector.shape_cast %209 : vector<8xf32> to vector<8x1xf32>
      %cst_80 = arith.constant 3.200000e+01 : f32
      %211 = vector.broadcast %cst_80 : f32 to vector<8x1xf32>
      %212 = arith.divf %210, %211 : vector<8x1xf32>
      %cst_81 = arith.constant 9.99999997E-7 : f32
      %213 = vector.broadcast %cst_81 : f32 to vector<8x1xf32>
      %214 = arith.addf %212, %213 : vector<8x1xf32>
      %215 = math.rsqrt %214 : vector<8x1xf32>
      %216 = vector.broadcast %215 : vector<8x1xf32> to vector<8x32xf32>
      %217 = arith.mulf %202, %216 : vector<8x32xf32>
      %cst_82 = arith.constant 1.000000e+00 : f32
      %218 = vector.broadcast %cst_82 : f32 to vector<1x32xf32>
      %219 = arith.addf %218, %207 : vector<1x32xf32>
      %220 = vector.broadcast %219 : vector<1x32xf32> to vector<8x32xf32>
      %221 = arith.mulf %217, %220 : vector<8x32xf32>
      %222 = arith.truncf %221 : vector<8x32xf32> to vector<8x32xbf16>
      %c0_83 = arith.constant 0 : index
      %c0_84 = arith.constant 0 : index
      %223 = vector.load %arg12[%c0_83, %c0_84] : memref<32x128xbf16, #tpu.memory_space<vmem>>, vector<32x128xbf16>
      %cst_85 = arith.constant dense<0.000000e+00> : vector<8x128xf32>
      %224 = tpu.matmul %222, %223, %cst_85 {dimension_numbers = #tpu.dot_dimension_numbers<[1], [0], [0], [1], [0, 0, 1, 1], [], []>} : vector<8x32xbf16>, vector<32x128xbf16>, vector<8x128xf32> -> vector<8x128xf32>
      %c0_86 = arith.constant 0 : index
      %c0_87 = arith.constant 0 : index
      %c0_88 = arith.constant 0 : index
      %225 = vector.load %arg13[%c0_86, %c0_87, %c0_88] : memref<1x8x128xf32, #tpu.memory_space<vmem>>, vector<1x8x128xf32>
      %226 = vector.shape_cast %225 : vector<1x8x128xf32> to vector<8x128xf32>
      %227 = vector.shape_cast %224 : vector<8x128xf32> to vector<1x8x128xf32>
      tpu.vector_store %arg13[%c0_86, %c0_87, %c0_88], %227 {strides = array<i32>} : memref<1x8x128xf32, #tpu.memory_space<vmem>>, vector<1x8x128xf32>,
    } else {
    }
    return
  }
  func.func @transform_0(%arg0: i32, %arg1: i32) -> (i32, i32, i32) {
    %c0_i32 = arith.constant 0 : i32
    %c0_i32_0 = arith.constant 0 : i32
    %c0_i32_1 = arith.constant 0 : i32
    return %arg0, %c0_i32, %c0_i32_0 : i32, i32, i32
  }
  func.func @transform_1(%arg0: i32, %arg1: i32) -> (i32, i32, i32) {
    %c0_i32 = arith.constant 0 : i32
    %c0_i32_0 = arith.constant 0 : i32
    %c0_i32_1 = arith.constant 0 : i32
    return %arg0, %c0_i32, %c0_i32_0 : i32, i32, i32
  }
  func.func @transform_2(%arg0: i32, %arg1: i32) -> (i32, i32, i32) {
    %c0_i32 = arith.constant 0 : i32
    %c0_i32_0 = arith.constant 0 : i32
    %c0_i32_1 = arith.constant 0 : i32
    return %arg0, %c0_i32, %c0_i32_0 : i32, i32, i32
  }
  func.func @transform_3(%arg0: i32, %arg1: i32) -> (i32, i32, i32) {
    %c0_i32 = arith.constant 0 : i32
    %c0_i32_0 = arith.constant 0 : i32
    %c0_i32_1 = arith.constant 0 : i32
    return %arg1, %c0_i32, %c0_i32_0 : i32, i32, i32
  }
  func.func @transform_4(%arg0: i32, %arg1: i32) -> (i32, i32, i32) {
    %c0_i32 = arith.constant 0 : i32
    %c0_i32_0 = arith.constant 0 : i32
    %c0_i32_1 = arith.constant 0 : i32
    return %arg1, %c0_i32, %c0_i32_0 : i32, i32, i32
  }
  func.func @transform_5(%arg0: i32, %arg1: i32) -> (i32, i32, i32) {
    %c0_i32 = arith.constant 0 : i32
    %c0_i32_0 = arith.constant 0 : i32
    %c0_i32_1 = arith.constant 0 : i32
    return %arg1, %c0_i32, %c0_i32_0 : i32, i32, i32
  }
  func.func @transform_6(%arg0: i32, %arg1: i32) -> (i32, i32, i32) {
    %c0_i32 = arith.constant 0 : i32
    %c0_i32_0 = arith.constant 0 : i32
    %c0_i32_1 = arith.constant 0 : i32
    return %arg1, %c0_i32, %c0_i32_0 : i32, i32, i32
  }
  func.func @transform_7(%arg0: i32, %arg1: i32) -> (i32, i32, i32) {
    %c0_i32 = arith.constant 0 : i32
    %c0_i32_0 = arith.constant 0 : i32
    %c0_i32_1 = arith.constant 0 : i32
    return %arg1, %c0_i32, %c0_i32_0 : i32, i32, i32
  }
  func.func @transform_8(%arg0: i32, %arg1: i32) -> (i32, i32, i32) {
    %c0_i32 = arith.constant 0 : i32
    %c0_i32_0 = arith.constant 0 : i32
    %c0_i32_1 = arith.constant 0 : i32
    return %arg1, %c0_i32, %c0_i32_0 : i32, i32, i32
  }
  func.func @transform_9(%arg0: i32, %arg1: i32) -> (i32, i32) {
    %c0_i32 = arith.constant 0 : i32
    %c0_i32_0 = arith.constant 0 : i32
    %c0_i32_1 = arith.constant 0 : i32
    return %c0_i32, %c0_i32_0 : i32, i32
  }
  func.func @transform_10(%arg0: i32, %arg1: i32) -> (i32, i32) {
    %c0_i32 = arith.constant 0 : i32
    %c0_i32_0 = arith.constant 0 : i32
    %c0_i32_1 = arith.constant 0 : i32
    return %c0_i32, %c0_i32_0 : i32, i32
  }
  func.func @transform_11(%arg0: i32, %arg1: i32) -> (i32, i32, i32) {
    %c0_i32 = arith.constant 0 : i32
    %c0_i32_0 = arith.constant 0 : i32
    %c0_i32_1 = arith.constant 0 : i32
    return %arg0, %c0_i32, %c0_i32_0 : i32, i32, i32
  }
}

</mosaic_0001>

<llo_original>
// kernel: paligemma_forward.3
$region0: #{paligemma_forward.3}
  #allocation0 [shape = 'u32[]', space=smem, size = 0x4, offset = 0x4, fixed_abs, tag = 'smem constant byte address 0x4 - core index']
  #allocation1 [shape = 'u32[72,128]{1,0:T(1,128)}', space=vmem, size = 0x9000, scoped, tag = 'internal scratch']
  #allocation2 [shape = 'f32[8,32]{1,0:T(8,128)}', space=vmem, size = 0x1000, scoped, tag = 'scratch operand']
  #allocation3 [shape = 'f32[8,64]{1,0:T(8,128)}', space=vmem, size = 0x1000, scoped, tag = 'scratch operand']
  %s0 = inlined_call_operand.vmem [shape: f32[2,8,32], index: 0, kind: input, shape index: {}]
  %s1 = inlined_call_operand.vmem [shape: f32[2,8,16], index: 1, kind: input, shape index: {}]
  %s2 = inlined_call_operand.vmem [shape: f32[2,8,16], index: 2, kind: input, shape index: {}]
  %s3 = inlined_call_operand.vmem [shape: f32[2,1,32], index: 3, kind: input, shape index: {}]
  %s4 = inlined_call_operand.vmem [shape: bf16[2,32,128], index: 4, kind: input, shape index: {}]
  %s5 = inlined_call_operand.vmem [shape: bf16[2,64,32], index: 5, kind: input, shape index: {}]
  %s6 = inlined_call_operand.vmem [shape: f32[2,1,32], index: 6, kind: input, shape index: {}]
  %s7 = inlined_call_operand.vmem [shape: bf16[2,32,128], index: 7, kind: input, shape index: {}]
  %s8 = inlined_call_operand.vmem [shape: bf16[2,64,32], index: 8, kind: input, shape index: {}]
  %s9 = inlined_call_operand.vmem [shape: f32[1,32], index: 9, kind: input, shape index: {}]
  %s10 = inlined_call_operand.vmem [shape: bf16[32,128], index: 10, kind: input, shape index: {}]
  %s11 = inlined_call_operand.hbm [shape: f32[2,8,128], index: 11, kind: output, shape index: {}]
  %s12 = sld [smem:[#allocation0]]
  $region85: #{paligemma_forward.3} parent=0
    _
  %s14 = ssub.s32 1, %s12
  %s15 = scalar_select 0, %s14, %s12
  $region1: #{paligemma_forward.3} parent=0
    #allocation4 [shape = 'u8[8192]{0}', space=vmem, size = 0x2000, scoped, tag = 'output window, operand 0']
    #allocation5 [shape = 's32[2]{0}', space=sflag, size = 0x8, scoped, tag = 'scoped memory for paligemma_forward.3']
    %16 = vsyncpa [#allocation5], 0
    %s17 = scalar_lea.sflag [#allocation5], 1
    %18 = vsyncpa %s17, 0
    loop: start=0, step=1, limit=6
    $region2: #{paligemma_forward.3} parent=1 // loop_pre_header
      _
    $region3: #{paligemma_forward.3} parent=1 // loop_header
      %s20 = sphi 0, %s24
      %p21 = scmp.ge.s32.totalorder %s20, 6
      %s27 = sphi 0, %s39
      %s28 = sphi 0, %s35
      %s29 = sphi 0, %s27
      %s30 = sphi 0, %s28
      %s31 = sphi 0, %s29
      %s32 = sphi 0, %s30
      %s42 = sphi 0, %s44
      %s45 = sphi 0, %s42
      %s46 = sphi 0, %s45
      %s62 = sphi 0, %s46
      %s68 = sphi 0, %s70
      %s71 = sphi 0, %s68
      %s72 = sphi 0, %s71
      %s88 = sphi 0, %s72
      %s94 = sphi 0, %s96
      %s97 = sphi 0, %s94
      %s98 = sphi 0, %s97
      %s114 = sphi 0, %s98
      %s120 = sphi 0, %s122
      %s123 = sphi 0, %s120
      %s124 = sphi 0, %s123
      %s140 = sphi 0, %s124
      %s146 = sphi 0, %s148
      %s149 = sphi 0, %s146
      %s150 = sphi 0, %s149
      %s166 = sphi 0, %s150
      %s172 = sphi 0, %s174
      %s175 = sphi 0, %s172
      %s176 = sphi 0, %s175
      %s192 = sphi 0, %s176
      %s198 = sphi 0, %s200
      %s201 = sphi 0, %s198
      %s202 = sphi 0, %s201
      %s218 = sphi 0, %s202
      %s224 = sphi 0, %s226
      %s227 = sphi 0, %s224
      %s228 = sphi 0, %s227
      %s244 = sphi 0, %s228
      %s250 = sphi 0, %s252
      %s253 = sphi 0, %s250
      %s254 = sphi 0, %s253
      %s270 = sphi 0, %s254
      %s274 = sphi 0, %s274
      %s276 = sphi 0, %s274
      %s277 = sphi 0, %s276
      %s291 = sphi 0, %s277
      %s295 = sphi 0, %s295
      %s297 = sphi 0, %s295
      %s298 = sphi 0, %s297
      %s312 = sphi 0, %s298
      %s318 = sphi 0, %s320
      %s321 = sphi 0, %s318
      %s322 = sphi 0, %s321
      %s338 = sphi 0, %s322
    $region4: #{paligemma_forward.3} parent=1 // loop_header_branch
      %23 = sbr.rel (%p21) target = $region8
    $region5: #{paligemma_forward.3} parent=1 // loop_body
      %s25 = ssub.s32 %s20, 1
      %s26 = ssub.s32 %s20, 2
      %s33 = sadd.s32 1, %s28
      %p34 = scmp.ge.s32.totalorder %s33, 2
      %s35 = scalar_select %p34, 0, %s33
      %s36 = sadd.s32 1, %s27
      %s37 = scalar_select %p34, %s36, %s27
      %p38 = scmp.ge.s32.totalorder %s37, 2
      %s39 = scalar_select %p38, 0, %s37
      %s40 = ssub.s32 %s27, %s39
      %p41 = scmp.eq.s32.totalorder %s40, 0
      %s43 = sadd.s32 %s42, 1
      %s44 = scalar_select %p41, %s42, %s43
      %p47 = pneg %p41
      %p48 = scmp.eq.s32.totalorder %s20, 3
      %p49 = por %p47, %p48
      %p50 = scmp.ne.s32.totalorder %s42, %s45
      %p51 = scmp.eq.s32.totalorder %s20, 0
      %p52 = por %p50, %p51
      %p53 = scmp.ne.s32.totalorder %s42, %s45
      %p54 = scmp.eq.s32.totalorder %s25, 3
      %p55 = por %p53, %p54
      %p56 = scmp.ne.s32.totalorder %s45, %s46
      %p57 = scmp.eq.s32.totalorder %s25, 0
      %p58 = por %p56, %p57
      %p59 = scmp.ne.s32.totalorder %s45, %s46
      %p60 = scmp.eq.s32.totalorder %s26, 3
      %p61 = por %p59, %p60
      %p63 = scmp.ne.s32.totalorder %s46, %s62
      %p64 = scmp.eq.s32.totalorder %s26, 0
      %p65 = por %p63, %p64
      %s66 = ssub.s32 %s27, %s39
      %p67 = scmp.eq.s32.totalorder %s66, 0
      %s69 = sadd.s32 %s68, 1
      %s70 = scalar_select %p67, %s68, %s69
      %p73 = pneg %p67
      %p74 = scmp.eq.s32.totalorder %s20, 3
      %p75 = por %p73, %p74
      %p76 = scmp.ne.s32.totalorder %s68, %s71
      %p77 = scmp.eq.s32.totalorder %s20, 0
      %p78 = por %p76, %p77
      %p79 = scmp.ne.s32.totalorder %s68, %s71
      %p80 = scmp.eq.s32.totalorder %s25, 3
      %p81 = por %p79, %p80
      %p82 = scmp.ne.s32.totalorder %s71, %s72
      %p83 = scmp.eq.s32.totalorder %s25, 0
      %p84 = por %p82, %p83
      %p85 = scmp.ne.s32.totalorder %s71, %s72
      %p86 = scmp.eq.s32.totalorder %s26, 3
      %p87 = por %p85, %p86
      %p89 = scmp.ne.s32.totalorder %s72, %s88
      %p90 = scmp.eq.s32.totalorder %s26, 0
      %p91 = por %p89, %p90
      %s92 = ssub.s32 %s27, %s39
      %p93 = scmp.eq.s32.totalorder %s92, 0
      %s95 = sadd.s32 %s94, 1
      %s96 = scalar_select %p93, %s94, %s95
      %p99 = pneg %p93
      %p100 = scmp.eq.s32.totalorder %s20, 3
      %p101 = por %p99, %p100
      %p102 = scmp.ne.s32.totalorder %s94, %s97
      %p103 = scmp.eq.s32.totalorder %s20, 0
      %p104 = por %p102, %p103
      %p105 = scmp.ne.s32.totalorder %s94, %s97
      %p106 = scmp.eq.s32.totalorder %s25, 3
      %p107 = por %p105, %p106
      %p108 = scmp.ne.s32.totalorder %s97, %s98
      %p109 = scmp.eq.s32.totalorder %s25, 0
      %p110 = por %p108, %p109
      %p111 = scmp.ne.s32.totalorder %s97, %s98
      %p112 = scmp.eq.s32.totalorder %s26, 3
      %p113 = por %p111, %p112
      %p115 = scmp.ne.s32.totalorder %s98, %s114
      %p116 = scmp.eq.s32.totalorder %s26, 0
      %p117 = por %p115, %p116
      %s118 = ssub.s32 %s28, %s35
      %p119 = scmp.eq.s32.totalorder %s118, 0
      %s121 = sadd.s32 %s120, 1
      %s122 = scalar_select %p119, %s120, %s121
      %p125 = pneg %p119
      %p126 = scmp.eq.s32.totalorder %s20, 3
      %p127 = por %p125, %p126
      %p128 = scmp.ne.s32.totalorder %s120, %s123
      %p129 = scmp.eq.s32.totalorder %s20, 0
      %p130 = por %p128, %p129
      %p131 = scmp.ne.s32.totalorder %s120, %s123
      %p132 = scmp.eq.s32.totalorder %s25, 3
      %p133 = por %p131, %p132
      %p134 = scmp.ne.s32.totalorder %s123, %s124
      %p135 = scmp.eq.s32.totalorder %s25, 0
      %p136 = por %p134, %p135
      %p137 = scmp.ne.s32.totalorder %s123, %s124
      %p138 = scmp.eq.s32.totalorder %s26, 3
      %p139 = por %p137, %p138
      %p141 = scmp.ne.s32.totalorder %s124, %s140
      %p142 = scmp.eq.s32.totalorder %s26, 0
      %p143 = por %p141, %p142
      %s144 = ssub.s32 %s28, %s35
      %p145 = scmp.eq.s32.totalorder %s144, 0
      %s147 = sadd.s32 %s146, 1
      %s148 = scalar_select %p145, %s146, %s147
      %p151 = pneg %p145
      %p152 = scmp.eq.s32.totalorder %s20, 3
      %p153 = por %p151, %p152
      %p154 = scmp.ne.s32.totalorder %s146, %s149
      %p155 = scmp.eq.s32.totalorder %s20, 0
      %p156 = por %p154, %p155
      %p157 = scmp.ne.s32.totalorder %s146, %s149
      %p158 = scmp.eq.s32.totalorder %s25, 3
      %p159 = por %p157, %p158
      %p160 = scmp.ne.s32.totalorder %s149, %s150
      %p161 = scmp.eq.s32.totalorder %s25, 0
      %p162 = por %p160, %p161
      %p163 = scmp.ne.s32.totalorder %s149, %s150
      %p164 = scmp.eq.s32.totalorder %s26, 3
      %p165 = por %p163, %p164
      %p167 = scmp.ne.s32.totalorder %s150, %s166
      %p168 = scmp.eq.s32.totalorder %s26, 0
      %p169 = por %p167, %p168
      %s170 = ssub.s32 %s28, %s35
      %p171 = scmp.eq.s32.totalorder %s170, 0
      %s173 = sadd.s32 %s172, 1
      %s174 = scalar_select %p171, %s172, %s173
      %p177 = pneg %p171
      %p178 = scmp.eq.s32.totalorder %s20, 3
      %p179 = por %p177, %p178
      %p180 = scmp.ne.s32.totalorder %s172, %s175
      %p181 = scmp.eq.s32.totalorder %s20, 0
      %p182 = por %p180, %p181
      %p183 = scmp.ne.s32.totalorder %s172, %s175
      %p184 = scmp.eq.s32.totalorder %s25, 3
      %p185 = por %p183, %p184
      %p186 = scmp.ne.s32.totalorder %s175, %s176
      %p187 = scmp.eq.s32.totalorder %s25, 0
      %p188 = por %p186, %p187
      %p189 = scmp.ne.s32.totalorder %s175, %s176
      %p190 = scmp.eq.s32.totalorder %s26, 3
      %p191 = por %p189, %p190
      %p193 = scmp.ne.s32.totalorder %s176, %s192
      %p194 = scmp.eq.s32.totalorder %s26, 0
      %p195 = por %p193, %p194
      %s196 = ssub.s32 %s28, %s35
      %p197 = scmp.eq.s32.totalorder %s196, 0
      %s199 = sadd.s32 %s198, 1
      %s200 = scalar_select %p197, %s198, %s199
      %p203 = pneg %p197
      %p204 = scmp.eq.s32.totalorder %s20, 3
      %p205 = por %p203, %p204
      %p206 = scmp.ne.s32.totalorder %s198, %s201
      %p207 = scmp.eq.s32.totalorder %s20, 0
      %p208 = por %p206, %p207
      %p209 = scmp.ne.s32.totalorder %s198, %s201
      %p210 = scmp.eq.s32.totalorder %s25, 3
      %p211 = por %p209, %p210
      %p212 = scmp.ne.s32.totalorder %s201, %s202
      %p213 = scmp.eq.s32.totalorder %s25, 0
      %p214 = por %p212, %p213
      %p215 = scmp.ne.s32.totalorder %s201, %s202
      %p216 = scmp.eq.s32.totalorder %s26, 3
      %p217 = por %p215, %p216
      %p219 = scmp.ne.s32.totalorder %s202, %s218
      %p220 = scmp.eq.s32.totalorder %s26, 0
      %p221 = por %p219, %p220
      %s222 = ssub.s32 %s28, %s35
      %p223 = scmp.eq.s32.totalorder %s222, 0
      %s225 = sadd.s32 %s224, 1
      %s226 = scalar_select %p223, %s224, %s225
      %p229 = pneg %p223
      %p230 = scmp.eq.s32.totalorder %s20, 3
      %p231 = por %p229, %p230
      %p232 = scmp.ne.s32.totalorder %s224, %s227
      %p233 = scmp.eq.s32.totalorder %s20, 0
      %p234 = por %p232, %p233
      %p235 = scmp.ne.s32.totalorder %s224, %s227
      %p236 = scmp.eq.s32.totalorder %s25, 3
      %p237 = por %p235, %p236
      %p238 = scmp.ne.s32.totalorder %s227, %s228
      %p239 = scmp.eq.s32.totalorder %s25, 0
      %p240 = por %p238, %p239
      %p241 = scmp.ne.s32.totalorder %s227, %s228
      %p242 = scmp.eq.s32.totalorder %s26, 3
      %p243 = por %p241, %p242
      %p245 = scmp.ne.s32.totalorder %s228, %s244
      %p246 = scmp.eq.s32.totalorder %s26, 0
      %p247 = por %p245, %p246
      %s248 = ssub.s32 %s28, %s35
      %p249 = scmp.eq.s32.totalorder %s248, 0
      %s251 = sadd.s32 %s250, 1
      %s252 = scalar_select %p249, %s250, %s251
      %p255 = pneg %p249
      %p256 = scmp.eq.s32.totalorder %s20, 3
      %p257 = por %p255, %p256
      %p258 = scmp.ne.s32.totalorder %s250, %s253
      %p259 = scmp.eq.s32.totalorder %s20, 0
      %p260 = por %p258, %p259
      %p261 = scmp.ne.s32.totalorder %s250, %s253
      %p262 = scmp.eq.s32.totalorder %s25, 3
      %p263 = por %p261, %p262
      %p264 = scmp.ne.s32.totalorder %s253, %s254
      %p265 = scmp.eq.s32.totalorder %s25, 0
      %p266 = por %p264, %p265
      %p267 = scmp.ne.s32.totalorder %s253, %s254
      %p268 = scmp.eq.s32.totalorder %s26, 3
      %p269 = por %p267, %p268
      %p271 = scmp.ne.s32.totalorder %s254, %s270
      %p272 = scmp.eq.s32.totalorder %s26, 0
      %p273 = por %p271, %p272
      %s275 = sadd.s32 %s274, 1
      %p278 = scmp.eq.s32.totalorder %s20, 3
      %p279 = scmp.ne.s32.totalorder %s274, %s276
      %p280 = scmp.eq.s32.totalorder %s20, 0
      %p281 = por %p279, %p280
      %p282 = scmp.ne.s32.totalorder %s274, %s276
      %p283 = scmp.eq.s32.totalorder %s25, 3
      %p284 = por %p282, %p283
      %p285 = scmp.ne.s32.totalorder %s276, %s277
      %p286 = scmp.eq.s32.totalorder %s25, 0
      %p287 = por %p285, %p286
      %p288 = scmp.ne.s32.totalorder %s276, %s277
      %p289 = scmp.eq.s32.totalorder %s26, 3
      %p290 = por %p288, %p289
      %p292 = scmp.ne.s32.totalorder %s277, %s291
      %p293 = scmp.eq.s32.totalorder %s26, 0
      %p294 = por %p292, %p293
      %s296 = sadd.s32 %s295, 1
      %p299 = scmp.eq.s32.totalorder %s20, 3
      %p300 = scmp.ne.s32.totalorder %s295, %s297
      %p301 = scmp.eq.s32.totalorder %s20, 0
      %p302 = por %p300, %p301
      %p303 = scmp.ne.s32.totalorder %s295, %s297
      %p304 = scmp.eq.s32.totalorder %s25, 3
      %p305 = por %p303, %p304
      %p306 = scmp.ne.s32.totalorder %s297, %s298
      %p307 = scmp.eq.s32.totalorder %s25, 0
      %p308 = por %p306, %p307
      %p309 = scmp.ne.s32.totalorder %s297, %s298
      %p310 = scmp.eq.s32.totalorder %s26, 3
      %p311 = por %p309, %p310
      %p313 = scmp.ne.s32.totalorder %s298, %s312
      %p314 = scmp.eq.s32.totalorder %s26, 0
      %p315 = por %p313, %p314
      %s316 = ssub.s32 %s27, %s39
      %p317 = scmp.eq.s32.totalorder %s316, 0
      %s319 = sadd.s32 %s318, 1
      %s320 = scalar_select %p317, %s318, %s319
      %p323 = pneg %p317
      %p324 = scmp.eq.s32.totalorder %s20, 3
      %p325 = por %p323, %p324
      %p326 = scmp.ne.s32.totalorder %s318, %s321
      %p327 = scmp.eq.s32.totalorder %s20, 0
      %p328 = por %p326, %p327
      %p329 = scmp.ne.s32.totalorder %s318, %s321
      %p330 = scmp.eq.s32.totalorder %s25, 3
      %p331 = por %p329, %p330
      %p332 = scmp.ne.s32.totalorder %s321, %s322
      %p333 = scmp.eq.s32.totalorder %s25, 0
      %p334 = por %p332, %p333
      %p335 = scmp.ne.s32.totalorder %s321, %s322
      %p336 = scmp.eq.s32.totalorder %s26, 3
      %p337 = por %p335, %p336
      %p339 = scmp.ne.s32.totalorder %s322, %s338
      %p340 = scmp.eq.s32.totalorder %s26, 0
      %p341 = por %p339, %p340
      %p342 = scmp.le.s32.totalorder 1, %s20
      %p343 = scmp.lt.s32.totalorder %s20, 5
      %p344 = pnand %p342, %p343
      %p345 = pneg %p344
      // Predicated region
      $region9: #{paligemma_forward.3} parent=5 // pred_check
        _
      $region10: #{paligemma_forward.3} parent=5 // pred_check_branch
        %347 = sbr.rel (%p344) target = $region12
      $region11: #{paligemma_forward.3} parent=5 // pred_region
        %s348 = ssub.s32 %s20, 1
        // Predicated region
        $region13: #{paligemma_forward.3} parent=11 // pred_check
          %p349 = pneg %p287
        $region14: #{paligemma_forward.3} parent=11 // pred_check_branch
          %351 = sbr.rel (%p349) target = $region16
        $region15: #{paligemma_forward.3} parent=11 // pred_region
          _
        $region16: #{paligemma_forward.3} parent=11 // pred_fallthru
          _
        // Predicated region
        $region17: #{paligemma_forward.3} parent=11 // pred_check
          %p352 = pneg %p308
        $region18: #{paligemma_forward.3} parent=11 // pred_check_branch
          %354 = sbr.rel (%p352) target = $region20
        $region19: #{paligemma_forward.3} parent=11 // pred_region
          _
        $region20: #{paligemma_forward.3} parent=11 // pred_fallthru
          _
      $region12: #{paligemma_forward.3} parent=5 // pred_fallthru
        _
      %p355 = scmp.lt.s32.totalorder %s20, 4
      // Predicated region
      $region21: #{paligemma_forward.3} parent=5 // pred_check
        %p356 = pneg %p355
      $region22: #{paligemma_forward.3} parent=5 // pred_check_branch
        %358 = sbr.rel (%p356) target = $region24
      $region23: #{paligemma_forward.3} parent=5 // pred_region
        // Predicated region
        $region25: #{paligemma_forward.3} parent=23 // pred_check
          %p359 = pneg %p52
        $region26: #{paligemma_forward.3} parent=23 // pred_check_branch
          %361 = sbr.rel (%p359) target = $region28
        $region27: #{paligemma_forward.3} parent=23 // pred_region
          %p362 = scmp.lt.s32.totalorder %s27, 1
          %s363 = scalar_select %p362, %s27, 1
          %s364 = smul.addr %s363, 8
          %s365 = scalar_lea.vmem %s0, %s364
        $region28: #{paligemma_forward.3} parent=23 // pred_fallthru
          _
        // Predicated region
        $region29: #{paligemma_forward.3} parent=23 // pred_check
          %p366 = pneg %p78
        $region30: #{paligemma_forward.3} parent=23 // pred_check_branch
          %368 = sbr.rel (%p366) target = $region32
        $region31: #{paligemma_forward.3} parent=23 // pred_region
          %p369 = scmp.lt.s32.totalorder %s27, 1
          %s370 = scalar_select %p369, %s27, 1
          %s371 = smul.addr %s370, 8
          %s372 = scalar_lea.vmem %s1, %s371
        $region32: #{paligemma_forward.3} parent=23 // pred_fallthru
          _
        // Predicated region
        $region33: #{paligemma_forward.3} parent=23 // pred_check
          %p373 = pneg %p104
        $region34: #{paligemma_forward.3} parent=23 // pred_check_branch
          %375 = sbr.rel (%p373) target = $region36
        $region35: #{paligemma_forward.3} parent=23 // pred_region
          %p376 = scmp.lt.s32.totalorder %s27, 1
          %s377 = scalar_select %p376, %s27, 1
          %s378 = smul.addr %s377, 8
          %s379 = scalar_lea.vmem %s2, %s378
        $region36: #{paligemma_forward.3} parent=23 // pred_fallthru
          _
        // Predicated region
        $region37: #{paligemma_forward.3} parent=23 // pred_check
          %p380 = pneg %p130
        $region38: #{paligemma_forward.3} parent=23 // pred_check_branch
          %382 = sbr.rel (%p380) target = $region40
        $region39: #{paligemma_forward.3} parent=23 // pred_region
          %p383 = scmp.lt.s32.totalorder %s28, 1
          %s384 = scalar_select %p383, %s28, 1
          %s385 = scalar_lea.vmem %s3, %s384
        $region40: #{paligemma_forward.3} parent=23 // pred_fallthru
          _
        // Predicated region
        $region41: #{paligemma_forward.3} parent=23 // pred_check
          %p386 = pneg %p156
        $region42: #{paligemma_forward.3} parent=23 // pred_check_branch
          %388 = sbr.rel (%p386) target = $region44
        $region43: #{paligemma_forward.3} parent=23 // pred_region
          %p389 = scmp.lt.s32.totalorder %s28, 1
          %s390 = scalar_select %p389, %s28, 1
          %s391 = smul.addr %s390, 4
          %s392 = smul.addr %s391, 4
          %s393 = scalar_lea.vmem %s4, %s392
        $region44: #{paligemma_forward.3} parent=23 // pred_fallthru
          _
        // Predicated region
        $region45: #{paligemma_forward.3} parent=23 // pred_check
          %p394 = pneg %p182
        $region46: #{paligemma_forward.3} parent=23 // pred_check_branch
          %396 = sbr.rel (%p394) target = $region48
        $region47: #{paligemma_forward.3} parent=23 // pred_region
          %p397 = scmp.lt.s32.totalorder %s28, 1
          %s398 = scalar_select %p397, %s28, 1
          %s399 = smul.addr %s398, 8
          %s400 = smul.addr %s399, 4
          %s401 = scalar_lea.vmem %s5, %s400
        $region48: #{paligemma_forward.3} parent=23 // pred_fallthru
          _
        // Predicated region
        $region49: #{paligemma_forward.3} parent=23 // pred_check
          %p402 = pneg %p208
        $region50: #{paligemma_forward.3} parent=23 // pred_check_branch
          %404 = sbr.rel (%p402) target = $region52
        $region51: #{paligemma_forward.3} parent=23 // pred_region
          %p405 = scmp.lt.s32.totalorder %s28, 1
          %s406 = scalar_select %p405, %s28, 1
          %s407 = scalar_lea.vmem %s6, %s406
        $region52: #{paligemma_forward.3} parent=23 // pred_fallthru
          _
        // Predicated region
        $region53: #{paligemma_forward.3} parent=23 // pred_check
          %p408 = pneg %p234
        $region54: #{paligemma_forward.3} parent=23 // pred_check_branch
          %410 = sbr.rel (%p408) target = $region56
        $region55: #{paligemma_forward.3} parent=23 // pred_region
          %p411 = scmp.lt.s32.totalorder %s28, 1
          %s412 = scalar_select %p411, %s28, 1
          %s413 = smul.addr %s412, 4
          %s414 = smul.addr %s413, 4
          %s415 = scalar_lea.vmem %s7, %s414
        $region56: #{paligemma_forward.3} parent=23 // pred_fallthru
          _
        // Predicated region
        $region57: #{paligemma_forward.3} parent=23 // pred_check
          %p416 = pneg %p260
        $region58: #{paligemma_forward.3} parent=23 // pred_check_branch
          %418 = sbr.rel (%p416) target = $region60
        $region59: #{paligemma_forward.3} parent=23 // pred_region
          %p419 = scmp.lt.s32.totalorder %s28, 1
          %s420 = scalar_select %p419, %s28, 1
          %s421 = smul.addr %s420, 8
          %s422 = smul.addr %s421, 4
          %s423 = scalar_lea.vmem %s8, %s422
        $region60: #{paligemma_forward.3} parent=23 // pred_fallthru
          _
      $region24: #{paligemma_forward.3} parent=5 // pred_fallthru
        _
      %p424 = scmp.le.s32.totalorder 1, %s20
      %p425 = scmp.lt.s32.totalorder %s20, 5
      %p426 = pnand %p424, %p425
      %p427 = pneg %p426
      // Predicated region
      $region61: #{paligemma_forward.3} parent=5 // pred_check
        _
      $region62: #{paligemma_forward.3} parent=5 // pred_check_branch
        %429 = sbr.rel (%p426) target = $region64
      $region63: #{paligemma_forward.3} parent=5 // pred_region
        %s430 = ssub.s32 %s20, 1
        %p431 = scmp.lt.s32.totalorder %s29, 1
        %s432 = scalar_select %p431, %s29, 1
        %s433 = smul.addr %s432, 8
        %s434 = scalar_lea.vmem %s0, %s433
        %p435 = pneg %p58
        %p436 = pneg %p55
        %p437 = scmp.lt.s32.totalorder %s29, 1
        %s438 = scalar_select %p437, %s29, 1
        %s439 = smul.addr %s438, 8
        %s440 = scalar_lea.vmem %s1, %s439
        %p441 = pneg %p84
        %p442 = pneg %p81
        %p443 = scmp.lt.s32.totalorder %s29, 1
        %s444 = scalar_select %p443, %s29, 1
        %s445 = smul.addr %s444, 8
        %s446 = scalar_lea.vmem %s2, %s445
        %p447 = pneg %p110
        %p448 = pneg %p107
        %p449 = scmp.lt.s32.totalorder %s30, 1
        %s450 = scalar_select %p449, %s30, 1
        %s451 = scalar_lea.vmem %s3, %s450
        %p452 = pneg %p136
        %p453 = pneg %p133
        %p454 = scmp.lt.s32.totalorder %s30, 1
        %s455 = scalar_select %p454, %s30, 1
        %s456 = smul.addr %s455, 4
        %s457 = smul.addr %s456, 4
        %s458 = scalar_lea.vmem %s4, %s457
        %p459 = pneg %p162
        %p460 = pneg %p159
        %p461 = scmp.lt.s32.totalorder %s30, 1
        %s462 = scalar_select %p461, %s30, 1
        %s463 = smul.addr %s462, 8
        %s464 = smul.addr %s463, 4
        %s465 = scalar_lea.vmem %s5, %s464
        %p466 = pneg %p188
        %p467 = pneg %p185
        %p468 = scmp.lt.s32.totalorder %s30, 1
        %s469 = scalar_select %p468, %s30, 1
        %s470 = scalar_lea.vmem %s6, %s469
        %p471 = pneg %p214
        %p472 = pneg %p211
        %p473 = scmp.lt.s32.totalorder %s30, 1
        %s474 = scalar_select %p473, %s30, 1
        %s475 = smul.addr %s474, 4
        %s476 = smul.addr %s475, 4
        %s477 = scalar_lea.vmem %s7, %s476
        %p478 = pneg %p240
        %p479 = pneg %p237
        %p480 = scmp.lt.s32.totalorder %s30, 1
        %s481 = scalar_select %p480, %s30, 1
        %s482 = smul.addr %s481, 8
        %s483 = smul.addr %s482, 4
        %s484 = scalar_lea.vmem %s8, %s483
        %p485 = pneg %p266
        %p486 = pneg %p263
        %p487 = pneg %p287
        %p488 = pneg %p284
        %p489 = pneg %p308
        %p490 = pneg %p305
        %p491 = pneg %p334
        %p492 = pneg %p331
        %s493 = sand.u32 %s321, 1
        %s494 = scalar_lea.sflag [#allocation5], %s493
        %s495 = sand.u32 %s321, 1
        %s496 = smul.addr %s495, 8
        %s497 = scalar_lea.vmem [#allocation4], %s496
        %p498 = scmp.lt.s32.totalorder %s29, 1
        %s499 = scalar_select %p498, %s29, 1
        %s500 = smul.addr %s499, 8
        %s501 = scalar_lea.vmem %s0, %s500
        %p502 = scmp.lt.s32.totalorder %s29, 1
        %s503 = scalar_select %p502, %s29, 1
        %s504 = smul.addr %s503, 8
        %s505 = scalar_lea.vmem %s1, %s504
        %p506 = scmp.lt.s32.totalorder %s29, 1
        %s507 = scalar_select %p506, %s29, 1
        %s508 = smul.addr %s507, 8
        %s509 = scalar_lea.vmem %s2, %s508
        %p510 = scmp.lt.s32.totalorder %s30, 1
        %s511 = scalar_select %p510, %s30, 1
        %s512 = scalar_lea.vmem %s3, %s511
        %p513 = scmp.lt.s32.totalorder %s30, 1
        %s514 = scalar_select %p513, %s30, 1
        %s515 = smul.addr %s514, 4
        %s516 = smul.addr %s515, 4
        %s517 = scalar_lea.vmem %s4, %s516
        %p518 = scmp.lt.s32.totalorder %s30, 1
        %s519 = scalar_select %p518, %s30, 1
        %s520 = smul.addr %s519, 8
        %s521 = smul.addr %s520, 4
        %s522 = scalar_lea.vmem %s5, %s521
        %p523 = scmp.lt.s32.totalorder %s30, 1
        %s524 = scalar_select %p523, %s30, 1
        %s525 = scalar_lea.vmem %s6, %s524
        %p526 = scmp.lt.s32.totalorder %s30, 1
        %s527 = scalar_select %p526, %s30, 1
        %s528 = smul.addr %s527, 4
        %s529 = smul.addr %s528, 4
        %s530 = scalar_lea.vmem %s7, %s529
        %p531 = scmp.lt.s32.totalorder %s30, 1
        %s532 = scalar_select %p531, %s30, 1
        %s533 = smul.addr %s532, 8
        %s534 = smul.addr %s533, 4
        %s535 = scalar_lea.vmem %s8, %s534
        %p537 = scmp.eq.s32.totalorder %s30, 0
        // Predicated region
        $region65: #{paligemma_forward.3} parent=63 // pred_check
          %p538 = pneg %p537
        $region66: #{paligemma_forward.3} parent=63 // pred_check_branch
          %540 = sbr.rel (%p538) target = $region68
        $region67: #{paligemma_forward.3} parent=63 // pred_region
          %v541 = vld [vmem:[%s501] sm:$0xff]
          %v542 = vmul.f32 %v541, 5.656854
          %vm543 = vcmask 261120
          %544 = vst.msk [vmem:[#allocation2] sm:$0xff] %vm543, %v542
        $region68: #{paligemma_forward.3} parent=63 // pred_fallthru
          _
        %v545 = vld [vmem:[#allocation2] sm:$0xff]
        %v546 = vld [vmem:[%s512] sm:$0x1]
        %v547 = vmul.f32 %v545, %v545
        %vm548 = vcmask 261120
        %v549 = vsel %vm548, %v547, 0.0
        %550 = vadd.xlane.f32.xlu0 %v549
        %v551 = vpop.xlane.xlu0 %550
        %v552 = vrcp.pop 32.0
        %v553 = vmul.f32 32.0, %v552
        %v554 = vsub.f32 1.0, %v553
        %v555 = vmul.f32 %v552, %v554
        %v556 = vadd.f32 %v552, %v555
        %vm557 = vweird.f32 %v552
        %v558 = vsel %vm557, %v552, %v556
        %v559 = vmul.f32 %v551, %v558
        %v560 = vadd.f32 %v559, 1e-06
        %v561 = vrsqrt.pop %v560
        %v562 = vmul.f32 %v561, %v560
        %v563 = vmul.f32 %v562, %v561
        %v564 = vmul.f32 0.5, %v563
        %v565 = vsub.f32 1.5, %v564
        %v566 = vmul.f32 %v561, %v565
        %vm567 = vweird.f32 %v560
        %vm568 = vweird.f32 %v561
        %vm569 = vmor %vm567, %vm568
        %v570 = vsel %vm569, %v561, %v566
        %v571 = vmul.f32 %v545, %v570
        %v572 = vadd.f32 %v546, 1.0
        %v574 = vperm.slane %v572, 0
        %v576 = vmul.f32 %v571, %v574
        %v577 = vpack.c.bf16 %v576, %v576
        %v578 = vld [vmem:[%s517] sm:$0xf]
        %v579 = vld [vmem:[%s517 + $0x4] sm:$0xf]
        %v580 = vld [vmem:[%s517 + $0x8] sm:$0xf]
        %v581 = vld [vmem:[%s517 + $0xc] sm:$0xf]
        %v586 = vunpack.c.l.b16 %v578
        %v587 = vunpack.c.l.b16 %v579
        %v588 = vunpack.c.l.b16 %v580
        %v589 = vunpack.c.l.b16 %v581
        %v590 = vpack.c.b16 %v587, %v586
        %v591 = vpack.c.b16 %v589, %v588
        %v595 = vsel %vm548, %v577, 0
        %597 = vmatpush.bf16.msra.mxu0 0
        %598 = vmatpush.bf16.msra.mxu0 0
        %599 = vmatpush.bf16.msra.mxu0 0
        %600 = vmatpush.bf16.msra.mxu0 0
        %601 = vmatpush.bf16.msra.mxu0 0
        %602 = vmatpush.bf16.msra.mxu0 0
        %603 = vmatpush.bf16.msra.mxu0 %v591
        %604 = vmatpush.bf16.msra.mxu0 %v590
        %605 = vmatmul.bf16.gmra.mxu0 %v595
        %v606 = vpop.f32.mrf.mxu0
        %v607 = vadd.f32 0.0, %v606
        %v608 = vpop.f32.mrf.mxu0
        %609 = vdwg.mxu0
        %v610 = vld [vmem:[%s505] sm:$0xff]
        %v611 = vld [vmem:[%s509] sm:$0xff]
        %v612 = vsub.f32 0.0, %v607
        %614 = vrot.lane.b32.xlu0 %v612, 56
        %v615 = vpop.permute.xlu0 %614
        %618 = vrot.lane.b32.xlu0 %v607, 72
        %v619 = vpop.permute.xlu0 %618
        %vm621 = vcmask 64512
        %v622 = vsel %vm621, %v615, %v619
        %624 = vrot.lane.b32.xlu0 %v610, 64
        %v625 = vpop.permute.xlu0 %624
        %v627 = vmul.f32 %v607, %v625
        %v628 = vmul.f32 %v622, %v611
        %630 = vrot.lane.b32.xlu0 %v628, 64
        %v631 = vpop.permute.xlu0 %630
        %v633 = vadd.f32 %v627, %v631
        %v634 = vpack.c.bf16 %v633, %v633
        %v635 = vpack.c.bf16 %v607, %v607
        %636 = vrot.lane.b32.xlu0 %v612, 40
        %v637 = vpop.permute.xlu0 %636
        %639 = vrot.lane.b32.xlu0 %v607, 56
        %v640 = vpop.permute.xlu0 %639
        %v642 = vsel %vm621, %v637, %v640
        %643 = vrot.lane.b32.xlu0 %v610, 80
        %v644 = vpop.permute.xlu0 %643
        %v646 = vmul.f32 %v607, %v644
        %v647 = vmul.f32 %v642, %v611
        %649 = vrot.lane.b32.xlu0 %v647, 80
        %v650 = vpop.permute.xlu0 %649
        %v652 = vadd.f32 %v646, %v650
        %v653 = vpack.c.bf16 %v652, %v652
        %654 = vrot.lane.b32.xlu0 %v612, 120
        %v655 = vpop.permute.xlu0 %654
        %657 = vrot.lane.b32.xlu0 %v607, 8
        %v658 = vpop.permute.xlu0 %657
        %v660 = vsel %vm621, %v655, %v658
        %v661 = vmul.f32 %v607, %v610
        %v662 = vmul.f32 %v660, %v611
        %v663 = vadd.f32 %v661, %v662
        %v664 = vmul.f32 %v663, 0.25
        %v665 = vpack.c.bf16 %v664, %v664
        %667 = vrot.lane.b32.xlu0 %v634, 64
        %v668 = vpop.permute.xlu0 %667
        %vm669 = vcmask 130048
        %v671 = vsel %vm669, %v665, 0
        %v674 = vsel %vm669, %v668, 0
        %676 = vmatpush.bf16.xpose.msra.mxu0 0
        %677 = vmatpush.bf16.xpose.msra.mxu0 0
        %678 = vmatpush.bf16.xpose.msra.mxu0 0
        %679 = vmatpush.bf16.xpose.msra.mxu0 0
        %680 = vmatpush.bf16.xpose.msra.mxu0 0
        %681 = vmatpush.bf16.xpose.msra.mxu0 0
        %682 = vmatpush.bf16.xpose.msra.mxu0 0
        %683 = vmatpush.bf16.xpose.msra.mxu0 %v674
        %684 = vmatmul.bf16.gmra.mxu0 %v671
        %v685 = vpop.f32.mrf.mxu0
        %v686 = vadd.f32 0.0, %v685
        %v687 = vpop.f32.mrf.mxu0
        %688 = vdwg.mxu0
        %v689 = vsel %vm621, %v686, -inf
        %690 = vmax.xlane.f32.xlu0 %v689
        %v691 = vpop.xlane.xlu0 %690
        %v692 = vsub.f32 %v686, %v691
        %v693 = vmul.f32 %v692, 1.442695
        %v694 = vpow.pop %v693
        %v695 = vsel %vm621, %v694, 0.0
        %696 = vadd.xlane.f32.xlu0 %v695
        %v697 = vpop.xlane.xlu0 %696
        %v698 = vrcp.pop %v697
        %v699 = vmul.f32 %v694, %v698
        %v700 = vpack.c.bf16 %v699, %v699
        %702 = vrot.lane.b32.xlu0 %v635, 32
        %v703 = vpop.permute.xlu0 %702
        %v705 = vsel %vm621, %v700, 0
        %vm707 = vcmask 1043456
        %v709 = vsel %vm707, %v703, 0
        %711 = vmatpush.bf16.msra.mxu0 0
        %712 = vmatpush.bf16.msra.mxu0 0
        %713 = vmatpush.bf16.msra.mxu0 0
        %714 = vmatpush.bf16.msra.mxu0 0
        %715 = vmatpush.bf16.msra.mxu0 0
        %716 = vmatpush.bf16.msra.mxu0 0
        %717 = vmatpush.bf16.msra.mxu0 0
        %718 = vmatpush.bf16.msra.mxu0 %v709
        %719 = vmatmul.bf16.gmra.mxu0 %v705
        %v720 = vpop.f32.mrf.mxu0
        %v721 = vadd.f32 0.0, %v720
        %v722 = vpop.f32.mrf.mxu0
        %723 = vdwg.mxu0
        %724 = vst.msk [vmem:[#allocation3] sm:$0xff] %vm669, %v721
        %725 = vrot.lane.b32.xlu0 %v612, 104
        %v726 = vpop.permute.xlu0 %725
        %728 = vrot.lane.b32.xlu0 %v607, 120
        %v729 = vpop.permute.xlu0 %728
        %v731 = vsel %vm621, %v726, %v729
        %732 = vrot.lane.b32.xlu0 %v610, 16
        %v733 = vpop.permute.xlu0 %732
        %v735 = vmul.f32 %v607, %v733
        %v736 = vmul.f32 %v731, %v611
        %738 = vrot.lane.b32.xlu0 %v736, 16
        %v739 = vpop.permute.xlu0 %738
        %v741 = vadd.f32 %v735, %v739
        %v742 = vmul.f32 %v741, 0.25
        %v743 = vpack.c.bf16 %v742, %v742
        %745 = vrot.lane.b32.xlu0 %v743, 112
        %v746 = vpop.permute.xlu0 %745
        %v748 = vsel %vm669, %v746, 0
        %750 = vmatpush.bf16.xpose.msra.mxu0 0
        %751 = vmatpush.bf16.xpose.msra.mxu0 0
        %752 = vmatpush.bf16.xpose.msra.mxu0 0
        %753 = vmatpush.bf16.xpose.msra.mxu0 0
        %754 = vmatpush.bf16.xpose.msra.mxu0 0
        %755 = vmatpush.bf16.xpose.msra.mxu0 0
        %756 = vmatpush.bf16.xpose.msra.mxu0 0
        %757 = vmatpush.bf16.xpose.msra.mxu0 %v674
        %758 = vmatmul.bf16.gmra.mxu0 %v748
        %v759 = vpop.f32.mrf.mxu0
        %v760 = vadd.f32 0.0, %v759
        %v761 = vpop.f32.mrf.mxu0
        %762 = vdwg.mxu0
        %v763 = vsel %vm621, %v760, -inf
        %764 = vmax.xlane.f32.xlu0 %v763
        %v765 = vpop.xlane.xlu0 %764
        %v766 = vsub.f32 %v760, %v765
        %v767 = vmul.f32 %v766, 1.442695
        %v768 = vpow.pop %v767
        %v769 = vsel %vm621, %v768, 0.0
        %770 = vadd.xlane.f32.xlu0 %v769
        %v771 = vpop.xlane.xlu0 %770
        %v772 = vrcp.pop %v771
        %v773 = vmul.f32 %v768, %v772
        %v774 = vpack.c.bf16 %v773, %v773
        %v776 = vsel %vm621, %v774, 0
        %778 = vmatpush.bf16.msra.mxu0 0
        %779 = vmatpush.bf16.msra.mxu0 0
        %780 = vmatpush.bf16.msra.mxu0 0
        %781 = vmatpush.bf16.msra.mxu0 0
        %782 = vmatpush.bf16.msra.mxu0 0
        %783 = vmatpush.bf16.msra.mxu0 0
        %784 = vmatpush.bf16.msra.mxu0 0
        %785 = vmatpush.bf16.msra.mxu0 %v709
        %786 = vmatmul.bf16.gmra.mxu0 %v776
        %v787 = vpop.f32.mrf.mxu0
        %v788 = vadd.f32 0.0, %v787
        %v789 = vpop.f32.mrf.mxu0
        %790 = vdwg.mxu0
        %792 = vrot.lane.b32.xlu0 %v788, 16
        %v793 = vpop.permute.xlu0 %792
        %vm795 = vcmask 261248
        %796 = vst.msk [vmem:[#allocation3] sm:$0xff] %vm795, %v793
        %797 = vrot.lane.b32.xlu0 %v612, 88
        %v798 = vpop.permute.xlu0 %797
        %800 = vrot.lane.b32.xlu0 %v607, 104
        %v801 = vpop.permute.xlu0 %800
        %v803 = vsel %vm621, %v798, %v801
        %804 = vrot.lane.b32.xlu0 %v610, 32
        %v805 = vpop.permute.xlu0 %804
        %v807 = vmul.f32 %v607, %v805
        %v808 = vmul.f32 %v803, %v611
        %810 = vrot.lane.b32.xlu0 %v808, 32
        %v811 = vpop.permute.xlu0 %810
        %v813 = vadd.f32 %v807, %v811
        %v814 = vmul.f32 %v813, 0.25
        %v815 = vpack.c.bf16 %v814, %v814
        %817 = vrot.lane.b32.xlu0 %v815, 96
        %v818 = vpop.permute.xlu0 %817
        %820 = vrot.lane.b32.xlu0 %v653, 48
        %v821 = vpop.permute.xlu0 %820
        %v823 = vsel %vm669, %v818, 0
        %v826 = vsel %vm669, %v821, 0
        %828 = vmatpush.bf16.xpose.msra.mxu0 0
        %829 = vmatpush.bf16.xpose.msra.mxu0 0
        %830 = vmatpush.bf16.xpose.msra.mxu0 0
        %831 = vmatpush.bf16.xpose.msra.mxu0 0
        %832 = vmatpush.bf16.xpose.msra.mxu0 0
        %833 = vmatpush.bf16.xpose.msra.mxu0 0
        %834 = vmatpush.bf16.xpose.msra.mxu0 0
        %835 = vmatpush.bf16.xpose.msra.mxu0 %v826
        %836 = vmatmul.bf16.gmra.mxu0 %v823
        %v837 = vpop.f32.mrf.mxu0
        %v838 = vadd.f32 0.0, %v837
        %v839 = vpop.f32.mrf.mxu0
        %840 = vdwg.mxu0
        %v841 = vsel %vm621, %v838, -inf
        %842 = vmax.xlane.f32.xlu0 %v841
        %v843 = vpop.xlane.xlu0 %842
        %v844 = vsub.f32 %v838, %v843
        %v845 = vmul.f32 %v844, 1.442695
        %v846 = vpow.pop %v845
        %v847 = vsel %vm621, %v846, 0.0
        %848 = vadd.xlane.f32.xlu0 %v847
        %v849 = vpop.xlane.xlu0 %848
        %v850 = vrcp.pop %v849
        %v851 = vmul.f32 %v846, %v850
        %v852 = vpack.c.bf16 %v851, %v851
        %853 = vrot.lane.b32.xlu0 %v635, 16
        %v854 = vpop.permute.xlu0 %853
        %v856 = vsel %vm621, %v852, 0
        %v859 = vsel %vm707, %v854, 0
        %861 = vmatpush.bf16.msra.mxu0 0
        %862 = vmatpush.bf16.msra.mxu0 0
        %863 = vmatpush.bf16.msra.mxu0 0
        %864 = vmatpush.bf16.msra.mxu0 0
        %865 = vmatpush.bf16.msra.mxu0 0
        %866 = vmatpush.bf16.msra.mxu0 0
        %867 = vmatpush.bf16.msra.mxu0 0
        %868 = vmatpush.bf16.msra.mxu0 %v859
        %869 = vmatmul.bf16.gmra.mxu0 %v856
        %v870 = vpop.f32.mrf.mxu0
        %v871 = vadd.f32 0.0, %v870
        %v872 = vpop.f32.mrf.mxu0
        %873 = vdwg.mxu0
        %875 = vrot.lane.b32.xlu0 %v871, 32
        %v876 = vpop.permute.xlu0 %875
        %vm878 = vcmask 392448
        %879 = vst.msk [vmem:[#allocation3] sm:$0xff] %vm878, %v876
        %880 = vrot.lane.b32.xlu0 %v612, 72
        %v881 = vpop.permute.xlu0 %880
        %883 = vrot.lane.b32.xlu0 %v607, 88
        %v884 = vpop.permute.xlu0 %883
        %v886 = vsel %vm621, %v881, %v884
        %887 = vrot.lane.b32.xlu0 %v610, 48
        %v888 = vpop.permute.xlu0 %887
        %v890 = vmul.f32 %v607, %v888
        %v891 = vmul.f32 %v886, %v611
        %893 = vrot.lane.b32.xlu0 %v891, 48
        %v894 = vpop.permute.xlu0 %893
        %v896 = vadd.f32 %v890, %v894
        %v897 = vmul.f32 %v896, 0.25
        %v898 = vpack.c.bf16 %v897, %v897
        %900 = vrot.lane.b32.xlu0 %v898, 80
        %v901 = vpop.permute.xlu0 %900
        %v903 = vsel %vm669, %v901, 0
        %905 = vmatpush.bf16.xpose.msra.mxu0 0
        %906 = vmatpush.bf16.xpose.msra.mxu0 0
        %907 = vmatpush.bf16.xpose.msra.mxu0 0
        %908 = vmatpush.bf16.xpose.msra.mxu0 0
        %909 = vmatpush.bf16.xpose.msra.mxu0 0
        %910 = vmatpush.bf16.xpose.msra.mxu0 0
        %911 = vmatpush.bf16.xpose.msra.mxu0 0
        %912 = vmatpush.bf16.xpose.msra.mxu0 %v826
        %913 = vmatmul.bf16.gmra.mxu0 %v903
        %v914 = vpop.f32.mrf.mxu0
        %v915 = vadd.f32 0.0, %v914
        %v916 = vpop.f32.mrf.mxu0
        %917 = vdwg.mxu0
        %v918 = vsel %vm621, %v915, -inf
        %919 = vmax.xlane.f32.xlu0 %v918
        %v920 = vpop.xlane.xlu0 %919
        %v921 = vsub.f32 %v915, %v920
        %v922 = vmul.f32 %v921, 1.442695
        %v923 = vpow.pop %v922
        %v924 = vsel %vm621, %v923, 0.0
        %925 = vadd.xlane.f32.xlu0 %v924
        %v926 = vpop.xlane.xlu0 %925
        %v927 = vrcp.pop %v926
        %v928 = vmul.f32 %v923, %v927
        %v929 = vpack.c.bf16 %v928, %v928
        %v931 = vsel %vm621, %v929, 0
        %933 = vmatpush.bf16.msra.mxu0 0
        %934 = vmatpush.bf16.msra.mxu0 0
        %935 = vmatpush.bf16.msra.mxu0 0
        %936 = vmatpush.bf16.msra.mxu0 0
        %937 = vmatpush.bf16.msra.mxu0 0
        %938 = vmatpush.bf16.msra.mxu0 0
        %939 = vmatpush.bf16.msra.mxu0 0
        %940 = vmatpush.bf16.msra.mxu0 %v859
        %941 = vmatmul.bf16.gmra.mxu0 %v931
        %v942 = vpop.f32.mrf.mxu0
        %v943 = vadd.f32 0.0, %v942
        %v944 = vpop.f32.mrf.mxu0
        %945 = vdwg.mxu0
        %947 = vrot.lane.b32.xlu0 %v943, 48
        %v948 = vpop.permute.xlu0 %947
        %vm950 = vcmask 523648
        %951 = vst.msk [vmem:[#allocation3] sm:$0xff] %vm950, %v948
        %v952 = vld [vmem:[#allocation3] sm:$0xff]
        %v953 = vpack.c.bf16 %v952, %v952
        %v954 = vld [vmem:[%s522] sm:$0xf]
        %v955 = vld [vmem:[%s522 + $0x4] sm:$0xf]
        %v956 = vld [vmem:[%s522 + $0x8] sm:$0xf]
        %v957 = vld [vmem:[%s522 + $0xc] sm:$0xf]
        %v958 = vld [vmem:[%s522 + $0x10] sm:$0xf]
        %v959 = vld [vmem:[%s522 + $0x14] sm:$0xf]
        %v960 = vld [vmem:[%s522 + $0x18] sm:$0xf]
        %v961 = vld [vmem:[%s522 + $0x1c] sm:$0xf]
        %v970 = vunpack.c.l.b16 %v954
        %v971 = vunpack.c.l.b16 %v955
        %v972 = vunpack.c.l.b16 %v956
        %v973 = vunpack.c.l.b16 %v957
        %v974 = vunpack.c.l.b16 %v958
        %v975 = vunpack.c.l.b16 %v959
        %v976 = vunpack.c.l.b16 %v960
        %v977 = vunpack.c.l.b16 %v961
        %v978 = vpack.c.b16 %v971, %v970
        %v979 = vpack.c.b16 %v973, %v972
        %v980 = vpack.c.b16 %v975, %v974
        %v981 = vpack.c.b16 %v977, %v976
        %vm986 = vcmask 523264
        %v988 = vsel %vm986, %v953, 0
        %990 = vmatpush.bf16.msra.mxu0 0
        %991 = vmatpush.bf16.msra.mxu0 0
        %992 = vmatpush.bf16.msra.mxu0 0
        %993 = vmatpush.bf16.msra.mxu0 0
        %994 = vmatpush.bf16.msra.mxu0 %v981
        %995 = vmatpush.bf16.msra.mxu0 %v980
        %996 = vmatpush.bf16.msra.mxu0 %v979
        %997 = vmatpush.bf16.msra.mxu0 %v978
        %998 = vmatmul.bf16.gmra.mxu0 %v988
        %v999 = vpop.f32.mrf.mxu0
        %v1000 = vadd.f32 0.0, %v999
        %v1001 = vpop.f32.mrf.mxu0
        %1002 = vdwg.mxu0
        %v1003 = vadd.f32 %v545, %v1000
        %v1004 = vld [vmem:[%s525] sm:$0x1]
        %v1005 = vmul.f32 %v1003, %v1003
        %v1006 = vsel %vm548, %v1005, 0.0
        %1007 = vadd.xlane.f32.xlu0 %v1006
        %v1008 = vpop.xlane.xlu0 %1007
        %v1009 = vmul.f32 %v1008, %v558
        %v1010 = vadd.f32 %v1009, 1e-06
        %v1011 = vrsqrt.pop %v1010
        %v1012 = vmul.f32 %v1011, %v1010
        %v1013 = vmul.f32 %v1012, %v1011
        %v1014 = vmul.f32 0.5, %v1013
        %v1015 = vsub.f32 1.5, %v1014
        %v1016 = vmul.f32 %v1011, %v1015
        %vm1017 = vweird.f32 %v1010
        %vm1018 = vweird.f32 %v1011
        %vm1019 = vmor %vm1017, %vm1018
        %v1020 = vsel %vm1019, %v1011, %v1016
        %v1021 = vmul.f32 %v1003, %v1020
        %v1022 = vadd.f32 %v1004, 1.0
        %v1024 = vperm.slane %v1022, 0
        %v1026 = vmul.f32 %v1021, %v1024
        %v1027 = vpack.c.bf16 %v1026, %v1026
        %v1028 = vld [vmem:[%s530] sm:$0xf]
        %v1029 = vld [vmem:[%s530 + $0x4] sm:$0xf]
        %v1030 = vld [vmem:[%s530 + $0x8] sm:$0xf]
        %v1031 = vld [vmem:[%s530 + $0xc] sm:$0xf]
        %v1036 = vunpack.c.l.b16 %v1028
        %v1037 = vunpack.c.l.b16 %v1029
        %v1038 = vunpack.c.l.b16 %v1030
        %v1039 = vunpack.c.l.b16 %v1031
        %v1040 = vpack.c.b16 %v1037, %v1036
        %v1041 = vpack.c.b16 %v1039, %v1038
        %v1045 = vsel %vm548, %v1027, 0
        %1047 = vmatpush.bf16.msra.mxu0 0
        %1048 = vmatpush.bf16.msra.mxu0 0
        %1049 = vmatpush.bf16.msra.mxu0 0
        %1050 = vmatpush.bf16.msra.mxu0 0
        %1051 = vmatpush.bf16.msra.mxu0 0
        %1052 = vmatpush.bf16.msra.mxu0 0
        %1053 = vmatpush.bf16.msra.mxu0 %v1041
        %1054 = vmatpush.bf16.msra.mxu0 %v1040
        %1055 = vmatmul.bf16.gmra.mxu0 %v1045
        %v1056 = vpop.f32.mrf.mxu0
        %v1057 = vadd.f32 0.0, %v1056
        %v1058 = vpop.f32.mrf.mxu0
        %1059 = vdwg.mxu0
        %v1060 = vmul.f32 %v1057, %v1057
        %v1061 = vmul.f32 %v1057, %v1060
        %v1062 = vmul.f32 %v1061, 0.044715
        %v1063 = vadd.f32 %v1057, %v1062
        %v1064 = vmul.f32 %v1063, 0.7978846
        %v1065 = vtanh.pop %v1064
        %v1066 = vadd.f32 %v1065, 1.0
        %v1067 = vmul.f32 %v1066, 0.5
        %v1068 = vmul.f32 %v1057, %v1067
        %1070 = vrot.lane.b32.xlu0 %v1057, 64
        %v1071 = vpop.permute.xlu0 %1070
        %v1073 = vmul.f32 %v1068, %v1071
        %v1074 = vpack.c.bf16 %v1073, %v1073
        %v1075 = vld [vmem:[%s535] sm:$0xf]
        %v1076 = vld [vmem:[%s535 + $0x4] sm:$0xf]
        %v1077 = vld [vmem:[%s535 + $0x8] sm:$0xf]
        %v1078 = vld [vmem:[%s535 + $0xc] sm:$0xf]
        %v1079 = vld [vmem:[%s535 + $0x10] sm:$0xf]
        %v1080 = vld [vmem:[%s535 + $0x14] sm:$0xf]
        %v1081 = vld [vmem:[%s535 + $0x18] sm:$0xf]
        %v1082 = vld [vmem:[%s535 + $0x1c] sm:$0xf]
        %v1091 = vunpack.c.l.b16 %v1075
        %v1092 = vunpack.c.l.b16 %v1076
        %v1093 = vunpack.c.l.b16 %v1077
        %v1094 = vunpack.c.l.b16 %v1078
        %v1095 = vunpack.c.l.b16 %v1079
        %v1096 = vunpack.c.l.b16 %v1080
        %v1097 = vunpack.c.l.b16 %v1081
        %v1098 = vunpack.c.l.b16 %v1082
        %v1099 = vpack.c.b16 %v1092, %v1091
        %v1100 = vpack.c.b16 %v1094, %v1093
        %v1101 = vpack.c.b16 %v1096, %v1095
        %v1102 = vpack.c.b16 %v1098, %v1097
        %v1108 = vsel %vm986, %v1074, 0
        %1110 = vmatpush.bf16.msra.mxu0 0
        %1111 = vmatpush.bf16.msra.mxu0 0
        %1112 = vmatpush.bf16.msra.mxu0 0
        %1113 = vmatpush.bf16.msra.mxu0 0
        %1114 = vmatpush.bf16.msra.mxu0 %v1102
        %1115 = vmatpush.bf16.msra.mxu0 %v1101
        %1116 = vmatpush.bf16.msra.mxu0 %v1100
        %1117 = vmatpush.bf16.msra.mxu0 %v1099
        %1118 = vmatmul.bf16.gmra.mxu0 %v1108
        %v1119 = vpop.f32.mrf.mxu0
        %v1120 = vadd.f32 0.0, %v1119
        %v1121 = vpop.f32.mrf.mxu0
        %1122 = vdwg.mxu0
        %v1123 = vadd.f32 %v1003, %v1120
        %1124 = vst.msk [vmem:[#allocation2] sm:$0xff] %vm548, %v1123
        %p1125 = scmp.eq.s32.totalorder %s30, 1
        // Predicated region
        $region69: #{paligemma_forward.3} parent=63 // pred_check
          %p1126 = pneg %p1125
        $region70: #{paligemma_forward.3} parent=63 // pred_check_branch
          %1128 = sbr.rel (%p1126) target = $region72
        $region71: #{paligemma_forward.3} parent=63 // pred_region
          %v1129 = vld [vmem:[%s9] sm:$0x1]
          %v1130 = vmul.f32 %v1123, %v1123
          %v1131 = vsel %vm548, %v1130, 0.0
          %1132 = vadd.xlane.f32.xlu0 %v1131
          %v1133 = vpop.xlane.xlu0 %1132
          %v1134 = vmul.f32 %v1133, %v558
          %v1135 = vadd.f32 %v1134, 1e-06
          %v1136 = vrsqrt.pop %v1135
          %v1137 = vmul.f32 %v1136, %v1135
          %v1138 = vmul.f32 %v1137, %v1136
          %v1139 = vmul.f32 0.5, %v1138
          %v1140 = vsub.f32 1.5, %v1139
          %v1141 = vmul.f32 %v1136, %v1140
          %vm1142 = vweird.f32 %v1135
          %vm1143 = vweird.f32 %v1136
          %vm1144 = vmor %vm1142, %vm1143
          %v1145 = vsel %vm1144, %v1136, %v1141
          %v1146 = vmul.f32 %v1123, %v1145
          %v1147 = vadd.f32 %v1129, 1.0
          %v1149 = vperm.slane %v1147, 0
          %v1151 = vmul.f32 %v1146, %v1149
          %v1152 = vpack.c.bf16 %v1151, %v1151
          %v1153 = vld [vmem:[%s10] sm:$0xf]
          %v1154 = vld [vmem:[%s10 + $0x4] sm:$0xf]
          %v1155 = vld [vmem:[%s10 + $0x8] sm:$0xf]
          %v1156 = vld [vmem:[%s10 + $0xc] sm:$0xf]
          %v1161 = vunpack.c.l.b16 %v1153
          %v1162 = vunpack.c.l.b16 %v1154
          %v1163 = vunpack.c.l.b16 %v1155
          %v1164 = vunpack.c.l.b16 %v1156
          %v1165 = vpack.c.b16 %v1162, %v1161
          %v1166 = vpack.c.b16 %v1164, %v1163
          %v1170 = vsel %vm548, %v1152, 0
          %1172 = vmatpush.bf16.msra.mxu0 0
          %1173 = vmatpush.bf16.msra.mxu0 0
          %1174 = vmatpush.bf16.msra.mxu0 0
          %1175 = vmatpush.bf16.msra.mxu0 0
          %1176 = vmatpush.bf16.msra.mxu0 0
          %1177 = vmatpush.bf16.msra.mxu0 0
          %1178 = vmatpush.bf16.msra.mxu0 %v1166
          %1179 = vmatpush.bf16.msra.mxu0 %v1165
          %1180 = vmatmul.bf16.gmra.mxu0 %v1170
          %v1181 = vpop.f32.mrf.mxu0
          %v1182 = vadd.f32 0.0, %v1181
          %v1183 = vpop.f32.mrf.mxu0
          %1184 = vdwg.mxu0
          %1185 = vst [vmem:[%s497] sm:$0xff] %v1182
        $region72: #{paligemma_forward.3} parent=63 // pred_fallthru
          _
        %s1186 = sand.u32 %s321, 1
        %s1187 = scalar_lea.sflag [#allocation5], %s1186
        %s1188 = sand.u32 %s321, 1
        %s1189 = smul.addr %s1188, 8
        %s1190 = scalar_lea.vmem [#allocation4], %s1189
        // Predicated region
        $region73: #{paligemma_forward.3} parent=63 // pred_check
          %p1191 = pneg %p331
        $region74: #{paligemma_forward.3} parent=63 // pred_check_branch
          %1193 = sbr.rel (%p1191) target = $region76
        $region75: #{paligemma_forward.3} parent=63 // pred_region
          %1195 = vsyncadd %s1187, 0
          %s1196 = smul.addr %s29, 8
          %s1197 = scalar_lea.hbm %s11, %s1196
          %s1199 = sshll.u32 %s1190, 4
          %s1200 = int_to_ptr.vmem [resolvable:$true] %s1199
          %s1201 = sshll.u32 %s1197, 4
          %s1202 = int_to_ptr.hbm [resolvable:$true] %s1201
          %1204 = dma.vmem_to_hbm [thread:$0]  %s1200, 128, %s1202, %s1187
        $region76: #{paligemma_forward.3} parent=63 // pred_fallthru
          _
      $region64: #{paligemma_forward.3} parent=5 // pred_fallthru
        _
      %p1205 = scmp.le.s32.totalorder 2, %s20
      // Predicated region
      $region77: #{paligemma_forward.3} parent=5 // pred_check
        %p1206 = pneg %p1205
      $region78: #{paligemma_forward.3} parent=5 // pred_check_branch
        %1208 = sbr.rel (%p1206) target = $region80
      $region79: #{paligemma_forward.3} parent=5 // pred_region
        %s1209 = ssub.s32 %s20, 2
        // Predicated region
        $region81: #{paligemma_forward.3} parent=79 // pred_check
          %p1210 = pneg %p337
        $region82: #{paligemma_forward.3} parent=79 // pred_check_branch
          %1212 = sbr.rel (%p1210) target = $region84
        $region83: #{paligemma_forward.3} parent=79 // pred_region
          %s1213 = sand.u32 %s322, 1
          %s1214 = scalar_lea.sflag [#allocation5], %s1213
          %s1215 = sand.u32 %s322, 1
          %s1216 = smul.addr %s1215, 8
          %s1217 = scalar_lea.vmem [#allocation4], %s1216
          %1219 = dma.done %s1214, 128
        $region84: #{paligemma_forward.3} parent=79 // pred_fallthru
          _
      $region80: #{paligemma_forward.3} parent=5 // pred_fallthru
        _
    $region6: #{paligemma_forward.3} parent=1 // loop_footer
      %s24 = sadd.s32 1, %s20
    $region7: #{paligemma_forward.3} parent=1 // loop_footer_branch
      %19 = sbr.rel target = $region3
    $region8: #{paligemma_forward.3} parent=1 // loop_exit
      _
    %1220 = vsyncpa [#allocation5], 1
    %s1221 = scalar_lea.sflag [#allocation5], 1
    %1222 = vsyncpa %s1221, 1

// kernel: paligemma_forward.2
$region0: #{paligemma_forward.2}
  #allocation0 [shape = 'u32[]', space=smem, size = 0x4, offset = 0x4, fixed_abs, tag = 'smem constant byte address 0x4 - core index']
  #allocation1 [shape = 'u32[72,128]{1,0:T(1,128)}', space=vmem, size = 0x9000, scoped, tag = 'internal scratch']
  #allocation2 [shape = 'f32[4,32]{1,0:T(4,128)}', space=vmem, size = 0x800, scoped, tag = 'scratch operand']
  #allocation3 [shape = 'f32[4,32]{1,0:T(4,128)}', space=vmem, size = 0x800, scoped, tag = 'scratch operand']
  %s0 = inlined_call_operand.vmem [shape: f32[2,4,192], index: 0, kind: input, shape index: {}]
  %s1 = inlined_call_operand.vmem [shape: bf16[192,32], index: 1, kind: input, shape index: {}]
  %s2 = inlined_call_operand.vmem [shape: f32[4,32], index: 2, kind: input, shape index: {}]
  %s3 = inlined_call_operand.vmem [shape: f32[2,1,32], index: 3, kind: input, shape index: {}]
  %s4 = inlined_call_operand.vmem [shape: f32[2,1,32], index: 4, kind: input, shape index: {}]
  %s5 = inlined_call_operand.vmem [shape: bf16[2,32,96], index: 5, kind: input, shape index: {}]
  %s6 = inlined_call_operand.vmem [shape: f32[2,1,96], index: 6, kind: input, shape index: {}]
  %s7 = inlined_call_operand.vmem [shape: bf16[2,32,32], index: 7, kind: input, shape index: {}]
  %s8 = inlined_call_operand.vmem [shape: f32[2,1,32], index: 8, kind: input, shape index: {}]
  %s9 = inlined_call_operand.vmem [shape: f32[2,1,32], index: 9, kind: input, shape index: {}]
  %s10 = inlined_call_operand.vmem [shape: f32[2,1,32], index: 10, kind: input, shape index: {}]
  %s11 = inlined_call_operand.vmem [shape: bf16[2,32,64], index: 11, kind: input, shape index: {}]
  %s12 = inlined_call_operand.vmem [shape: f32[2,1,64], index: 12, kind: input, shape index: {}]
  %s13 = inlined_call_operand.vmem [shape: bf16[2,64,32], index: 13, kind: input, shape index: {}]
  %s14 = inlined_call_operand.vmem [shape: f32[2,1,32], index: 14, kind: input, shape index: {}]
  %s15 = inlined_call_operand.vmem [shape: f32[1,32], index: 15, kind: input, shape index: {}]
  %s16 = inlined_call_operand.vmem [shape: f32[1,32], index: 16, kind: input, shape index: {}]
  %s17 = inlined_call_operand.vmem [shape: bf16[32,32], index: 17, kind: input, shape index: {}]
  %s18 = inlined_call_operand.vmem [shape: f32[1,32], index: 18, kind: input, shape index: {}]
  %s19 = inlined_call_operand.vmem [shape: f32[2,4,32], index: 19, kind: output, shape index: {}]
  %s20 = sld [smem:[#allocation0]]
  $region117: #{paligemma_forward.2} parent=0
    _
  %s22 = ssub.s32 1, %s20
  %s23 = scalar_select 0, %s22, %s20
  loop: start=0, step=1, limit=6
  $region2: #{paligemma_forward.2} parent=0 // loop_pre_header
    _
  $region3: #{paligemma_forward.2} parent=0 // loop_header
    %s25 = sphi 0, %s29
    %p26 = scmp.ge.s32.totalorder %s25, 6
    %s32 = sphi 0, %s44
    %s33 = sphi 0, %s40
    %s34 = sphi 0, %s32
    %s35 = sphi 0, %s33
    %s36 = sphi 0, %s34
    %s37 = sphi 0, %s35
    %s47 = sphi 0, %s49
    %s50 = sphi 0, %s47
    %s51 = sphi 0, %s50
    %s67 = sphi 0, %s51
    %s71 = sphi 0, %s71
    %s73 = sphi 0, %s71
    %s74 = sphi 0, %s73
    %s88 = sphi 0, %s74
    %s92 = sphi 0, %s92
    %s94 = sphi 0, %s92
    %s95 = sphi 0, %s94
    %s109 = sphi 0, %s95
    %s115 = sphi 0, %s117
    %s118 = sphi 0, %s115
    %s119 = sphi 0, %s118
    %s135 = sphi 0, %s119
    %s141 = sphi 0, %s143
    %s144 = sphi 0, %s141
    %s145 = sphi 0, %s144
    %s161 = sphi 0, %s145
    %s167 = sphi 0, %s169
    %s170 = sphi 0, %s167
    %s171 = sphi 0, %s170
    %s187 = sphi 0, %s171
    %s193 = sphi 0, %s195
    %s196 = sphi 0, %s193
    %s197 = sphi 0, %s196
    %s213 = sphi 0, %s197
    %s219 = sphi 0, %s221
    %s222 = sphi 0, %s219
    %s223 = sphi 0, %s222
    %s239 = sphi 0, %s223
    %s245 = sphi 0, %s247
    %s248 = sphi 0, %s245
    %s249 = sphi 0, %s248
    %s265 = sphi 0, %s249
    %s271 = sphi 0, %s273
    %s274 = sphi 0, %s271
    %s275 = sphi 0, %s274
    %s291 = sphi 0, %s275
    %s297 = sphi 0, %s299
    %s300 = sphi 0, %s297
    %s301 = sphi 0, %s300
    %s317 = sphi 0, %s301
    %s323 = sphi 0, %s325
    %s326 = sphi 0, %s323
    %s327 = sphi 0, %s326
    %s343 = sphi 0, %s327
    %s349 = sphi 0, %s351
    %s352 = sphi 0, %s349
    %s353 = sphi 0, %s352
    %s369 = sphi 0, %s353
    %s375 = sphi 0, %s377
    %s378 = sphi 0, %s375
    %s379 = sphi 0, %s378
    %s395 = sphi 0, %s379
    %s401 = sphi 0, %s403
    %s404 = sphi 0, %s401
    %s405 = sphi 0, %s404
    %s421 = sphi 0, %s405
    %s425 = sphi 0, %s425
    %s427 = sphi 0, %s425
    %s428 = sphi 0, %s427
    %s442 = sphi 0, %s428
    %s446 = sphi 0, %s446
    %s448 = sphi 0, %s446
    %s449 = sphi 0, %s448
    %s463 = sphi 0, %s449
    %s467 = sphi 0, %s467
    %s469 = sphi 0, %s467
    %s470 = sphi 0, %s469
    %s484 = sphi 0, %s470
    %s488 = sphi 0, %s488
    %s490 = sphi 0, %s488
    %s491 = sphi 0, %s490
    %s505 = sphi 0, %s491
    %s511 = sphi 0, %s513
    %s514 = sphi 0, %s511
    %s515 = sphi 0, %s514
    %s531 = sphi 0, %s515
  $region4: #{paligemma_forward.2} parent=0 // loop_header_branch
    %28 = sbr.rel (%p26) target = $region8
  $region5: #{paligemma_forward.2} parent=0 // loop_body
    %s30 = ssub.s32 %s25, 1
    %s31 = ssub.s32 %s25, 2
    %s38 = sadd.s32 1, %s33
    %p39 = scmp.ge.s32.totalorder %s38, 2
    %s40 = scalar_select %p39, 0, %s38
    %s41 = sadd.s32 1, %s32
    %s42 = scalar_select %p39, %s41, %s32
    %p43 = scmp.ge.s32.totalorder %s42, 2
    %s44 = scalar_select %p43, 0, %s42
    %s45 = ssub.s32 %s32, %s44
    %p46 = scmp.eq.s32.totalorder %s45, 0
    %s48 = sadd.s32 %s47, 1
    %s49 = scalar_select %p46, %s47, %s48
    %p52 = pneg %p46
    %p53 = scmp.eq.s32.totalorder %s25, 3
    %p54 = por %p52, %p53
    %p55 = scmp.ne.s32.totalorder %s47, %s50
    %p56 = scmp.eq.s32.totalorder %s25, 0
    %p57 = por %p55, %p56
    %p58 = scmp.ne.s32.totalorder %s47, %s50
    %p59 = scmp.eq.s32.totalorder %s30, 3
    %p60 = por %p58, %p59
    %p61 = scmp.ne.s32.totalorder %s50, %s51
    %p62 = scmp.eq.s32.totalorder %s30, 0
    %p63 = por %p61, %p62
    %p64 = scmp.ne.s32.totalorder %s50, %s51
    %p65 = scmp.eq.s32.totalorder %s31, 3
    %p66 = por %p64, %p65
    %p68 = scmp.ne.s32.totalorder %s51, %s67
    %p69 = scmp.eq.s32.totalorder %s31, 0
    %p70 = por %p68, %p69
    %s72 = sadd.s32 %s71, 1
    %p75 = scmp.eq.s32.totalorder %s25, 3
    %p76 = scmp.ne.s32.totalorder %s71, %s73
    %p77 = scmp.eq.s32.totalorder %s25, 0
    %p78 = por %p76, %p77
    %p79 = scmp.ne.s32.totalorder %s71, %s73
    %p80 = scmp.eq.s32.totalorder %s30, 3
    %p81 = por %p79, %p80
    %p82 = scmp.ne.s32.totalorder %s73, %s74
    %p83 = scmp.eq.s32.totalorder %s30, 0
    %p84 = por %p82, %p83
    %p85 = scmp.ne.s32.totalorder %s73, %s74
    %p86 = scmp.eq.s32.totalorder %s31, 3
    %p87 = por %p85, %p86
    %p89 = scmp.ne.s32.totalorder %s74, %s88
    %p90 = scmp.eq.s32.totalorder %s31, 0
    %p91 = por %p89, %p90
    %s93 = sadd.s32 %s92, 1
    %p96 = scmp.eq.s32.totalorder %s25, 3
    %p97 = scmp.ne.s32.totalorder %s92, %s94
    %p98 = scmp.eq.s32.totalorder %s25, 0
    %p99 = por %p97, %p98
    %p100 = scmp.ne.s32.totalorder %s92, %s94
    %p101 = scmp.eq.s32.totalorder %s30, 3
    %p102 = por %p100, %p101
    %p103 = scmp.ne.s32.totalorder %s94, %s95
    %p104 = scmp.eq.s32.totalorder %s30, 0
    %p105 = por %p103, %p104
    %p106 = scmp.ne.s32.totalorder %s94, %s95
    %p107 = scmp.eq.s32.totalorder %s31, 3
    %p108 = por %p106, %p107
    %p110 = scmp.ne.s32.totalorder %s95, %s109
    %p111 = scmp.eq.s32.totalorder %s31, 0
    %p112 = por %p110, %p111
    %s113 = ssub.s32 %s33, %s40
    %p114 = scmp.eq.s32.totalorder %s113, 0
    %s116 = sadd.s32 %s115, 1
    %s117 = scalar_select %p114, %s115, %s116
    %p120 = pneg %p114
    %p121 = scmp.eq.s32.totalorder %s25, 3
    %p122 = por %p120, %p121
    %p123 = scmp.ne.s32.totalorder %s115, %s118
    %p124 = scmp.eq.s32.totalorder %s25, 0
    %p125 = por %p123, %p124
    %p126 = scmp.ne.s32.totalorder %s115, %s118
    %p127 = scmp.eq.s32.totalorder %s30, 3
    %p128 = por %p126, %p127
    %p129 = scmp.ne.s32.totalorder %s118, %s119
    %p130 = scmp.eq.s32.totalorder %s30, 0
    %p131 = por %p129, %p130
    %p132 = scmp.ne.s32.totalorder %s118, %s119
    %p133 = scmp.eq.s32.totalorder %s31, 3
    %p134 = por %p132, %p133
    %p136 = scmp.ne.s32.totalorder %s119, %s135
    %p137 = scmp.eq.s32.totalorder %s31, 0
    %p138 = por %p136, %p137
    %s139 = ssub.s32 %s33, %s40
    %p140 = scmp.eq.s32.totalorder %s139, 0
    %s142 = sadd.s32 %s141, 1
    %s143 = scalar_select %p140, %s141, %s142
    %p146 = pneg %p140
    %p147 = scmp.eq.s32.totalorder %s25, 3
    %p148 = por %p146, %p147
    %p149 = scmp.ne.s32.totalorder %s141, %s144
    %p150 = scmp.eq.s32.totalorder %s25, 0
    %p151 = por %p149, %p150
    %p152 = scmp.ne.s32.totalorder %s141, %s144
    %p153 = scmp.eq.s32.totalorder %s30, 3
    %p154 = por %p152, %p153
    %p155 = scmp.ne.s32.totalorder %s144, %s145
    %p156 = scmp.eq.s32.totalorder %s30, 0
    %p157 = por %p155, %p156
    %p158 = scmp.ne.s32.totalorder %s144, %s145
    %p159 = scmp.eq.s32.totalorder %s31, 3
    %p160 = por %p158, %p159
    %p162 = scmp.ne.s32.totalorder %s145, %s161
    %p163 = scmp.eq.s32.totalorder %s31, 0
    %p164 = por %p162, %p163
    %s165 = ssub.s32 %s33, %s40
    %p166 = scmp.eq.s32.totalorder %s165, 0
    %s168 = sadd.s32 %s167, 1
    %s169 = scalar_select %p166, %s167, %s168
    %p172 = pneg %p166
    %p173 = scmp.eq.s32.totalorder %s25, 3
    %p174 = por %p172, %p173
    %p175 = scmp.ne.s32.totalorder %s167, %s170
    %p176 = scmp.eq.s32.totalorder %s25, 0
    %p177 = por %p175, %p176
    %p178 = scmp.ne.s32.totalorder %s167, %s170
    %p179 = scmp.eq.s32.totalorder %s30, 3
    %p180 = por %p178, %p179
    %p181 = scmp.ne.s32.totalorder %s170, %s171
    %p182 = scmp.eq.s32.totalorder %s30, 0
    %p183 = por %p181, %p182
    %p184 = scmp.ne.s32.totalorder %s170, %s171
    %p185 = scmp.eq.s32.totalorder %s31, 3
    %p186 = por %p184, %p185
    %p188 = scmp.ne.s32.totalorder %s171, %s187
    %p189 = scmp.eq.s32.totalorder %s31, 0
    %p190 = por %p188, %p189
    %s191 = ssub.s32 %s33, %s40
    %p192 = scmp.eq.s32.totalorder %s191, 0
    %s194 = sadd.s32 %s193, 1
    %s195 = scalar_select %p192, %s193, %s194
    %p198 = pneg %p192
    %p199 = scmp.eq.s32.totalorder %s25, 3
    %p200 = por %p198, %p199
    %p201 = scmp.ne.s32.totalorder %s193, %s196
    %p202 = scmp.eq.s32.totalorder %s25, 0
    %p203 = por %p201, %p202
    %p204 = scmp.ne.s32.totalorder %s193, %s196
    %p205 = scmp.eq.s32.totalorder %s30, 3
    %p206 = por %p204, %p205
    %p207 = scmp.ne.s32.totalorder %s196, %s197
    %p208 = scmp.eq.s32.totalorder %s30, 0
    %p209 = por %p207, %p208
    %p210 = scmp.ne.s32.totalorder %s196, %s197
    %p211 = scmp.eq.s32.totalorder %s31, 3
    %p212 = por %p210, %p211
    %p214 = scmp.ne.s32.totalorder %s197, %s213
    %p215 = scmp.eq.s32.totalorder %s31, 0
    %p216 = por %p214, %p215
    %s217 = ssub.s32 %s33, %s40
    %p218 = scmp.eq.s32.totalorder %s217, 0
    %s220 = sadd.s32 %s219, 1
    %s221 = scalar_select %p218, %s219, %s220
    %p224 = pneg %p218
    %p225 = scmp.eq.s32.totalorder %s25, 3
    %p226 = por %p224, %p225
    %p227 = scmp.ne.s32.totalorder %s219, %s222
    %p228 = scmp.eq.s32.totalorder %s25, 0
    %p229 = por %p227, %p228
    %p230 = scmp.ne.s32.totalorder %s219, %s222
    %p231 = scmp.eq.s32.totalorder %s30, 3
    %p232 = por %p230, %p231
    %p233 = scmp.ne.s32.totalorder %s222, %s223
    %p234 = scmp.eq.s32.totalorder %s30, 0
    %p235 = por %p233, %p234
    %p236 = scmp.ne.s32.totalorder %s222, %s223
    %p237 = scmp.eq.s32.totalorder %s31, 3
    %p238 = por %p236, %p237
    %p240 = scmp.ne.s32.totalorder %s223, %s239
    %p241 = scmp.eq.s32.totalorder %s31, 0
    %p242 = por %p240, %p241
    %s243 = ssub.s32 %s33, %s40
    %p244 = scmp.eq.s32.totalorder %s243, 0
    %s246 = sadd.s32 %s245, 1
    %s247 = scalar_select %p244, %s245, %s246
    %p250 = pneg %p244
    %p251 = scmp.eq.s32.totalorder %s25, 3
    %p252 = por %p250, %p251
    %p253 = scmp.ne.s32.totalorder %s245, %s248
    %p254 = scmp.eq.s32.totalorder %s25, 0
    %p255 = por %p253, %p254
    %p256 = scmp.ne.s32.totalorder %s245, %s248
    %p257 = scmp.eq.s32.totalorder %s30, 3
    %p258 = por %p256, %p257
    %p259 = scmp.ne.s32.totalorder %s248, %s249
    %p260 = scmp.eq.s32.totalorder %s30, 0
    %p261 = por %p259, %p260
    %p262 = scmp.ne.s32.totalorder %s248, %s249
    %p263 = scmp.eq.s32.totalorder %s31, 3
    %p264 = por %p262, %p263
    %p266 = scmp.ne.s32.totalorder %s249, %s265
    %p267 = scmp.eq.s32.totalorder %s31, 0
    %p268 = por %p266, %p267
    %s269 = ssub.s32 %s33, %s40
    %p270 = scmp.eq.s32.totalorder %s269, 0
    %s272 = sadd.s32 %s271, 1
    %s273 = scalar_select %p270, %s271, %s272
    %p276 = pneg %p270
    %p277 = scmp.eq.s32.totalorder %s25, 3
    %p278 = por %p276, %p277
    %p279 = scmp.ne.s32.totalorder %s271, %s274
    %p280 = scmp.eq.s32.totalorder %s25, 0
    %p281 = por %p279, %p280
    %p282 = scmp.ne.s32.totalorder %s271, %s274
    %p283 = scmp.eq.s32.totalorder %s30, 3
    %p284 = por %p282, %p283
    %p285 = scmp.ne.s32.totalorder %s274, %s275
    %p286 = scmp.eq.s32.totalorder %s30, 0
    %p287 = por %p285, %p286
    %p288 = scmp.ne.s32.totalorder %s274, %s275
    %p289 = scmp.eq.s32.totalorder %s31, 3
    %p290 = por %p288, %p289
    %p292 = scmp.ne.s32.totalorder %s275, %s291
    %p293 = scmp.eq.s32.totalorder %s31, 0
    %p294 = por %p292, %p293
    %s295 = ssub.s32 %s33, %s40
    %p296 = scmp.eq.s32.totalorder %s295, 0
    %s298 = sadd.s32 %s297, 1
    %s299 = scalar_select %p296, %s297, %s298
    %p302 = pneg %p296
    %p303 = scmp.eq.s32.totalorder %s25, 3
    %p304 = por %p302, %p303
    %p305 = scmp.ne.s32.totalorder %s297, %s300
    %p306 = scmp.eq.s32.totalorder %s25, 0
    %p307 = por %p305, %p306
    %p308 = scmp.ne.s32.totalorder %s297, %s300
    %p309 = scmp.eq.s32.totalorder %s30, 3
    %p310 = por %p308, %p309
    %p311 = scmp.ne.s32.totalorder %s300, %s301
    %p312 = scmp.eq.s32.totalorder %s30, 0
    %p313 = por %p311, %p312
    %p314 = scmp.ne.s32.totalorder %s300, %s301
    %p315 = scmp.eq.s32.totalorder %s31, 3
    %p316 = por %p314, %p315
    %p318 = scmp.ne.s32.totalorder %s301, %s317
    %p319 = scmp.eq.s32.totalorder %s31, 0
    %p320 = por %p318, %p319
    %s321 = ssub.s32 %s33, %s40
    %p322 = scmp.eq.s32.totalorder %s321, 0
    %s324 = sadd.s32 %s323, 1
    %s325 = scalar_select %p322, %s323, %s324
    %p328 = pneg %p322
    %p329 = scmp.eq.s32.totalorder %s25, 3
    %p330 = por %p328, %p329
    %p331 = scmp.ne.s32.totalorder %s323, %s326
    %p332 = scmp.eq.s32.totalorder %s25, 0
    %p333 = por %p331, %p332
    %p334 = scmp.ne.s32.totalorder %s323, %s326
    %p335 = scmp.eq.s32.totalorder %s30, 3
    %p336 = por %p334, %p335
    %p337 = scmp.ne.s32.totalorder %s326, %s327
    %p338 = scmp.eq.s32.totalorder %s30, 0
    %p339 = por %p337, %p338
    %p340 = scmp.ne.s32.totalorder %s326, %s327
    %p341 = scmp.eq.s32.totalorder %s31, 3
    %p342 = por %p340, %p341
    %p344 = scmp.ne.s32.totalorder %s327, %s343
    %p345 = scmp.eq.s32.totalorder %s31, 0
    %p346 = por %p344, %p345
    %s347 = ssub.s32 %s33, %s40
    %p348 = scmp.eq.s32.totalorder %s347, 0
    %s350 = sadd.s32 %s349, 1
    %s351 = scalar_select %p348, %s349, %s350
    %p354 = pneg %p348
    %p355 = scmp.eq.s32.totalorder %s25, 3
    %p356 = por %p354, %p355
    %p357 = scmp.ne.s32.totalorder %s349, %s352
    %p358 = scmp.eq.s32.totalorder %s25, 0
    %p359 = por %p357, %p358
    %p360 = scmp.ne.s32.totalorder %s349, %s352
    %p361 = scmp.eq.s32.totalorder %s30, 3
    %p362 = por %p360, %p361
    %p363 = scmp.ne.s32.totalorder %s352, %s353
    %p364 = scmp.eq.s32.totalorder %s30, 0
    %p365 = por %p363, %p364
    %p366 = scmp.ne.s32.totalorder %s352, %s353
    %p367 = scmp.eq.s32.totalorder %s31, 3
    %p368 = por %p366, %p367
    %p370 = scmp.ne.s32.totalorder %s353, %s369
    %p371 = scmp.eq.s32.totalorder %s31, 0
    %p372 = por %p370, %p371
    %s373 = ssub.s32 %s33, %s40
    %p374 = scmp.eq.s32.totalorder %s373, 0
    %s376 = sadd.s32 %s375, 1
    %s377 = scalar_select %p374, %s375, %s376
    %p380 = pneg %p374
    %p381 = scmp.eq.s32.totalorder %s25, 3
    %p382 = por %p380, %p381
    %p383 = scmp.ne.s32.totalorder %s375, %s378
    %p384 = scmp.eq.s32.totalorder %s25, 0
    %p385 = por %p383, %p384
    %p386 = scmp.ne.s32.totalorder %s375, %s378
    %p387 = scmp.eq.s32.totalorder %s30, 3
    %p388 = por %p386, %p387
    %p389 = scmp.ne.s32.totalorder %s378, %s379
    %p390 = scmp.eq.s32.totalorder %s30, 0
    %p391 = por %p389, %p390
    %p392 = scmp.ne.s32.totalorder %s378, %s379
    %p393 = scmp.eq.s32.totalorder %s31, 3
    %p394 = por %p392, %p393
    %p396 = scmp.ne.s32.totalorder %s379, %s395
    %p397 = scmp.eq.s32.totalorder %s31, 0
    %p398 = por %p396, %p397
    %s399 = ssub.s32 %s33, %s40
    %p400 = scmp.eq.s32.totalorder %s399, 0
    %s402 = sadd.s32 %s401, 1
    %s403 = scalar_select %p400, %s401, %s402
    %p406 = pneg %p400
    %p407 = scmp.eq.s32.totalorder %s25, 3
    %p408 = por %p406, %p407
    %p409 = scmp.ne.s32.totalorder %s401, %s404
    %p410 = scmp.eq.s32.totalorder %s25, 0
    %p411 = por %p409, %p410
    %p412 = scmp.ne.s32.totalorder %s401, %s404
    %p413 = scmp.eq.s32.totalorder %s30, 3
    %p414 = por %p412, %p413
    %p415 = scmp.ne.s32.totalorder %s404, %s405
    %p416 = scmp.eq.s32.totalorder %s30, 0
    %p417 = por %p415, %p416
    %p418 = scmp.ne.s32.totalorder %s404, %s405
    %p419 = scmp.eq.s32.totalorder %s31, 3
    %p420 = por %p418, %p419
    %p422 = scmp.ne.s32.totalorder %s405, %s421
    %p423 = scmp.eq.s32.totalorder %s31, 0
    %p424 = por %p422, %p423
    %s426 = sadd.s32 %s425, 1
    %p429 = scmp.eq.s32.totalorder %s25, 3
    %p430 = scmp.ne.s32.totalorder %s425, %s427
    %p431 = scmp.eq.s32.totalorder %s25, 0
    %p432 = por %p430, %p431
    %p433 = scmp.ne.s32.totalorder %s425, %s427
    %p434 = scmp.eq.s32.totalorder %s30, 3
    %p435 = por %p433, %p434
    %p436 = scmp.ne.s32.totalorder %s427, %s428
    %p437 = scmp.eq.s32.totalorder %s30, 0
    %p438 = por %p436, %p437
    %p439 = scmp.ne.s32.totalorder %s427, %s428
    %p440 = scmp.eq.s32.totalorder %s31, 3
    %p441 = por %p439, %p440
    %p443 = scmp.ne.s32.totalorder %s428, %s442
    %p444 = scmp.eq.s32.totalorder %s31, 0
    %p445 = por %p443, %p444
    %s447 = sadd.s32 %s446, 1
    %p450 = scmp.eq.s32.totalorder %s25, 3
    %p451 = scmp.ne.s32.totalorder %s446, %s448
    %p452 = scmp.eq.s32.totalorder %s25, 0
    %p453 = por %p451, %p452
    %p454 = scmp.ne.s32.totalorder %s446, %s448
    %p455 = scmp.eq.s32.totalorder %s30, 3
    %p456 = por %p454, %p455
    %p457 = scmp.ne.s32.totalorder %s448, %s449
    %p458 = scmp.eq.s32.totalorder %s30, 0
    %p459 = por %p457, %p458
    %p460 = scmp.ne.s32.totalorder %s448, %s449
    %p461 = scmp.eq.s32.totalorder %s31, 3
    %p462 = por %p460, %p461
    %p464 = scmp.ne.s32.totalorder %s449, %s463
    %p465 = scmp.eq.s32.totalorder %s31, 0
    %p466 = por %p464, %p465
    %s468 = sadd.s32 %s467, 1
    %p471 = scmp.eq.s32.totalorder %s25, 3
    %p472 = scmp.ne.s32.totalorder %s467, %s469
    %p473 = scmp.eq.s32.totalorder %s25, 0
    %p474 = por %p472, %p473
    %p475 = scmp.ne.s32.totalorder %s467, %s469
    %p476 = scmp.eq.s32.totalorder %s30, 3
    %p477 = por %p475, %p476
    %p478 = scmp.ne.s32.totalorder %s469, %s470
    %p479 = scmp.eq.s32.totalorder %s30, 0
    %p480 = por %p478, %p479
    %p481 = scmp.ne.s32.totalorder %s469, %s470
    %p482 = scmp.eq.s32.totalorder %s31, 3
    %p483 = por %p481, %p482
    %p485 = scmp.ne.s32.totalorder %s470, %s484
    %p486 = scmp.eq.s32.totalorder %s31, 0
    %p487 = por %p485, %p486
    %s489 = sadd.s32 %s488, 1
    %p492 = scmp.eq.s32.totalorder %s25, 3
    %p493 = scmp.ne.s32.totalorder %s488, %s490
    %p494 = scmp.eq.s32.totalorder %s25, 0
    %p495 = por %p493, %p494
    %p496 = scmp.ne.s32.totalorder %s488, %s490
    %p497 = scmp.eq.s32.totalorder %s30, 3
    %p498 = por %p496, %p497
    %p499 = scmp.ne.s32.totalorder %s490, %s491
    %p500 = scmp.eq.s32.totalorder %s30, 0
    %p501 = por %p499, %p500
    %p502 = scmp.ne.s32.totalorder %s490, %s491
    %p503 = scmp.eq.s32.totalorder %s31, 3
    %p504 = por %p502, %p503
    %p506 = scmp.ne.s32.totalorder %s491, %s505
    %p507 = scmp.eq.s32.totalorder %s31, 0
    %p508 = por %p506, %p507
    %s509 = ssub.s32 %s32, %s44
    %p510 = scmp.eq.s32.totalorder %s509, 0
    %s512 = sadd.s32 %s511, 1
    %s513 = scalar_select %p510, %s511, %s512
    %p516 = pneg %p510
    %p517 = scmp.eq.s32.totalorder %s25, 3
    %p518 = por %p516, %p517
    %p519 = scmp.ne.s32.totalorder %s511, %s514
    %p520 = scmp.eq.s32.totalorder %s25, 0
    %p521 = por %p519, %p520
    %p522 = scmp.ne.s32.totalorder %s511, %s514
    %p523 = scmp.eq.s32.totalorder %s30, 3
    %p524 = por %p522, %p523
    %p525 = scmp.ne.s32.totalorder %s514, %s515
    %p526 = scmp.eq.s32.totalorder %s30, 0
    %p527 = por %p525, %p526
    %p528 = scmp.ne.s32.totalorder %s514, %s515
    %p529 = scmp.eq.s32.totalorder %s31, 3
    %p530 = por %p528, %p529
    %p532 = scmp.ne.s32.totalorder %s515, %s531
    %p533 = scmp.eq.s32.totalorder %s31, 0
    %p534 = por %p532, %p533
    %p535 = scmp.le.s32.totalorder 1, %s25
    %p536 = scmp.lt.s32.totalorder %s25, 5
    %p537 = pnand %p535, %p536
    %p538 = pneg %p537
    // Predicated region
    $region9: #{paligemma_forward.2} parent=5 // pred_check
      _
    $region10: #{paligemma_forward.2} parent=5 // pred_check_branch
      %540 = sbr.rel (%p537) target = $region12
    $region11: #{paligemma_forward.2} parent=5 // pred_region
      %s541 = ssub.s32 %s25, 1
      // Predicated region
      $region13: #{paligemma_forward.2} parent=11 // pred_check
        %p542 = pneg %p84
      $region14: #{paligemma_forward.2} parent=11 // pred_check_branch
        %544 = sbr.rel (%p542) target = $region16
      $region15: #{paligemma_forward.2} parent=11 // pred_region
        _
      $region16: #{paligemma_forward.2} parent=11 // pred_fallthru
        _
      // Predicated region
      $region17: #{paligemma_forward.2} parent=11 // pred_check
        %p545 = pneg %p105
      $region18: #{paligemma_forward.2} parent=11 // pred_check_branch
        %547 = sbr.rel (%p545) target = $region20
      $region19: #{paligemma_forward.2} parent=11 // pred_region
        _
      $region20: #{paligemma_forward.2} parent=11 // pred_fallthru
        _
      // Predicated region
      $region21: #{paligemma_forward.2} parent=11 // pred_check
        %p548 = pneg %p438
      $region22: #{paligemma_forward.2} parent=11 // pred_check_branch
        %550 = sbr.rel (%p548) target = $region24
      $region23: #{paligemma_forward.2} parent=11 // pred_region
        _
      $region24: #{paligemma_forward.2} parent=11 // pred_fallthru
        _
      // Predicated region
      $region25: #{paligemma_forward.2} parent=11 // pred_check
        %p551 = pneg %p459
      $region26: #{paligemma_forward.2} parent=11 // pred_check_branch
        %553 = sbr.rel (%p551) target = $region28
      $region27: #{paligemma_forward.2} parent=11 // pred_region
        _
      $region28: #{paligemma_forward.2} parent=11 // pred_fallthru
        _
      // Predicated region
      $region29: #{paligemma_forward.2} parent=11 // pred_check
        %p554 = pneg %p480
      $region30: #{paligemma_forward.2} parent=11 // pred_check_branch
        %556 = sbr.rel (%p554) target = $region32
      $region31: #{paligemma_forward.2} parent=11 // pred_region
        _
      $region32: #{paligemma_forward.2} parent=11 // pred_fallthru
        _
      // Predicated region
      $region33: #{paligemma_forward.2} parent=11 // pred_check
        %p557 = pneg %p501
      $region34: #{paligemma_forward.2} parent=11 // pred_check_branch
        %559 = sbr.rel (%p557) target = $region36
      $region35: #{paligemma_forward.2} parent=11 // pred_region
        _
      $region36: #{paligemma_forward.2} parent=11 // pred_fallthru
        _
    $region12: #{paligemma_forward.2} parent=5 // pred_fallthru
      _
    %p560 = scmp.lt.s32.totalorder %s25, 4
    // Predicated region
    $region37: #{paligemma_forward.2} parent=5 // pred_check
      %p561 = pneg %p560
    $region38: #{paligemma_forward.2} parent=5 // pred_check_branch
      %563 = sbr.rel (%p561) target = $region40
    $region39: #{paligemma_forward.2} parent=5 // pred_region
      // Predicated region
      $region41: #{paligemma_forward.2} parent=39 // pred_check
        %p564 = pneg %p57
      $region42: #{paligemma_forward.2} parent=39 // pred_check_branch
        %566 = sbr.rel (%p564) target = $region44
      $region43: #{paligemma_forward.2} parent=39 // pred_region
        %p567 = scmp.lt.s32.totalorder %s32, 1
        %s568 = scalar_select %p567, %s32, 1
        %s569 = smul.addr %s568, 2
        %s570 = smul.addr %s569, 4
        %s571 = scalar_lea.vmem %s0, %s570
      $region44: #{paligemma_forward.2} parent=39 // pred_fallthru
        _
      // Predicated region
      $region45: #{paligemma_forward.2} parent=39 // pred_check
        %p572 = pneg %p125
      $region46: #{paligemma_forward.2} parent=39 // pred_check_branch
        %574 = sbr.rel (%p572) target = $region48
      $region47: #{paligemma_forward.2} parent=39 // pred_region
        %p575 = scmp.lt.s32.totalorder %s33, 1
        %s576 = scalar_select %p575, %s33, 1
        %s577 = scalar_lea.vmem %s3, %s576
      $region48: #{paligemma_forward.2} parent=39 // pred_fallthru
        _
      // Predicated region
      $region49: #{paligemma_forward.2} parent=39 // pred_check
        %p578 = pneg %p151
      $region50: #{paligemma_forward.2} parent=39 // pred_check_branch
        %580 = sbr.rel (%p578) target = $region52
      $region51: #{paligemma_forward.2} parent=39 // pred_region
        %p581 = scmp.lt.s32.totalorder %s33, 1
        %s582 = scalar_select %p581, %s33, 1
        %s583 = scalar_lea.vmem %s4, %s582
      $region52: #{paligemma_forward.2} parent=39 // pred_fallthru
        _
      // Predicated region
      $region53: #{paligemma_forward.2} parent=39 // pred_check
        %p584 = pneg %p177
      $region54: #{paligemma_forward.2} parent=39 // pred_check_branch
        %586 = sbr.rel (%p584) target = $region56
      $region55: #{paligemma_forward.2} parent=39 // pred_region
        %p587 = scmp.lt.s32.totalorder %s33, 1
        %s588 = scalar_select %p587, %s33, 1
        %s589 = smul.addr %s588, 4
        %s590 = smul.addr %s589, 4
        %s591 = scalar_lea.vmem %s5, %s590
      $region56: #{paligemma_forward.2} parent=39 // pred_fallthru
        _
      // Predicated region
      $region57: #{paligemma_forward.2} parent=39 // pred_check
        %p592 = pneg %p203
      $region58: #{paligemma_forward.2} parent=39 // pred_check_branch
        %594 = sbr.rel (%p592) target = $region60
      $region59: #{paligemma_forward.2} parent=39 // pred_region
        %p595 = scmp.lt.s32.totalorder %s33, 1
        %s596 = scalar_select %p595, %s33, 1
        %s597 = scalar_lea.vmem %s6, %s596
      $region60: #{paligemma_forward.2} parent=39 // pred_fallthru
        _
      // Predicated region
      $region61: #{paligemma_forward.2} parent=39 // pred_check
        %p598 = pneg %p229
      $region62: #{paligemma_forward.2} parent=39 // pred_check_branch
        %600 = sbr.rel (%p598) target = $region64
      $region63: #{paligemma_forward.2} parent=39 // pred_region
        %p601 = scmp.lt.s32.totalorder %s33, 1
        %s602 = scalar_select %p601, %s33, 1
        %s603 = smul.addr %s602, 4
        %s604 = smul.addr %s603, 4
        %s605 = scalar_lea.vmem %s7, %s604
      $region64: #{paligemma_forward.2} parent=39 // pred_fallthru
        _
      // Predicated region
      $region65: #{paligemma_forward.2} parent=39 // pred_check
        %p606 = pneg %p255
      $region66: #{paligemma_forward.2} parent=39 // pred_check_branch
        %608 = sbr.rel (%p606) target = $region68
      $region67: #{paligemma_forward.2} parent=39 // pred_region
        %p609 = scmp.lt.s32.totalorder %s33, 1
        %s610 = scalar_select %p609, %s33, 1
        %s611 = scalar_lea.vmem %s8, %s610
      $region68: #{paligemma_forward.2} parent=39 // pred_fallthru
        _
      // Predicated region
      $region69: #{paligemma_forward.2} parent=39 // pred_check
        %p612 = pneg %p281
      $region70: #{paligemma_forward.2} parent=39 // pred_check_branch
        %614 = sbr.rel (%p612) target = $region72
      $region71: #{paligemma_forward.2} parent=39 // pred_region
        %p615 = scmp.lt.s32.totalorder %s33, 1
        %s616 = scalar_select %p615, %s33, 1
        %s617 = scalar_lea.vmem %s9, %s616
      $region72: #{paligemma_forward.2} parent=39 // pred_fallthru
        _
      // Predicated region
      $region73: #{paligemma_forward.2} parent=39 // pred_check
        %p618 = pneg %p307
      $region74: #{paligemma_forward.2} parent=39 // pred_check_branch
        %620 = sbr.rel (%p618) target = $region76
      $region75: #{paligemma_forward.2} parent=39 // pred_region
        %p621 = scmp.lt.s32.totalorder %s33, 1
        %s622 = scalar_select %p621, %s33, 1
        %s623 = scalar_lea.vmem %s10, %s622
      $region76: #{paligemma_forward.2} parent=39 // pred_fallthru
        _
      // Predicated region
      $region77: #{paligemma_forward.2} parent=39 // pred_check
        %p624 = pneg %p333
      $region78: #{paligemma_forward.2} parent=39 // pred_check_branch
        %626 = sbr.rel (%p624) target = $region80
      $region79: #{paligemma_forward.2} parent=39 // pred_region
        %p627 = scmp.lt.s32.totalorder %s33, 1
        %s628 = scalar_select %p627, %s33, 1
        %s629 = smul.addr %s628, 4
        %s630 = smul.addr %s629, 4
        %s631 = scalar_lea.vmem %s11, %s630
      $region80: #{paligemma_forward.2} parent=39 // pred_fallthru
        _
      // Predicated region
      $region81: #{paligemma_forward.2} parent=39 // pred_check
        %p632 = pneg %p359
      $region82: #{paligemma_forward.2} parent=39 // pred_check_branch
        %634 = sbr.rel (%p632) target = $region84
      $region83: #{paligemma_forward.2} parent=39 // pred_region
        %p635 = scmp.lt.s32.totalorder %s33, 1
        %s636 = scalar_select %p635, %s33, 1
        %s637 = scalar_lea.vmem %s12, %s636
      $region84: #{paligemma_forward.2} parent=39 // pred_fallthru
        _
      // Predicated region
      $region85: #{paligemma_forward.2} parent=39 // pred_check
        %p638 = pneg %p385
      $region86: #{paligemma_forward.2} parent=39 // pred_check_branch
        %640 = sbr.rel (%p638) target = $region88
      $region87: #{paligemma_forward.2} parent=39 // pred_region
        %p641 = scmp.lt.s32.totalorder %s33, 1
        %s642 = scalar_select %p641, %s33, 1
        %s643 = smul.addr %s642, 8
        %s644 = smul.addr %s643, 4
        %s645 = scalar_lea.vmem %s13, %s644
      $region88: #{paligemma_forward.2} parent=39 // pred_fallthru
        _
      // Predicated region
      $region89: #{paligemma_forward.2} parent=39 // pred_check
        %p646 = pneg %p411
      $region90: #{paligemma_forward.2} parent=39 // pred_check_branch
        %648 = sbr.rel (%p646) target = $region92
      $region91: #{paligemma_forward.2} parent=39 // pred_region
        %p649 = scmp.lt.s32.totalorder %s33, 1
        %s650 = scalar_select %p649, %s33, 1
        %s651 = scalar_lea.vmem %s14, %s650
      $region92: #{paligemma_forward.2} parent=39 // pred_fallthru
        _
    $region40: #{paligemma_forward.2} parent=5 // pred_fallthru
      _
    %p652 = scmp.le.s32.totalorder 1, %s25
    %p653 = scmp.lt.s32.totalorder %s25, 5
    %p654 = pnand %p652, %p653
    %p655 = pneg %p654
    // Predicated region
    $region93: #{paligemma_forward.2} parent=5 // pred_check
      _
    $region94: #{paligemma_forward.2} parent=5 // pred_check_branch
      %657 = sbr.rel (%p654) target = $region96
    $region95: #{paligemma_forward.2} parent=5 // pred_region
      %s658 = ssub.s32 %s25, 1
      %p659 = scmp.lt.s32.totalorder %s34, 1
      %s660 = scalar_select %p659, %s34, 1
      %s661 = smul.addr %s660, 2
      %s662 = smul.addr %s661, 4
      %s663 = scalar_lea.vmem %s0, %s662
      %p664 = pneg %p63
      %p665 = pneg %p60
      %p666 = pneg %p84
      %p667 = pneg %p81
      %p668 = pneg %p105
      %p669 = pneg %p102
      %p670 = scmp.lt.s32.totalorder %s35, 1
      %s671 = scalar_select %p670, %s35, 1
      %s672 = scalar_lea.vmem %s3, %s671
      %p673 = pneg %p131
      %p674 = pneg %p128
      %p675 = scmp.lt.s32.totalorder %s35, 1
      %s676 = scalar_select %p675, %s35, 1
      %s677 = scalar_lea.vmem %s4, %s676
      %p678 = pneg %p157
      %p679 = pneg %p154
      %p680 = scmp.lt.s32.totalorder %s35, 1
      %s681 = scalar_select %p680, %s35, 1
      %s682 = smul.addr %s681, 4
      %s683 = smul.addr %s682, 4
      %s684 = scalar_lea.vmem %s5, %s683
      %p685 = pneg %p183
      %p686 = pneg %p180
      %p687 = scmp.lt.s32.totalorder %s35, 1
      %s688 = scalar_select %p687, %s35, 1
      %s689 = scalar_lea.vmem %s6, %s688
      %p690 = pneg %p209
      %p691 = pneg %p206
      %p692 = scmp.lt.s32.totalorder %s35, 1
      %s693 = scalar_select %p692, %s35, 1
      %s694 = smul.addr %s693, 4
      %s695 = smul.addr %s694, 4
      %s696 = scalar_lea.vmem %s7, %s695
      %p697 = pneg %p235
      %p698 = pneg %p232
      %p699 = scmp.lt.s32.totalorder %s35, 1
      %s700 = scalar_select %p699, %s35, 1
      %s701 = scalar_lea.vmem %s8, %s700
      %p702 = pneg %p261
      %p703 = pneg %p258
      %p704 = scmp.lt.s32.totalorder %s35, 1
      %s705 = scalar_select %p704, %s35, 1
      %s706 = scalar_lea.vmem %s9, %s705
      %p707 = pneg %p287
      %p708 = pneg %p284
      %p709 = scmp.lt.s32.totalorder %s35, 1
      %s710 = scalar_select %p709, %s35, 1
      %s711 = scalar_lea.vmem %s10, %s710
      %p712 = pneg %p313
      %p713 = pneg %p310
      %p714 = scmp.lt.s32.totalorder %s35, 1
      %s715 = scalar_select %p714, %s35, 1
      %s716 = smul.addr %s715, 4
      %s717 = smul.addr %s716, 4
      %s718 = scalar_lea.vmem %s11, %s717
      %p719 = pneg %p339
      %p720 = pneg %p336
      %p721 = scmp.lt.s32.totalorder %s35, 1
      %s722 = scalar_select %p721, %s35, 1
      %s723 = scalar_lea.vmem %s12, %s722
      %p724 = pneg %p365
      %p725 = pneg %p362
      %p726 = scmp.lt.s32.totalorder %s35, 1
      %s727 = scalar_select %p726, %s35, 1
      %s728 = smul.addr %s727, 8
      %s729 = smul.addr %s728, 4
      %s730 = scalar_lea.vmem %s13, %s729
      %p731 = pneg %p391
      %p732 = pneg %p388
      %p733 = scmp.lt.s32.totalorder %s35, 1
      %s734 = scalar_select %p733, %s35, 1
      %s735 = scalar_lea.vmem %s14, %s734
      %p736 = pneg %p417
      %p737 = pneg %p414
      %p738 = pneg %p438
      %p739 = pneg %p435
      %p740 = pneg %p459
      %p741 = pneg %p456
      %p742 = pneg %p480
      %p743 = pneg %p477
      %p744 = pneg %p501
      %p745 = pneg %p498
      %p746 = pneg %p527
      %p747 = pneg %p524
      %p748 = scmp.lt.s32.totalorder %s34, 1
      %s749 = scalar_select %p748, %s34, 1
      %s750 = smul.addr %s749, 4
      %s751 = scalar_lea.vmem %s19, %s750
      %p752 = scmp.lt.s32.totalorder %s34, 1
      %s753 = scalar_select %p752, %s34, 1
      %s754 = smul.addr %s753, 2
      %s755 = smul.addr %s754, 4
      %s756 = scalar_lea.vmem %s0, %s755
      %p757 = scmp.lt.s32.totalorder %s35, 1
      %s758 = scalar_select %p757, %s35, 1
      %s759 = scalar_lea.vmem %s3, %s758
      %p760 = scmp.lt.s32.totalorder %s35, 1
      %s761 = scalar_select %p760, %s35, 1
      %s762 = scalar_lea.vmem %s4, %s761
      %p763 = scmp.lt.s32.totalorder %s35, 1
      %s764 = scalar_select %p763, %s35, 1
      %s765 = smul.addr %s764, 4
      %s766 = smul.addr %s765, 4
      %s767 = scalar_lea.vmem %s5, %s766
      %p768 = scmp.lt.s32.totalorder %s35, 1
      %s769 = scalar_select %p768, %s35, 1
      %s770 = scalar_lea.vmem %s6, %s769
      %p771 = scmp.lt.s32.totalorder %s35, 1
      %s772 = scalar_select %p771, %s35, 1
      %s773 = smul.addr %s772, 4
      %s774 = smul.addr %s773, 4
      %s775 = scalar_lea.vmem %s7, %s774
      %p776 = scmp.lt.s32.totalorder %s35, 1
      %s777 = scalar_select %p776, %s35, 1
      %s778 = scalar_lea.vmem %s8, %s777
      %p779 = scmp.lt.s32.totalorder %s35, 1
      %s780 = scalar_select %p779, %s35, 1
      %s781 = scalar_lea.vmem %s9, %s780
      %p782 = scmp.lt.s32.totalorder %s35, 1
      %s783 = scalar_select %p782, %s35, 1
      %s784 = scalar_lea.vmem %s10, %s783
      %p785 = scmp.lt.s32.totalorder %s35, 1
      %s786 = scalar_select %p785, %s35, 1
      %s787 = smul.addr %s786, 4
      %s788 = smul.addr %s787, 4
      %s789 = scalar_lea.vmem %s11, %s788
      %p790 = scmp.lt.s32.totalorder %s35, 1
      %s791 = scalar_select %p790, %s35, 1
      %s792 = scalar_lea.vmem %s12, %s791
      %p793 = scmp.lt.s32.totalorder %s35, 1
      %s794 = scalar_select %p793, %s35, 1
      %s795 = smul.addr %s794, 8
      %s796 = smul.addr %s795, 4
      %s797 = scalar_lea.vmem %s13, %s796
      %p798 = scmp.lt.s32.totalorder %s35, 1
      %s799 = scalar_select %p798, %s35, 1
      %s800 = scalar_lea.vmem %s14, %s799
      %p801 = scmp.lt.s32.totalorder %s34, 1
      %s802 = scalar_select %p801, %s34, 1
      %s803 = smul.addr %s802, 4
      %s804 = scalar_lea.vmem %s19, %s803
      %p806 = scmp.eq.s32.totalorder %s35, 0
      // Predicated region
      $region97: #{paligemma_forward.2} parent=95 // pred_check
        %p807 = pneg %p806
      $region98: #{paligemma_forward.2} parent=95 // pred_check_branch
        %809 = sbr.rel (%p807) target = $region100
      $region99: #{paligemma_forward.2} parent=95 // pred_region
        %v810 = vld [vmem:[%s756] sm:$0xff]
        %812 = vst [vmem:[#allocation1] ss:$2 sm:$0xff] %v810
        %v813 = vld.sshfl [vmem:[#allocation1] sm:$0xff pattern:$0x75316420]
        %v814 = vld.sshfl [vmem:[#allocation1 + $0x8] sm:$0xff pattern:$0x75316420]
        %v817 = vpack.c.bf16 %v813, %v813
        %v818 = vpack.c.bf16 %v814, %v814
        %v819 = vld [vmem:[%s1] sm:$0xf]
        %v820 = vld [vmem:[%s1 + $0x4] sm:$0xf]
        %v821 = vld [vmem:[%s1 + $0x8] sm:$0xf]
        %v822 = vld [vmem:[%s1 + $0xc] sm:$0xf]
        %v823 = vld [vmem:[%s1 + $0x10] sm:$0xf]
        %v824 = vld [vmem:[%s1 + $0x14] sm:$0xf]
        %v825 = vld [vmem:[%s1 + $0x18] sm:$0xf]
        %v826 = vld [vmem:[%s1 + $0x1c] sm:$0xf]
        %v827 = vld [vmem:[%s1 + $0x20] sm:$0xf]
        %v828 = vld [vmem:[%s1 + $0x24] sm:$0xf]
        %v829 = vld [vmem:[%s1 + $0x28] sm:$0xf]
        %v830 = vld [vmem:[%s1 + $0x2c] sm:$0xf]
        %v831 = vld [vmem:[%s1 + $0x30] sm:$0xf]
        %v832 = vld [vmem:[%s1 + $0x34] sm:$0xf]
        %v833 = vld [vmem:[%s1 + $0x38] sm:$0xf]
        %v834 = vld [vmem:[%s1 + $0x3c] sm:$0xf]
        %v835 = vld [vmem:[%s1 + $0x40] sm:$0xf]
        %v836 = vld [vmem:[%s1 + $0x44] sm:$0xf]
        %v837 = vld [vmem:[%s1 + $0x48] sm:$0xf]
        %v838 = vld [vmem:[%s1 + $0x4c] sm:$0xf]
        %v839 = vld [vmem:[%s1 + $0x50] sm:$0xf]
        %v840 = vld [vmem:[%s1 + $0x54] sm:$0xf]
        %v841 = vld [vmem:[%s1 + $0x58] sm:$0xf]
        %v842 = vld [vmem:[%s1 + $0x5c] sm:$0xf]
        %v843 = vld [vmem:[%s2] sm:$0xf]
        %v868 = vunpack.c.l.b16 %v819
        %v869 = vunpack.c.l.b16 %v820
        %v870 = vunpack.c.l.b16 %v821
        %v871 = vunpack.c.l.b16 %v822
        %v872 = vunpack.c.l.b16 %v823
        %v873 = vunpack.c.l.b16 %v824
        %v874 = vunpack.c.l.b16 %v825
        %v875 = vunpack.c.l.b16 %v826
        %v876 = vunpack.c.l.b16 %v827
        %v877 = vunpack.c.l.b16 %v828
        %v878 = vunpack.c.l.b16 %v829
        %v879 = vunpack.c.l.b16 %v830
        %v880 = vunpack.c.l.b16 %v831
        %v881 = vunpack.c.l.b16 %v832
        %v882 = vunpack.c.l.b16 %v833
        %v883 = vunpack.c.l.b16 %v834
        %v884 = vunpack.c.l.b16 %v835
        %v885 = vunpack.c.l.b16 %v836
        %v886 = vunpack.c.l.b16 %v837
        %v887 = vunpack.c.l.b16 %v838
        %v888 = vunpack.c.l.b16 %v839
        %v889 = vunpack.c.l.b16 %v840
        %v890 = vunpack.c.l.b16 %v841
        %v891 = vunpack.c.l.b16 %v842
        %v892 = vpack.c.b16 %v869, %v868
        %v893 = vpack.c.b16 %v871, %v870
        %v894 = vpack.c.b16 %v873, %v872
        %v895 = vpack.c.b16 %v875, %v874
        %v896 = vpack.c.b16 %v877, %v876
        %v897 = vpack.c.b16 %v879, %v878
        %v898 = vpack.c.b16 %v881, %v880
        %v899 = vpack.c.b16 %v883, %v882
        %v900 = vpack.c.b16 %v885, %v884
        %v901 = vpack.c.b16 %v887, %v886
        %v902 = vpack.c.b16 %v889, %v888
        %v903 = vpack.c.b16 %v891, %v890
        %vm916 = vcmask 523264
        %v918 = vsel %vm916, %v818, 0
        %920 = vmatpush.bf16.msra.mxu0 %v899
        %921 = vmatpush.bf16.msra.mxu0 %v898
        %922 = vmatpush.bf16.msra.mxu0 %v897
        %923 = vmatpush.bf16.msra.mxu0 %v896
        %924 = vmatpush.bf16.msra.mxu0 %v895
        %925 = vmatpush.bf16.msra.mxu0 %v894
        %926 = vmatpush.bf16.msra.mxu0 %v893
        %927 = vmatpush.bf16.msra.mxu0 %v892
        %928 = vmatmul.bf16.gmra.mxu0 %v817
        %v929 = vpop.f32.mrf.mxu0
        %v930 = vadd.f32 %v843, %v929
        %v931 = vpop.f32.mrf.mxu0
        %932 = vdwg.mxu0
        %933 = vmatpush.bf16.msra.mxu0 0
        %934 = vmatpush.bf16.msra.mxu0 0
        %935 = vmatpush.bf16.msra.mxu0 0
        %936 = vmatpush.bf16.msra.mxu0 0
        %937 = vmatpush.bf16.msra.mxu0 %v903
        %938 = vmatpush.bf16.msra.mxu0 %v902
        %939 = vmatpush.bf16.msra.mxu0 %v901
        %940 = vmatpush.bf16.msra.mxu0 %v900
        %941 = vmatmul.bf16.gmra.mxu0 %v918
        %v942 = vpop.f32.mrf.mxu0
        %v943 = vadd.f32 %v930, %v942
        %v944 = vpop.f32.mrf.mxu0
        %945 = vdwg.mxu0
        %vm946 = vcmask 257024
        %947 = vst.msk [vmem:[#allocation2] sm:$0xf] %vm946, %v943
      $region100: #{paligemma_forward.2} parent=95 // pred_fallthru
        _
      %v948 = vld [vmem:[#allocation2] sm:$0xf]
      %v949 = vld [vmem:[%s759] sm:$0x1]
      %v950 = vld [vmem:[%s762] sm:$0x1]
      %vm951 = vcmask 257024
      %v952 = vsel %vm951, %v948, 0.0
      %953 = vadd.xlane.f32.xlu0 %v952
      %v954 = vpop.xlane.xlu0 %953
      %v955 = vrcp.pop 32.0
      %v956 = vmul.f32 32.0, %v955
      %v957 = vsub.f32 1.0, %v956
      %v958 = vmul.f32 %v955, %v957
      %v959 = vadd.f32 %v955, %v958
      %vm960 = vweird.f32 %v955
      %v961 = vsel %vm960, %v955, %v959
      %v962 = vmul.f32 %v954, %v961
      %v963 = vsub.f32 %v948, %v962
      %v964 = vmul.f32 %v963, %v963
      %v965 = vsel %vm951, %v964, 0.0
      %966 = vadd.xlane.f32.xlu0 %v965
      %v967 = vpop.xlane.xlu0 %966
      %v968 = vmul.f32 %v967, %v961
      %v969 = vadd.f32 %v968, 1e-06
      %v970 = vrsqrt.pop %v969
      %v971 = vmul.f32 %v970, %v969
      %v972 = vmul.f32 %v971, %v970
      %v973 = vmul.f32 0.5, %v972
      %v974 = vsub.f32 1.5, %v973
      %v975 = vmul.f32 %v970, %v974
      %vm976 = vweird.f32 %v969
      %vm977 = vweird.f32 %v970
      %vm978 = vmor %vm976, %vm977
      %v979 = vsel %vm978, %v970, %v975
      %v980 = vmul.f32 %v963, %v979
      %v982 = vperm.slane %v949, 0
      %v984 = vmul.f32 %v980, %v982
      %v986 = vperm.slane %v950, 0
      %v988 = vadd.f32 %v984, %v986
      %v989 = vpack.c.bf16 %v988, %v988
      %v990 = vld [vmem:[%s767] sm:$0xf]
      %v991 = vld [vmem:[%s767 + $0x4] sm:$0xf]
      %v992 = vld [vmem:[%s767 + $0x8] sm:$0xf]
      %v993 = vld [vmem:[%s767 + $0xc] sm:$0xf]
      %v994 = vld [vmem:[%s770] sm:$0x1]
      %v996 = vperm.slane %v994, 0
      %v1002 = vunpack.c.l.b16 %v990
      %v1003 = vunpack.c.l.b16 %v991
      %v1004 = vunpack.c.l.b16 %v992
      %v1005 = vunpack.c.l.b16 %v993
      %v1006 = vpack.c.b16 %v1003, %v1002
      %v1007 = vpack.c.b16 %v1005, %v1004
      %vm1010 = vcmask 261120
      %v1012 = vsel %vm1010, %v989, 0
      %1014 = vmatpush.bf16.msra.mxu0 0
      %1015 = vmatpush.bf16.msra.mxu0 0
      %1016 = vmatpush.bf16.msra.mxu0 0
      %1017 = vmatpush.bf16.msra.mxu0 0
      %1018 = vmatpush.bf16.msra.mxu0 0
      %1019 = vmatpush.bf16.msra.mxu0 0
      %1020 = vmatpush.bf16.msra.mxu0 %v1007
      %1021 = vmatpush.bf16.msra.mxu0 %v1006
      %1022 = vmatmul.bf16.gmra.mxu0 %v1012
      %v1023 = vpop.f32.mrf.mxu0
      %v1024 = vadd.f32 %v996, %v1023
      %v1025 = vpop.f32.mrf.mxu0
      %1026 = vdwg.mxu0
      %v1027 = vmul.f32 %v1024, 0.35355338
      %v1028 = vpack.c.bf16 %v1027, %v1027
      %v1029 = vpack.c.bf16 %v1024, %v1024
      %1031 = vrot.lane.b32.xlu0 %v1029, 96
      %v1032 = vpop.permute.xlu0 %1031
      %vm1033 = vcmask 64512
      %v1035 = vsel %vm1033, %v1028, 0
      %v1038 = vsel %vm1033, %v1032, 0
      %1040 = vmatpush.bf16.xpose.msra.mxu0 0
      %1041 = vmatpush.bf16.xpose.msra.mxu0 0
      %1042 = vmatpush.bf16.xpose.msra.mxu0 0
      %1043 = vmatpush.bf16.xpose.msra.mxu0 0
      %1044 = vmatpush.bf16.xpose.msra.mxu0 0
      %1045 = vmatpush.bf16.xpose.msra.mxu0 0
      %1046 = vmatpush.bf16.xpose.msra.mxu0 0
      %1047 = vmatpush.bf16.xpose.msra.mxu0 %v1038
      %1048 = vmatmul.bf16.gmra.mxu0 %v1035
      %v1049 = vpop.f32.mrf.mxu0
      %v1050 = vadd.f32 0.0, %v1049
      %v1051 = vpop.f32.mrf.mxu0
      %1052 = vdwg.mxu0
      %vm1053 = vcmask 27648
      %v1054 = vsel %vm1053, %v1050, -inf
      %1055 = vmax.xlane.f32.xlu0 %v1054
      %v1056 = vpop.xlane.xlu0 %1055
      %v1057 = vsub.f32 %v1050, %v1056
      %v1058 = vmul.f32 %v1057, 1.442695
      %v1059 = vpow.pop %v1058
      %v1060 = vsel %vm1053, %v1059, 0.0
      %1061 = vadd.xlane.f32.xlu0 %v1060
      %v1062 = vpop.xlane.xlu0 %1061
      %v1063 = vrcp.pop %v1062
      %v1064 = vmul.f32 %v1059, %v1063
      %v1065 = vpack.c.bf16 %v1064, %v1064
      %1066 = vrot.lane.b32.xlu0 %v1029, 64
      %v1067 = vpop.permute.xlu0 %1066
      %vm1068 = vcmask 31744
      %v1070 = vsel %vm1068, %v1065, 0
      %vm1072 = vcmask 1041408
      %v1074 = vsel %vm1072, %v1067, 0
      %1076 = vmatpush.bf16.msra.mxu0 0
      %1077 = vmatpush.bf16.msra.mxu0 0
      %1078 = vmatpush.bf16.msra.mxu0 0
      %1079 = vmatpush.bf16.msra.mxu0 0
      %1080 = vmatpush.bf16.msra.mxu0 0
      %1081 = vmatpush.bf16.msra.mxu0 0
      %1082 = vmatpush.bf16.msra.mxu0 0
      %1083 = vmatpush.bf16.msra.mxu0 %v1074
      %1084 = vmatmul.bf16.gmra.mxu0 %v1070
      %v1085 = vpop.f32.mrf.mxu0
      %v1086 = vadd.f32 0.0, %v1085
      %v1087 = vpop.f32.mrf.mxu0
      %1088 = vdwg.mxu0
      %vm1089 = vcmask 60416
      %1090 = vst.msk [vmem:[#allocation3] sm:$0xf] %vm1089, %v1086
      %1092 = vrot.lane.b32.xlu0 %v1028, 120
      %v1093 = vpop.permute.xlu0 %1092
      %1094 = vrot.lane.b32.xlu0 %v1029, 88
      %v1095 = vpop.permute.xlu0 %1094
      %v1097 = vsel %vm1033, %v1093, 0
      %v1100 = vsel %vm1033, %v1095, 0
      %1102 = vmatpush.bf16.xpose.msra.mxu0 0
      %1103 = vmatpush.bf16.xpose.msra.mxu0 0
      %1104 = vmatpush.bf16.xpose.msra.mxu0 0
      %1105 = vmatpush.bf16.xpose.msra.mxu0 0
      %1106 = vmatpush.bf16.xpose.msra.mxu0 0
      %1107 = vmatpush.bf16.xpose.msra.mxu0 0
      %1108 = vmatpush.bf16.xpose.msra.mxu0 0
      %1109 = vmatpush.bf16.xpose.msra.mxu0 %v1100
      %1110 = vmatmul.bf16.gmra.mxu0 %v1097
      %v1111 = vpop.f32.mrf.mxu0
      %v1112 = vadd.f32 0.0, %v1111
      %v1113 = vpop.f32.mrf.mxu0
      %1114 = vdwg.mxu0
      %v1115 = vsel %vm1053, %v1112, -inf
      %1116 = vmax.xlane.f32.xlu0 %v1115
      %v1117 = vpop.xlane.xlu0 %1116
      %v1118 = vsub.f32 %v1112, %v1117
      %v1119 = vmul.f32 %v1118, 1.442695
      %v1120 = vpow.pop %v1119
      %v1121 = vsel %vm1053, %v1120, 0.0
      %1122 = vadd.xlane.f32.xlu0 %v1121
      %v1123 = vpop.xlane.xlu0 %1122
      %v1124 = vrcp.pop %v1123
      %v1125 = vmul.f32 %v1120, %v1124
      %v1126 = vpack.c.bf16 %v1125, %v1125
      %1127 = vrot.lane.b32.xlu0 %v1029, 56
      %v1128 = vpop.permute.xlu0 %1127
      %v1130 = vsel %vm1068, %v1126, 0
      %v1133 = vsel %vm1072, %v1128, 0
      %1135 = vmatpush.bf16.msra.mxu0 0
      %1136 = vmatpush.bf16.msra.mxu0 0
      %1137 = vmatpush.bf16.msra.mxu0 0
      %1138 = vmatpush.bf16.msra.mxu0 0
      %1139 = vmatpush.bf16.msra.mxu0 0
      %1140 = vmatpush.bf16.msra.mxu0 0
      %1141 = vmatpush.bf16.msra.mxu0 0
      %1142 = vmatpush.bf16.msra.mxu0 %v1133
      %1143 = vmatmul.bf16.gmra.mxu0 %v1130
      %v1144 = vpop.f32.mrf.mxu0
      %v1145 = vadd.f32 0.0, %v1144
      %v1146 = vpop.f32.mrf.mxu0
      %1147 = vdwg.mxu0
      %1149 = vrot.lane.b32.xlu0 %v1145, 8
      %v1150 = vpop.permute.xlu0 %1149
      %vm1152 = vcmask 126016
      %1153 = vst.msk [vmem:[#allocation3] sm:$0xf] %vm1152, %v1150
      %1154 = vrot.lane.b32.xlu0 %v1028, 112
      %v1155 = vpop.permute.xlu0 %1154
      %1156 = vrot.lane.b32.xlu0 %v1029, 80
      %v1157 = vpop.permute.xlu0 %1156
      %v1159 = vsel %vm1033, %v1155, 0
      %v1162 = vsel %vm1033, %v1157, 0
      %1164 = vmatpush.bf16.xpose.msra.mxu0 0
      %1165 = vmatpush.bf16.xpose.msra.mxu0 0
      %1166 = vmatpush.bf16.xpose.msra.mxu0 0
      %1167 = vmatpush.bf16.xpose.msra.mxu0 0
      %1168 = vmatpush.bf16.xpose.msra.mxu0 0
      %1169 = vmatpush.bf16.xpose.msra.mxu0 0
      %1170 = vmatpush.bf16.xpose.msra.mxu0 0
      %1171 = vmatpush.bf16.xpose.msra.mxu0 %v1162
      %1172 = vmatmul.bf16.gmra.mxu0 %v1159
      %v1173 = vpop.f32.mrf.mxu0
      %v1174 = vadd.f32 0.0, %v1173
      %v1175 = vpop.f32.mrf.mxu0
      %1176 = vdwg.mxu0
      %v1177 = vsel %vm1053, %v1174, -inf
      %1178 = vmax.xlane.f32.xlu0 %v1177
      %v1179 = vpop.xlane.xlu0 %1178
      %v1180 = vsub.f32 %v1174, %v1179
      %v1181 = vmul.f32 %v1180, 1.442695
      %v1182 = vpow.pop %v1181
      %v1183 = vsel %vm1053, %v1182, 0.0
      %1184 = vadd.xlane.f32.xlu0 %v1183
      %v1185 = vpop.xlane.xlu0 %1184
      %v1186 = vrcp.pop %v1185
      %v1187 = vmul.f32 %v1182, %v1186
      %v1188 = vpack.c.bf16 %v1187, %v1187
      %1189 = vrot.lane.b32.xlu0 %v1029, 48
      %v1190 = vpop.permute.xlu0 %1189
      %v1192 = vsel %vm1068, %v1188, 0
      %v1195 = vsel %vm1072, %v1190, 0
      %1197 = vmatpush.bf16.msra.mxu0 0
      %1198 = vmatpush.bf16.msra.mxu0 0
      %1199 = vmatpush.bf16.msra.mxu0 0
      %1200 = vmatpush.bf16.msra.mxu0 0
      %1201 = vmatpush.bf16.msra.mxu0 0
      %1202 = vmatpush.bf16.msra.mxu0 0
      %1203 = vmatpush.bf16.msra.mxu0 0
      %1204 = vmatpush.bf16.msra.mxu0 %v1195
      %1205 = vmatmul.bf16.gmra.mxu0 %v1192
      %v1206 = vpop.f32.mrf.mxu0
      %v1207 = vadd.f32 0.0, %v1206
      %v1208 = vpop.f32.mrf.mxu0
      %1209 = vdwg.mxu0
      %1211 = vrot.lane.b32.xlu0 %v1207, 16
      %v1212 = vpop.permute.xlu0 %1211
      %vm1214 = vcmask 191616
      %1215 = vst.msk [vmem:[#allocation3] sm:$0xf] %vm1214, %v1212
      %1216 = vrot.lane.b32.xlu0 %v1028, 104
      %v1217 = vpop.permute.xlu0 %1216
      %1218 = vrot.lane.b32.xlu0 %v1029, 72
      %v1219 = vpop.permute.xlu0 %1218
      %v1221 = vsel %vm1033, %v1217, 0
      %v1224 = vsel %vm1033, %v1219, 0
      %1226 = vmatpush.bf16.xpose.msra.mxu0 0
      %1227 = vmatpush.bf16.xpose.msra.mxu0 0
      %1228 = vmatpush.bf16.xpose.msra.mxu0 0
      %1229 = vmatpush.bf16.xpose.msra.mxu0 0
      %1230 = vmatpush.bf16.xpose.msra.mxu0 0
      %1231 = vmatpush.bf16.xpose.msra.mxu0 0
      %1232 = vmatpush.bf16.xpose.msra.mxu0 0
      %1233 = vmatpush.bf16.xpose.msra.mxu0 %v1224
      %1234 = vmatmul.bf16.gmra.mxu0 %v1221
      %v1235 = vpop.f32.mrf.mxu0
      %v1236 = vadd.f32 0.0, %v1235
      %v1237 = vpop.f32.mrf.mxu0
      %1238 = vdwg.mxu0
      %v1239 = vsel %vm1053, %v1236, -inf
      %1240 = vmax.xlane.f32.xlu0 %v1239
      %v1241 = vpop.xlane.xlu0 %1240
      %v1242 = vsub.f32 %v1236, %v1241
      %v1243 = vmul.f32 %v1242, 1.442695
      %v1244 = vpow.pop %v1243
      %v1245 = vsel %vm1053, %v1244, 0.0
      %1246 = vadd.xlane.f32.xlu0 %v1245
      %v1247 = vpop.xlane.xlu0 %1246
      %v1248 = vrcp.pop %v1247
      %v1249 = vmul.f32 %v1244, %v1248
      %v1250 = vpack.c.bf16 %v1249, %v1249
      %1251 = vrot.lane.b32.xlu0 %v1029, 40
      %v1252 = vpop.permute.xlu0 %1251
      %v1254 = vsel %vm1068, %v1250, 0
      %v1257 = vsel %vm1072, %v1252, 0
      %1259 = vmatpush.bf16.msra.mxu0 0
      %1260 = vmatpush.bf16.msra.mxu0 0
      %1261 = vmatpush.bf16.msra.mxu0 0
      %1262 = vmatpush.bf16.msra.mxu0 0
      %1263 = vmatpush.bf16.msra.mxu0 0
      %1264 = vmatpush.bf16.msra.mxu0 0
      %1265 = vmatpush.bf16.msra.mxu0 0
      %1266 = vmatpush.bf16.msra.mxu0 %v1257
      %1267 = vmatmul.bf16.gmra.mxu0 %v1254
      %v1268 = vpop.f32.mrf.mxu0
      %v1269 = vadd.f32 0.0, %v1268
      %v1270 = vpop.f32.mrf.mxu0
      %1271 = vdwg.mxu0
      %1273 = vrot.lane.b32.xlu0 %v1269, 24
      %v1274 = vpop.permute.xlu0 %1273
      %vm1276 = vcmask 257216
      %1277 = vst.msk [vmem:[#allocation3] sm:$0xf] %vm1276, %v1274
      %v1278 = vld [vmem:[#allocation3] sm:$0xf]
      %v1279 = vpack.c.bf16 %v1278, %v1278
      %v1280 = vld [vmem:[%s775] sm:$0xf]
      %v1281 = vld [vmem:[%s775 + $0x4] sm:$0xf]
      %v1282 = vld [vmem:[%s775 + $0x8] sm:$0xf]
      %v1283 = vld [vmem:[%s775 + $0xc] sm:$0xf]
      %v1284 = vld [vmem:[%s778] sm:$0x1]
      %v1286 = vperm.slane %v1284, 0
      %v1292 = vunpack.c.l.b16 %v1280
      %v1293 = vunpack.c.l.b16 %v1281
      %v1294 = vunpack.c.l.b16 %v1282
      %v1295 = vunpack.c.l.b16 %v1283
      %v1296 = vpack.c.b16 %v1293, %v1292
      %v1297 = vpack.c.b16 %v1295, %v1294
      %v1301 = vsel %vm1010, %v1279, 0
      %1303 = vmatpush.bf16.msra.mxu0 0
      %1304 = vmatpush.bf16.msra.mxu0 0
      %1305 = vmatpush.bf16.msra.mxu0 0
      %1306 = vmatpush.bf16.msra.mxu0 0
      %1307 = vmatpush.bf16.msra.mxu0 0
      %1308 = vmatpush.bf16.msra.mxu0 0
      %1309 = vmatpush.bf16.msra.mxu0 %v1297
      %1310 = vmatpush.bf16.msra.mxu0 %v1296
      %1311 = vmatmul.bf16.gmra.mxu0 %v1301
      %v1312 = vpop.f32.mrf.mxu0
      %v1313 = vadd.f32 %v1286, %v1312
      %v1314 = vpop.f32.mrf.mxu0
      %1315 = vdwg.mxu0
      %v1316 = vadd.f32 %v948, %v1313
      %v1317 = vld [vmem:[%s781] sm:$0x1]
      %v1318 = vld [vmem:[%s784] sm:$0x1]
      %v1319 = vsel %vm951, %v1316, 0.0
      %1320 = vadd.xlane.f32.xlu0 %v1319
      %v1321 = vpop.xlane.xlu0 %1320
      %v1322 = vmul.f32 %v1321, %v961
      %v1323 = vsub.f32 %v1316, %v1322
      %v1324 = vmul.f32 %v1323, %v1323
      %v1325 = vsel %vm951, %v1324, 0.0
      %1326 = vadd.xlane.f32.xlu0 %v1325
      %v1327 = vpop.xlane.xlu0 %1326
      %v1328 = vmul.f32 %v1327, %v961
      %v1329 = vadd.f32 %v1328, 1e-06
      %v1330 = vrsqrt.pop %v1329
      %v1331 = vmul.f32 %v1330, %v1329
      %v1332 = vmul.f32 %v1331, %v1330
      %v1333 = vmul.f32 0.5, %v1332
      %v1334 = vsub.f32 1.5, %v1333
      %v1335 = vmul.f32 %v1330, %v1334
      %vm1336 = vweird.f32 %v1329
      %vm1337 = vweird.f32 %v1330
      %vm1338 = vmor %vm1336, %vm1337
      %v1339 = vsel %vm1338, %v1330, %v1335
      %v1340 = vmul.f32 %v1323, %v1339
      %v1342 = vperm.slane %v1317, 0
      %v1344 = vmul.f32 %v1340, %v1342
      %v1346 = vperm.slane %v1318, 0
      %v1348 = vadd.f32 %v1344, %v1346
      %v1349 = vpack.c.bf16 %v1348, %v1348
      %v1350 = vld [vmem:[%s789] sm:$0xf]
      %v1351 = vld [vmem:[%s789 + $0x4] sm:$0xf]
      %v1352 = vld [vmem:[%s789 + $0x8] sm:$0xf]
      %v1353 = vld [vmem:[%s789 + $0xc] sm:$0xf]
      %v1354 = vld [vmem:[%s792] sm:$0x1]
      %v1356 = vperm.slane %v1354, 0
      %v1362 = vunpack.c.l.b16 %v1350
      %v1363 = vunpack.c.l.b16 %v1351
      %v1364 = vunpack.c.l.b16 %v1352
      %v1365 = vunpack.c.l.b16 %v1353
      %v1366 = vpack.c.b16 %v1363, %v1362
      %v1367 = vpack.c.b16 %v1365, %v1364
      %v1371 = vsel %vm1010, %v1349, 0
      %1373 = vmatpush.bf16.msra.mxu0 0
      %1374 = vmatpush.bf16.msra.mxu0 0
      %1375 = vmatpush.bf16.msra.mxu0 0
      %1376 = vmatpush.bf16.msra.mxu0 0
      %1377 = vmatpush.bf16.msra.mxu0 0
      %1378 = vmatpush.bf16.msra.mxu0 0
      %1379 = vmatpush.bf16.msra.mxu0 %v1367
      %1380 = vmatpush.bf16.msra.mxu0 %v1366
      %1381 = vmatmul.bf16.gmra.mxu0 %v1371
      %v1382 = vpop.f32.mrf.mxu0
      %v1383 = vadd.f32 %v1356, %v1382
      %v1384 = vpop.f32.mrf.mxu0
      %1385 = vdwg.mxu0
      %v1386 = vmul.f32 %v1383, %v1383
      %v1387 = vmul.f32 %v1383, %v1386
      %v1388 = vmul.f32 %v1387, 0.044715
      %v1389 = vadd.f32 %v1383, %v1388
      %v1390 = vmul.f32 %v1389, 0.7978846
      %v1391 = vtanh.pop %v1390
      %v1392 = vadd.f32 %v1391, 1.0
      %v1393 = vmul.f32 %v1392, 0.5
      %v1394 = vmul.f32 %v1383, %v1393
      %v1395 = vpack.c.bf16 %v1394, %v1394
      %v1396 = vld [vmem:[%s797] sm:$0xf]
      %v1397 = vld [vmem:[%s797 + $0x4] sm:$0xf]
      %v1398 = vld [vmem:[%s797 + $0x8] sm:$0xf]
      %v1399 = vld [vmem:[%s797 + $0xc] sm:$0xf]
      %v1400 = vld [vmem:[%s797 + $0x10] sm:$0xf]
      %v1401 = vld [vmem:[%s797 + $0x14] sm:$0xf]
      %v1402 = vld [vmem:[%s797 + $0x18] sm:$0xf]
      %v1403 = vld [vmem:[%s797 + $0x1c] sm:$0xf]
      %v1404 = vld [vmem:[%s800] sm:$0x1]
      %v1406 = vperm.slane %v1404, 0
      %v1416 = vunpack.c.l.b16 %v1396
      %v1417 = vunpack.c.l.b16 %v1397
      %v1418 = vunpack.c.l.b16 %v1398
      %v1419 = vunpack.c.l.b16 %v1399
      %v1420 = vunpack.c.l.b16 %v1400
      %v1421 = vunpack.c.l.b16 %v1401
      %v1422 = vunpack.c.l.b16 %v1402
      %v1423 = vunpack.c.l.b16 %v1403
      %v1424 = vpack.c.b16 %v1417, %v1416
      %v1425 = vpack.c.b16 %v1419, %v1418
      %v1426 = vpack.c.b16 %v1421, %v1420
      %v1427 = vpack.c.b16 %v1423, %v1422
      %vm1432 = vcmask 523264
      %v1434 = vsel %vm1432, %v1395, 0
      %1436 = vmatpush.bf16.msra.mxu0 0
      %1437 = vmatpush.bf16.msra.mxu0 0
      %1438 = vmatpush.bf16.msra.mxu0 0
      %1439 = vmatpush.bf16.msra.mxu0 0
      %1440 = vmatpush.bf16.msra.mxu0 %v1427
      %1441 = vmatpush.bf16.msra.mxu0 %v1426
      %1442 = vmatpush.bf16.msra.mxu0 %v1425
      %1443 = vmatpush.bf16.msra.mxu0 %v1424
      %1444 = vmatmul.bf16.gmra.mxu0 %v1434
      %v1445 = vpop.f32.mrf.mxu0
      %v1446 = vadd.f32 %v1406, %v1445
      %v1447 = vpop.f32.mrf.mxu0
      %1448 = vdwg.mxu0
      %v1449 = vadd.f32 %v1316, %v1446
      %1450 = vst.msk [vmem:[#allocation2] sm:$0xf] %vm951, %v1449
      %p1451 = scmp.eq.s32.totalorder %s35, 1
      // Predicated region
      $region101: #{paligemma_forward.2} parent=95 // pred_check
        %p1452 = pneg %p1451
      $region102: #{paligemma_forward.2} parent=95 // pred_check_branch
        %1454 = sbr.rel (%p1452) target = $region104
      $region103: #{paligemma_forward.2} parent=95 // pred_region
        %v1455 = vld [vmem:[%s15] sm:$0x1]
        %v1456 = vld [vmem:[%s16] sm:$0x1]
        %v1457 = vsel %vm951, %v1449, 0.0
        %1458 = vadd.xlane.f32.xlu0 %v1457
        %v1459 = vpop.xlane.xlu0 %1458
        %v1460 = vmul.f32 %v1459, %v961
        %v1461 = vsub.f32 %v1449, %v1460
        %v1462 = vmul.f32 %v1461, %v1461
        %v1463 = vsel %vm951, %v1462, 0.0
        %1464 = vadd.xlane.f32.xlu0 %v1463
        %v1465 = vpop.xlane.xlu0 %1464
        %v1466 = vmul.f32 %v1465, %v961
        %v1467 = vadd.f32 %v1466, 1e-06
        %v1468 = vrsqrt.pop %v1467
        %v1469 = vmul.f32 %v1468, %v1467
        %v1470 = vmul.f32 %v1469, %v1468
        %v1471 = vmul.f32 0.5, %v1470
        %v1472 = vsub.f32 1.5, %v1471
        %v1473 = vmul.f32 %v1468, %v1472
        %vm1474 = vweird.f32 %v1467
        %vm1475 = vweird.f32 %v1468
        %vm1476 = vmor %vm1474, %vm1475
        %v1477 = vsel %vm1476, %v1468, %v1473
        %v1478 = vmul.f32 %v1461, %v1477
        %v1480 = vperm.slane %v1455, 0
        %v1482 = vmul.f32 %v1478, %v1480
        %v1484 = vperm.slane %v1456, 0
        %v1486 = vadd.f32 %v1482, %v1484
        %v1487 = vpack.c.bf16 %v1486, %v1486
        %v1488 = vld [vmem:[%s17] sm:$0xf]
        %v1489 = vld [vmem:[%s17 + $0x4] sm:$0xf]
        %v1490 = vld [vmem:[%s17 + $0x8] sm:$0xf]
        %v1491 = vld [vmem:[%s17 + $0xc] sm:$0xf]
        %v1492 = vld [vmem:[%s18] sm:$0x1]
        %v1494 = vperm.slane %v1492, 0
        %v1500 = vunpack.c.l.b16 %v1488
        %v1501 = vunpack.c.l.b16 %v1489
        %v1502 = vunpack.c.l.b16 %v1490
        %v1503 = vunpack.c.l.b16 %v1491
        %v1504 = vpack.c.b16 %v1501, %v1500
        %v1505 = vpack.c.b16 %v1503, %v1502
        %v1509 = vsel %vm1010, %v1487, 0
        %1511 = vmatpush.bf16.msra.mxu0 0
        %1512 = vmatpush.bf16.msra.mxu0 0
        %1513 = vmatpush.bf16.msra.mxu0 0
        %1514 = vmatpush.bf16.msra.mxu0 0
        %1515 = vmatpush.bf16.msra.mxu0 0
        %1516 = vmatpush.bf16.msra.mxu0 0
        %1517 = vmatpush.bf16.msra.mxu0 %v1505
        %1518 = vmatpush.bf16.msra.mxu0 %v1504
        %1519 = vmatmul.bf16.gmra.mxu0 %v1509
        %v1520 = vpop.f32.mrf.mxu0
        %v1521 = vadd.f32 %v1494, %v1520
        %v1522 = vpop.f32.mrf.mxu0
        %1523 = vdwg.mxu0
        %1524 = vst.msk [vmem:[%s804] sm:$0xf] %vm951, %v1521
      $region104: #{paligemma_forward.2} parent=95 // pred_fallthru
        _
      %p1525 = scmp.lt.s32.totalorder %s34, 1
      %s1526 = scalar_select %p1525, %s34, 1
      %s1527 = smul.addr %s1526, 4
      %s1528 = scalar_lea.vmem %s19, %s1527
      // Predicated region
      $region105: #{paligemma_forward.2} parent=95 // pred_check
        %p1529 = pneg %p524
      $region106: #{paligemma_forward.2} parent=95 // pred_check_branch
        %1531 = sbr.rel (%p1529) target = $region108
      $region107: #{paligemma_forward.2} parent=95 // pred_region
        _
      $region108: #{paligemma_forward.2} parent=95 // pred_fallthru
        _
    $region96: #{paligemma_forward.2} parent=5 // pred_fallthru
      _
    %p1532 = scmp.le.s32.totalorder 2, %s25
    // Predicated region
    $region109: #{paligemma_forward.2} parent=5 // pred_check
      %p1533 = pneg %p1532
    $region110: #{paligemma_forward.2} parent=5 // pred_check_branch
      %1535 = sbr.rel (%p1533) target = $region112
    $region111: #{paligemma_forward.2} parent=5 // pred_region
      %s1536 = ssub.s32 %s25, 2
      // Predicated region
      $region113: #{paligemma_forward.2} parent=111 // pred_check
        %p1537 = pneg %p530
      $region114: #{paligemma_forward.2} parent=111 // pred_check_branch
        %1539 = sbr.rel (%p1537) target = $region116
      $region115: #{paligemma_forward.2} parent=111 // pred_region
        %p1540 = scmp.lt.s32.totalorder %s36, 1
        %s1541 = scalar_select %p1540, %s36, 1
        %s1542 = smul.addr %s1541, 4
        %s1543 = scalar_lea.vmem %s19, %s1542
      $region116: #{paligemma_forward.2} parent=111 // pred_fallthru
        _
    $region112: #{paligemma_forward.2} parent=5 // pred_fallthru
      _
  $region6: #{paligemma_forward.2} parent=0 // loop_footer
    %s29 = sadd.s32 1, %s25
  $region7: #{paligemma_forward.2} parent=0 // loop_footer_branch
    %24 = sbr.rel target = $region3
  $region8: #{paligemma_forward.2} parent=0 // loop_exit
    _

</llo_original>
